<compile_context>
chip_gen: v6e
topology: v6e:2x2x1
jax: 0.10.0
libtpu: 0.0.40
codegen_flags: <defaults>
</compile_context>

<pallas_src>
import functools

import jax
import jax.numpy as jnp
from jax import lax
from jax.experimental import pallas as pl
from jax.experimental.pallas import tpu as pltpu


def _round_up(x, m):
    return ((x + m - 1) // m) * m


def _bottleneck_kernel(x_ref, w1_ref, b1_ref, w2_ref, b2_ref, w3_ref, b3_ref,
                       ml_ref, mr_ref, o_ref, vpad_ref, *, H, W, C, P, PRE):
    """One image per grid step.

    x_ref : (1, H, W, C)    activations (compute dtype, C lane-padded)
    w1    : (C, P)          1x1 conv (BN1 folded in)
    w2    : (9, P, P)       3x3 conv taps, k = dh*3+dw (BN2 folded in)
    w3    : (P, C)          1x1 conv (BN3 folded in)
    b*    : (1, ch) float32 folded BN biases
    ml/mr : (H*W, 1) f32    column masks (zero where j==0 / j==W-1)
    vpad  : (PRE + H*W + SUF, P) flat scratch: [zero halo | t1 | zero halo]
    """
    HW = H * W
    cdt = vpad_ref.dtype
    SUF = vpad_ref.shape[0] - PRE - HW

    # ---- zero halos (tiny, aligned stores; done every step so the kernel is
    #      safe when the batch axis is sharded across cores) ----------------
    vpad_ref[pl.ds(0, PRE), :] = jnp.zeros((PRE, P), cdt)
    vpad_ref[pl.ds(PRE + HW, SUF), :] = jnp.zeros((SUF, P), cdt)

    # ---- conv1 (1x1) + bias + relu ----------------------------------------
    x2d = x_ref[0].reshape(HW, C)                       # (HW, C) compute dtype
    t1 = jnp.dot(x2d, w1_ref[...], preferred_element_type=jnp.float32)
    t1 = jnp.maximum(t1 + b1_ref[...], 0.0)             # (HW, P) f32
    # single contiguous, lane-dense store into the flat buffer (offset PRE is
    # a multiple of 8 by construction)
    vpad_ref[pl.ds(PRE, HW), :] = t1.astype(cdt)

    # ---- conv2 (3x3, stride 1, pad 1) + bias + relu ------------------------
    # vpad[PRE + i*W + j] holds t1(i, j).  For output (i, j) and tap (dh, dw)
    # the needed input t1(i+dh-1, j+dw-1) lives at flat index
    #   q + PRE - (W+1) + dh*W + dw       with q = i*W + j,
    # so every tap is a contiguous slice of length H*W.  Vertical
    # out-of-range reads land in the zero halos; horizontal wrap-around
    # (only possible for dw != 1) is killed by the column masks.
    acc = None
    for dw in range(3):
        part = None
        for dh in range(3):
            off = PRE - (W + 1) + dh * W + dw            # static, >= 0
            tap = vpad_ref[pl.ds(off, HW), :]            # contiguous (HW, P)
            contrib = jnp.dot(tap, w2_ref[dh * 3 + dw],
                              preferred_element_type=jnp.float32)
            part = contrib if part is None else part + contrib
        if dw == 0:
            part = part * ml_ref[...]                    # zero outputs at j==0
        elif dw == 2:
            part = part * mr_ref[...]                    # zero outputs at j==W-1
        acc = part if acc is None else acc + part
    t2 = jnp.maximum(acc + b2_ref[...], 0.0).astype(cdt)  # (HW, P)

    # ---- conv3 (1x1) + bias + residual add + relu --------------------------
    t3 = jnp.dot(t2, w3_ref[...], preferred_element_type=jnp.float32)
    t3 = t3 + b3_ref[...]                                # (HW, C)
    out = jnp.maximum(t3 + x2d.astype(jnp.float32), 0.0)
    o_ref[0] = out.reshape(H, W, C).astype(o_ref.dtype)


def bottleneck_pallas(x_nhwc, w1, b1, w2, b2, w3, b3, *,
                      compute_dtype=jnp.bfloat16):
    """Fused Bottleneck forward (stride=1, no downsample).

    x_nhwc : (N, H, W, Cin)
    w1     : (Cin, P)        BN1-folded 1x1 conv weight
    w2     : (3, 3, P, P)    BN2-folded 3x3 conv weight (HWIO)
    w3     : (P, Cout)       BN3-folded 1x1 conv weight
    b1/b2/b3 : (P,), (P,), (Cout,) folded BN biases
    """
    N, H, W, Cin = x_nhwc.shape
    P = w1.shape[1]
    Cout = w3.shape[1]
    assert Cin == Cout, "downsample=None requires inplanes == planes*4"
    assert w2.shape == (3, 3, P, P)

    LANE = 128
    Cp = _round_up(Cin, LANE)          # lane-dense channels
    Pp = _round_up(P, LANE)
    HW = H * W
    PRE = _round_up(W + 1, 8)          # aligned leading zero halo
    SUF = _round_up(W + 1, 8)
    FLAT = PRE + HW + SUF

    cdt = compute_dtype
    f32 = jnp.float32

    def _pad_axis(a, axis, new):
        widths = [(0, 0)] * a.ndim
        widths[axis] = (0, new - a.shape[axis])
        return jnp.pad(a, widths)

    # Zero-pad channels to lane multiples; cast matmul operands to the compute
    # dtype (bf16 by default), keep biases in f32 (added post-accumulation).
    xp = _pad_axis(x_nhwc, 3, Cp).astype(cdt)
    w1p = _pad_axis(_pad_axis(w1, 0, Cp), 1, Pp).astype(cdt)
    w2p = _pad_axis(_pad_axis(w2, 2, Pp), 3, Pp).reshape(9, Pp, Pp).astype(cdt)
    w3p = _pad_axis(_pad_axis(w3, 0, Pp), 1, Cp).astype(cdt)
    b1p = _pad_axis(b1.reshape(1, -1), 1, Pp).astype(f32)
    b2p = _pad_axis(b2.reshape(1, -1), 1, Pp).astype(f32)
    b3p = _pad_axis(b3.reshape(1, -1), 1, Cp).astype(f32)

    # Column masks used by the flat-offset 3x3 conv (see kernel docstring).
    jj = jnp.arange(HW, dtype=jnp.int32) % W
    mask_l = (jj != 0).astype(f32).reshape(HW, 1)
    mask_r = (jj != W - 1).astype(f32).reshape(HW, 1)

    kernel = functools.partial(_bottleneck_kernel,
                               H=H, W=W, C=Cp, P=Pp, PRE=PRE)

    def full(a):
        nd = a.ndim
        return pl.BlockSpec(a.shape, lambda n, _nd=nd: (0,) * _nd)

    out = pl.pallas_call(
        kernel,
        out_shape=jax.ShapeDtypeStruct((N, H, W, Cp), cdt),
        grid_spec=pltpu.PrefetchScalarGridSpec(
            num_scalar_prefetch=0,
            grid=(N,),
            in_specs=[
                pl.BlockSpec((1, H, W, Cp), lambda n: (n, 0, 0, 0)),
                full(w1p), full(b1p),
                full(w2p), full(b2p),
                full(w3p), full(b3p),
                full(mask_l), full(mask_r),
            ],
            out_specs=pl.BlockSpec((1, H, W, Cp), lambda n: (n, 0, 0, 0)),
            scratch_shapes=[pltpu.VMEM((FLAT, Pp), cdt)],
        ),
        compiler_params=pltpu.CompilerParams(
            dimension_semantics=("parallel",)),
    )(xp, w1p, b1p, w2p, b2p, w3p, b3p, mask_l, mask_r)

    return out[..., :Cout]


def fold_bn_into_conv(w, gamma, beta, mean, var, eps=1e-5):
    """Fold eval-mode BatchNorm into a conv weight whose LAST axis is the
    output channel.  Returns (w_folded, bias)."""
    scale = gamma / jnp.sqrt(var + eps)
    return w * scale, beta - mean * scale


def _reference(x, w1, b1, w2, b2, w3, b3):
    """Pure-XLA reference (high-precision convs)."""
    dn = ('NHWC', 'HWIO', 'NHWC')
    hi = lax.Precision.HIGHEST
    relu = lambda v: jnp.maximum(v, 0.0)
    t = lax.conv_general_dilated(x, w1[None, None], (1, 1), 'VALID',
                                 dimension_numbers=dn, precision=hi)
    t = relu(t + b1)
    t = lax.conv_general_dilated(t, w2, (1, 1), 'SAME',
                                 dimension_numbers=dn, precision=hi)
    t = relu(t + b2)
    t = lax.conv_general_dilated(t, w3[None, None], (1, 1), 'VALID',
                                 dimension_numbers=dn, precision=hi)
    t = t + b3
    return relu(t + x)


if __name__ == "__main__":
    # Bottleneck(inplanes=16, planes=4): conv1 16->4, conv2 4->4 (3x3),
    # conv3 4->16, identity residual (stride=1, downsample=None).
    N, H, W = 2, 16, 16
    planes = 4
    inplanes = planes * 4        # 16
    cout = planes * 4            # 16

    key = jax.random.PRNGKey(0)
    ks = jax.random.split(key, 16)

    x_nchw = jax.random.normal(ks[0], (N, inplanes, H, W), jnp.float32)
    x_nhwc = jnp.transpose(x_nchw, (0, 2, 3, 1))           # NCHW -> NHWC

    w1 = 0.1 * jax.random.normal(ks[1], (inplanes, planes), jnp.float32)
    w2 = 0.1 * jax.random.normal(ks[2], (3, 3, planes, planes), jnp.float32)
    w3 = 0.1 * jax.random.normal(ks[3], (planes, cout), jnp.float32)

    def bn_params(kg, kb, km, kv, c):
        gamma = 1.0 + 0.1 * jax.random.normal(kg, (c,), jnp.float32)
        beta = 0.1 * jax.random.normal(kb, (c,), jnp.float32)
        mean = 0.1 * jax.random.normal(km, (c,), jnp.float32)
        var = jax.random.uniform(kv, (c,), jnp.float32, 0.5, 1.5)
        return gamma, beta, mean, var

    g1, be1, m1, v1 = bn_params(ks[4], ks[5], ks[6], ks[7], planes)
    g2, be2, m2, v2 = bn_params(ks[8], ks[9], ks[10], ks[11], planes)
    g3, be3, m3, v3 = bn_params(ks[12], ks[13], ks[14], ks[15], cout)

    w1f, b1f = fold_bn_into_conv(w1, g1, be1, m1, v1)
    w2f, b2f = fold_bn_into_conv(w2, g2, be2, m2, v2)
    w3f, b3f = fold_bn_into_conv(w3, g3, be3, m3, v3)

    # ---- float32 compute path: tight correctness check ---------------------
    out32 = bottleneck_pallas(x_nhwc, w1f, b1f, w2f, b2f, w3f, b3f,
                              compute_dtype=jnp.float32)
    out32 = jax.block_until_ready(out32)
    ref32 = _reference(x_nhwc, w1f, b1f, w2f, b2f, w3f, b3f)
    assert out32.shape == (N, H, W, cout)
    assert jnp.allclose(out32, ref32, atol=5e-3, rtol=5e-3), (
        "f32 mismatch, max |err| = %e"
        % float(jnp.max(jnp.abs(out32 - ref32))))

    # ---- bf16 compute path (recommended on TPU): loose check ---------------
    out16 = bottleneck_pallas(x_nhwc, w1f, b1f, w2f, b2f, w3f, b3f,
                              compute_dtype=jnp.bfloat16)
    out16 = jax.block_until_ready(out16).astype(jnp.float32)
    bf = lambda a: a.astype(jnp.bfloat16).astype(jnp.float32)
    ref16 = _reference(bf(x_nhwc), bf(w1f), b1f, bf(w2f), b2f, bf(w3f), b3f)
    assert jnp.allclose(out16, ref16, atol=3e-2, rtol=3e-2), (
        "bf16 mismatch, max |err| = %e"
        % float(jnp.max(jnp.abs(out16 - ref16))))

    print("KERNEL_OK")
</pallas_src>

<mosaic_0001>
module attributes {stable_mosaic.version = 11 : i64} {
  func.func @_bottleneck_kernel(%arg0: i32, %arg1: memref<1x16x16x128xf32, #tpu.memory_space<vmem>>, %arg2: memref<128x128xf32, #tpu.memory_space<vmem>>, %arg3: memref<1x128xf32, #tpu.memory_space<vmem>>, %arg4: memref<9x128x128xf32, #tpu.memory_space<vmem>>, %arg5: memref<1x128xf32, #tpu.memory_space<vmem>>, %arg6: memref<128x128xf32, #tpu.memory_space<vmem>>, %arg7: memref<1x128xf32, #tpu.memory_space<vmem>>, %arg8: memref<256x1xf32, #tpu.memory_space<vmem>>, %arg9: memref<256x1xf32, #tpu.memory_space<vmem>>, %arg10: memref<1x16x16x128xf32, #tpu.memory_space<vmem>>, %arg11: memref<304x128xf32, #tpu.memory_space<vmem>>) attributes {dimension_semantics = [#tpu.dimension_semantics<parallel>], iteration_bounds = array<i64: 2>, scalar_prefetch = 0 : i64, scratch_operands = 1 : i64, tpu.core_type = #tpu.core_type<tc>, window_params = [{transform_indices = @transform_0, window_bounds = array<i64: 1, 16, 16, 128>}, {pipeline_mode = #tpu.pipeline_mode<synchronous>, transform_indices = @transform_1, window_bounds = array<i64: 128, 128>}, {pipeline_mode = #tpu.pipeline_mode<synchronous>, transform_indices = @transform_2, window_bounds = array<i64: 1, 128>}, {pipeline_mode = #tpu.pipeline_mode<synchronous>, transform_indices = @transform_3, window_bounds = array<i64: 9, 128, 128>}, {pipeline_mode = #tpu.pipeline_mode<synchronous>, transform_indices = @transform_4, window_bounds = array<i64: 1, 128>}, {pipeline_mode = #tpu.pipeline_mode<synchronous>, transform_indices = @transform_5, window_bounds = array<i64: 128, 128>}, {pipeline_mode = #tpu.pipeline_mode<synchronous>, transform_indices = @transform_6, window_bounds = array<i64: 1, 128>}, {pipeline_mode = #tpu.pipeline_mode<synchronous>, transform_indices = @transform_7, window_bounds = array<i64: 256, 1>}, {pipeline_mode = #tpu.pipeline_mode<synchronous>, transform_indices = @transform_8, window_bounds = array<i64: 256, 1>}, {transform_indices = @transform_9, window_bounds = array<i64: 1, 16, 16, 128>}]} {
    %cst = arith.constant 0.000000e+00 : f32
    %0 = vector.broadcast %cst : f32 to vector<24x128xf32>
    %c0 = arith.constant 0 : index
    %c0_0 = arith.constant 0 : index
    %1 = vector.load %arg11[%c0, %c0_0] : memref<304x128xf32, #tpu.memory_space<vmem>>, vector<24x128xf32>
    tpu.vector_store %arg11[%c0, %c0_0], %0 {strides = array<i32>} : memref<304x128xf32, #tpu.memory_space<vmem>>, vector<24x128xf32>,
    %cst_1 = arith.constant 0.000000e+00 : f32
    %2 = vector.broadcast %cst_1 : f32 to vector<24x128xf32>
    %c280 = arith.constant 280 : index
    %c0_2 = arith.constant 0 : index
    %3 = vector.load %arg11[%c280, %c0_2] : memref<304x128xf32, #tpu.memory_space<vmem>>, vector<24x128xf32>
    tpu.vector_store %arg11[%c280, %c0_2], %2 {strides = array<i32>} : memref<304x128xf32, #tpu.memory_space<vmem>>, vector<24x128xf32>,
    %c0_3 = arith.constant 0 : index
    %c0_4 = arith.constant 0 : index
    %c0_5 = arith.constant 0 : index
    %c0_6 = arith.constant 0 : index
    %4 = vector.load %arg1[%c0_3, %c0_4, %c0_5, %c0_6] : memref<1x16x16x128xf32, #tpu.memory_space<vmem>>, vector<1x16x16x128xf32>
    %5 = vector.shape_cast %4 : vector<1x16x16x128xf32> to vector<16x16x128xf32>
    %6 = vector.shape_cast %5 : vector<16x16x128xf32> to vector<256x128xf32>
    %c0_7 = arith.constant 0 : index
    %c0_8 = arith.constant 0 : index
    %7 = vector.load %arg2[%c0_7, %c0_8] : memref<128x128xf32, #tpu.memory_space<vmem>>, vector<128x128xf32>
    %cst_9 = arith.constant dense<0.000000e+00> : vector<256x128xf32>
    %8 = tpu.matmul %6, %7, %cst_9 {dimension_numbers = #tpu.dot_dimension_numbers<[1], [0], [0], [1], [0, 0, 1, 1], [], []>} : vector<256x128xf32>, vector<128x128xf32>, vector<256x128xf32> -> vector<256x128xf32>
    %c0_10 = arith.constant 0 : index
    %c0_11 = arith.constant 0 : index
    %9 = vector.load %arg3[%c0_10, %c0_11] : memref<1x128xf32, #tpu.memory_space<vmem>>, vector<1x128xf32>
    %10 = vector.broadcast %9 : vector<1x128xf32> to vector<256x128xf32>
    %11 = arith.addf %8, %10 : vector<256x128xf32>
    %cst_12 = arith.constant 0.000000e+00 : f32
    %12 = vector.broadcast %cst_12 : f32 to vector<256x128xf32>
    %13 = arith.maximumf %11, %12 : vector<256x128xf32>
    %c24 = arith.constant 24 : index
    %c0_13 = arith.constant 0 : index
    %14 = vector.load %arg11[%c24, %c0_13] : memref<304x128xf32, #tpu.memory_space<vmem>>, vector<256x128xf32>
    tpu.vector_store %arg11[%c24, %c0_13], %13 {strides = array<i32>} : memref<304x128xf32, #tpu.memory_space<vmem>>, vector<256x128xf32>,
    %c7 = arith.constant 7 : index
    %c0_14 = arith.constant 0 : index
    %15 = vector.load %arg11[%c7, %c0_14] : memref<304x128xf32, #tpu.memory_space<vmem>>, vector<256x128xf32>
    %c0_15 = arith.constant 0 : index
    %c0_16 = arith.constant 0 : index
    %c0_17 = arith.constant 0 : index
    %16 = vector.load %arg4[%c0_15, %c0_16, %c0_17] : memref<9x128x128xf32, #tpu.memory_space<vmem>>, vector<1x128x128xf32>
    %17 = vector.shape_cast %16 : vector<1x128x128xf32> to vector<128x128xf32>
    %cst_18 = arith.constant dense<0.000000e+00> : vector<256x128xf32>
    %18 = tpu.matmul %15, %17, %cst_18 {dimension_numbers = #tpu.dot_dimension_numbers<[1], [0], [0], [1], [0, 0, 1, 1], [], []>} : vector<256x128xf32>, vector<128x128xf32>, vector<256x128xf32> -> vector<256x128xf32>
    %c23 = arith.constant 23 : index
    %c0_19 = arith.constant 0 : index
    %19 = vector.load %arg11[%c23, %c0_19] : memref<304x128xf32, #tpu.memory_space<vmem>>, vector<256x128xf32>
    %c3 = arith.constant 3 : index
    %c0_20 = arith.constant 0 : index
    %c0_21 = arith.constant 0 : index
    %20 = vector.load %arg4[%c3, %c0_20, %c0_21] : memref<9x128x128xf32, #tpu.memory_space<vmem>>, vector<1x128x128xf32>
    %21 = vector.shape_cast %20 : vector<1x128x128xf32> to vector<128x128xf32>
    %cst_22 = arith.constant dense<0.000000e+00> : vector<256x128xf32>
    %22 = tpu.matmul %19, %21, %cst_22 {dimension_numbers = #tpu.dot_dimension_numbers<[1], [0], [0], [1], [0, 0, 1, 1], [], []>} : vector<256x128xf32>, vector<128x128xf32>, vector<256x128xf32> -> vector<256x128xf32>
    %23 = arith.addf %18, %22 : vector<256x128xf32>
    %c39 = arith.constant 39 : index
    %c0_23 = arith.constant 0 : index
    %24 = vector.load %arg11[%c39, %c0_23] : memref<304x128xf32, #tpu.memory_space<vmem>>, vector<256x128xf32>
    %c6 = arith.constant 6 : index
    %c0_24 = arith.constant 0 : index
    %c0_25 = arith.constant 0 : index
    %25 = vector.load %arg4[%c6, %c0_24, %c0_25] : memref<9x128x128xf32, #tpu.memory_space<vmem>>, vector<1x128x128xf32>
    %26 = vector.shape_cast %25 : vector<1x128x128xf32> to vector<128x128xf32>
    %cst_26 = arith.constant dense<0.000000e+00> : vector<256x128xf32>
    %27 = tpu.matmul %24, %26, %cst_26 {dimension_numbers = #tpu.dot_dimension_numbers<[1], [0], [0], [1], [0, 0, 1, 1], [], []>} : vector<256x128xf32>, vector<128x128xf32>, vector<256x128xf32> -> vector<256x128xf32>
    %28 = arith.addf %23, %27 : vector<256x128xf32>
    %c0_27 = arith.constant 0 : index
    %c0_28 = arith.constant 0 : index
    %29 = vector.load %arg8[%c0_27, %c0_28] : memref<256x1xf32, #tpu.memory_space<vmem>>, vector<256x1xf32>
    %30 = vector.broadcast %29 : vector<256x1xf32> to vector<256x128xf32>
    %31 = arith.mulf %28, %30 : vector<256x128xf32>
    %c8 = arith.constant 8 : index
    %c0_29 = arith.constant 0 : index
    %32 = vector.load %arg11[%c8, %c0_29] : memref<304x128xf32, #tpu.memory_space<vmem>>, vector<256x128xf32>
    %c1 = arith.constant 1 : index
    %c0_30 = arith.constant 0 : index
    %c0_31 = arith.constant 0 : index
    %33 = vector.load %arg4[%c1, %c0_30, %c0_31] : memref<9x128x128xf32, #tpu.memory_space<vmem>>, vector<1x128x128xf32>
    %34 = vector.shape_cast %33 : vector<1x128x128xf32> to vector<128x128xf32>
    %cst_32 = arith.constant dense<0.000000e+00> : vector<256x128xf32>
    %35 = tpu.matmul %32, %34, %cst_32 {dimension_numbers = #tpu.dot_dimension_numbers<[1], [0], [0], [1], [0, 0, 1, 1], [], []>} : vector<256x128xf32>, vector<128x128xf32>, vector<256x128xf32> -> vector<256x128xf32>
    %c24_33 = arith.constant 24 : index
    %c0_34 = arith.constant 0 : index
    %36 = vector.load %arg11[%c24_33, %c0_34] : memref<304x128xf32, #tpu.memory_space<vmem>>, vector<256x128xf32>
    %c4 = arith.constant 4 : index
    %c0_35 = arith.constant 0 : index
    %c0_36 = arith.constant 0 : index
    %37 = vector.load %arg4[%c4, %c0_35, %c0_36] : memref<9x128x128xf32, #tpu.memory_space<vmem>>, vector<1x128x128xf32>
    %38 = vector.shape_cast %37 : vector<1x128x128xf32> to vector<128x128xf32>
    %cst_37 = arith.constant dense<0.000000e+00> : vector<256x128xf32>
    %39 = tpu.matmul %36, %38, %cst_37 {dimension_numbers = #tpu.dot_dimension_numbers<[1], [0], [0], [1], [0, 0, 1, 1], [], []>} : vector<256x128xf32>, vector<128x128xf32>, vector<256x128xf32> -> vector<256x128xf32>
    %40 = arith.addf %35, %39 : vector<256x128xf32>
    %c40 = arith.constant 40 : index
    %c0_38 = arith.constant 0 : index
    %41 = vector.load %arg11[%c40, %c0_38] : memref<304x128xf32, #tpu.memory_space<vmem>>, vector<256x128xf32>
    %c7_39 = arith.constant 7 : index
    %c0_40 = arith.constant 0 : index
    %c0_41 = arith.constant 0 : index
    %42 = vector.load %arg4[%c7_39, %c0_40, %c0_41] : memref<9x128x128xf32, #tpu.memory_space<vmem>>, vector<1x128x128xf32>
    %43 = vector.shape_cast %42 : vector<1x128x128xf32> to vector<128x128xf32>
    %cst_42 = arith.constant dense<0.000000e+00> : vector<256x128xf32>
    %44 = tpu.matmul %41, %43, %cst_42 {dimension_numbers = #tpu.dot_dimension_numbers<[1], [0], [0], [1], [0, 0, 1, 1], [], []>} : vector<256x128xf32>, vector<128x128xf32>, vector<256x128xf32> -> vector<256x128xf32>
    %45 = arith.addf %40, %44 : vector<256x128xf32>
    %46 = arith.addf %31, %45 : vector<256x128xf32>
    %c9 = arith.constant 9 : index
    %c0_43 = arith.constant 0 : index
    %47 = vector.load %arg11[%c9, %c0_43] : memref<304x128xf32, #tpu.memory_space<vmem>>, vector<256x128xf32>
    %c2 = arith.constant 2 : index
    %c0_44 = arith.constant 0 : index
    %c0_45 = arith.constant 0 : index
    %48 = vector.load %arg4[%c2, %c0_44, %c0_45] : memref<9x128x128xf32, #tpu.memory_space<vmem>>, vector<1x128x128xf32>
    %49 = vector.shape_cast %48 : vector<1x128x128xf32> to vector<128x128xf32>
    %cst_46 = arith.constant dense<0.000000e+00> : vector<256x128xf32>
    %50 = tpu.matmul %47, %49, %cst_46 {dimension_numbers = #tpu.dot_dimension_numbers<[1], [0], [0], [1], [0, 0, 1, 1], [], []>} : vector<256x128xf32>, vector<128x128xf32>, vector<256x128xf32> -> vector<256x128xf32>
    %c25 = arith.constant 25 : index
    %c0_47 = arith.constant 0 : index
    %51 = vector.load %arg11[%c25, %c0_47] : memref<304x128xf32, #tpu.memory_space<vmem>>, vector<256x128xf32>
    %c5 = arith.constant 5 : index
    %c0_48 = arith.constant 0 : index
    %c0_49 = arith.constant 0 : index
    %52 = vector.load %arg4[%c5, %c0_48, %c0_49] : memref<9x128x128xf32, #tpu.memory_space<vmem>>, vector<1x128x128xf32>
    %53 = vector.shape_cast %52 : vector<1x128x128xf32> to vector<128x128xf32>
    %cst_50 = arith.constant dense<0.000000e+00> : vector<256x128xf32>
    %54 = tpu.matmul %51, %53, %cst_50 {dimension_numbers = #tpu.dot_dimension_numbers<[1], [0], [0], [1], [0, 0, 1, 1], [], []>} : vector<256x128xf32>, vector<128x128xf32>, vector<256x128xf32> -> vector<256x128xf32>
    %55 = arith.addf %50, %54 : vector<256x128xf32>
    %c41 = arith.constant 41 : index
    %c0_51 = arith.constant 0 : index
    %56 = vector.load %arg11[%c41, %c0_51] : memref<304x128xf32, #tpu.memory_space<vmem>>, vector<256x128xf32>
    %c8_52 = arith.constant 8 : index
    %c0_53 = arith.constant 0 : index
    %c0_54 = arith.constant 0 : index
    %57 = vector.load %arg4[%c8_52, %c0_53, %c0_54] : memref<9x128x128xf32, #tpu.memory_space<vmem>>, vector<1x128x128xf32>
    %58 = vector.shape_cast %57 : vector<1x128x128xf32> to vector<128x128xf32>
    %cst_55 = arith.constant dense<0.000000e+00> : vector<256x128xf32>
    %59 = tpu.matmul %56, %58, %cst_55 {dimension_numbers = #tpu.dot_dimension_numbers<[1], [0], [0], [1], [0, 0, 1, 1], [], []>} : vector<256x128xf32>, vector<128x128xf32>, vector<256x128xf32> -> vector<256x128xf32>
    %60 = arith.addf %55, %59 : vector<256x128xf32>
    %c0_56 = arith.constant 0 : index
    %c0_57 = arith.constant 0 : index
    %61 = vector.load %arg9[%c0_56, %c0_57] : memref<256x1xf32, #tpu.memory_space<vmem>>, vector<256x1xf32>
    %62 = vector.broadcast %61 : vector<256x1xf32> to vector<256x128xf32>
    %63 = arith.mulf %60, %62 : vector<256x128xf32>
    %64 = arith.addf %46, %63 : vector<256x128xf32>
    %c0_58 = arith.constant 0 : index
    %c0_59 = arith.constant 0 : index
    %65 = vector.load %arg5[%c0_58, %c0_59] : memref<1x128xf32, #tpu.memory_space<vmem>>, vector<1x128xf32>
    %66 = vector.broadcast %65 : vector<1x128xf32> to vector<256x128xf32>
    %67 = arith.addf %64, %66 : vector<256x128xf32>
    %cst_60 = arith.constant 0.000000e+00 : f32
    %68 = vector.broadcast %cst_60 : f32 to vector<256x128xf32>
    %69 = arith.maximumf %67, %68 : vector<256x128xf32>
    %c0_61 = arith.constant 0 : index
    %c0_62 = arith.constant 0 : index
    %70 = vector.load %arg6[%c0_61, %c0_62] : memref<128x128xf32, #tpu.memory_space<vmem>>, vector<128x128xf32>
    %cst_63 = arith.constant dense<0.000000e+00> : vector<256x128xf32>
    %71 = tpu.matmul %69, %70, %cst_63 {dimension_numbers = #tpu.dot_dimension_numbers<[1], [0], [0], [1], [0, 0, 1, 1], [], []>} : vector<256x128xf32>, vector<128x128xf32>, vector<256x128xf32> -> vector<256x128xf32>
    %c0_64 = arith.constant 0 : index
    %c0_65 = arith.constant 0 : index
    %72 = vector.load %arg7[%c0_64, %c0_65] : memref<1x128xf32, #tpu.memory_space<vmem>>, vector<1x128xf32>
    %73 = vector.broadcast %72 : vector<1x128xf32> to vector<256x128xf32>
    %74 = arith.addf %71, %73 : vector<256x128xf32>
    %75 = arith.addf %74, %6 : vector<256x128xf32>
    %cst_66 = arith.constant 0.000000e+00 : f32
    %76 = vector.broadcast %cst_66 : f32 to vector<256x128xf32>
    %77 = arith.maximumf %75, %76 : vector<256x128xf32>
    %78 = vector.shape_cast %77 : vector<256x128xf32> to vector<16x16x128xf32>
    %c0_67 = arith.constant 0 : index
    %c0_68 = arith.constant 0 : index
    %c0_69 = arith.constant 0 : index
    %c0_70 = arith.constant 0 : index
    %79 = vector.load %arg10[%c0_67, %c0_68, %c0_69, %c0_70] : memref<1x16x16x128xf32, #tpu.memory_space<vmem>>, vector<1x16x16x128xf32>
    %80 = vector.shape_cast %79 : vector<1x16x16x128xf32> to vector<16x16x128xf32>
    %81 = vector.shape_cast %78 : vector<16x16x128xf32> to vector<1x16x16x128xf32>
    tpu.vector_store %arg10[%c0_67, %c0_68, %c0_69, %c0_70], %81 {strides = array<i32>} : memref<1x16x16x128xf32, #tpu.memory_space<vmem>>, vector<1x16x16x128xf32>,
    return
  }
  func.func @transform_0(%arg0: i32) -> (i32, i32, i32, i32) {
    %c0_i32 = arith.constant 0 : i32
    %c0_i32_0 = arith.constant 0 : i32
    %c0_i32_1 = arith.constant 0 : i32
    %c0_i32_2 = arith.constant 0 : i32
    return %arg0, %c0_i32, %c0_i32_0, %c0_i32_1 : i32, i32, i32, i32
  }
  func.func @transform_1(%arg0: i32) -> (i32, i32) {
    %c0_i32 = arith.constant 0 : i32
    %c0_i32_0 = arith.constant 0 : i32
    %c0_i32_1 = arith.constant 0 : i32
    return %c0_i32, %c0_i32_0 : i32, i32
  }
  func.func @transform_2(%arg0: i32) -> (i32, i32) {
    %c0_i32 = arith.constant 0 : i32
    %c0_i32_0 = arith.constant 0 : i32
    %c0_i32_1 = arith.constant 0 : i32
    return %c0_i32, %c0_i32_0 : i32, i32
  }
  func.func @transform_3(%arg0: i32) -> (i32, i32, i32) {
    %c0_i32 = arith.constant 0 : i32
    %c0_i32_0 = arith.constant 0 : i32
    %c0_i32_1 = arith.constant 0 : i32
    %c0_i32_2 = arith.constant 0 : i32
    return %c0_i32, %c0_i32_0, %c0_i32_1 : i32, i32, i32
  }
  func.func @transform_4(%arg0: i32) -> (i32, i32) {
    %c0_i32 = arith.constant 0 : i32
    %c0_i32_0 = arith.constant 0 : i32
    %c0_i32_1 = arith.constant 0 : i32
    return %c0_i32, %c0_i32_0 : i32, i32
  }
  func.func @transform_5(%arg0: i32) -> (i32, i32) {
    %c0_i32 = arith.constant 0 : i32
    %c0_i32_0 = arith.constant 0 : i32
    %c0_i32_1 = arith.constant 0 : i32
    return %c0_i32, %c0_i32_0 : i32, i32
  }
  func.func @transform_6(%arg0: i32) -> (i32, i32) {
    %c0_i32 = arith.constant 0 : i32
    %c0_i32_0 = arith.constant 0 : i32
    %c0_i32_1 = arith.constant 0 : i32
    return %c0_i32, %c0_i32_0 : i32, i32
  }
  func.func @transform_7(%arg0: i32) -> (i32, i32) {
    %c0_i32 = arith.constant 0 : i32
    %c0_i32_0 = arith.constant 0 : i32
    %c0_i32_1 = arith.constant 0 : i32
    return %c0_i32, %c0_i32_0 : i32, i32
  }
  func.func @transform_8(%arg0: i32) -> (i32, i32) {
    %c0_i32 = arith.constant 0 : i32
    %c0_i32_0 = arith.constant 0 : i32
    %c0_i32_1 = arith.constant 0 : i32
    return %c0_i32, %c0_i32_0 : i32, i32
  }
  func.func @transform_9(%arg0: i32) -> (i32, i32, i32, i32) {
    %c0_i32 = arith.constant 0 : i32
    %c0_i32_0 = arith.constant 0 : i32
    %c0_i32_1 = arith.constant 0 : i32
    %c0_i32_2 = arith.constant 0 : i32
    return %arg0, %c0_i32, %c0_i32_0, %c0_i32_1 : i32, i32, i32, i32
  }
}

</mosaic_0001>

<llo_original>
// kernel: tpu_custom_call.1
$region0: #{tpu_custom_call.1}
  #allocation0 [shape = 'u32[]', space=smem, size = 0x4, offset = 0x4, fixed_abs, tag = 'smem constant byte address 0x4 - core index']
  #allocation1 [shape = 'u32[144,128]{1,0:T(1,128)}', space=vmem, size = 0x12000, scoped, tag = 'internal scratch']
  #allocation2 [shape = 'f32[304,128]{1,0:T(8,128)}', space=vmem, size = 0x26000, scoped, tag = 'scratch operand']
  %s0 = inlined_call_operand.vmem [shape: f32[2,16,16,128], index: 0, kind: input, shape index: {}]
  %s1 = inlined_call_operand.hbm [shape: f32[128,128], index: 1, kind: input, shape index: {}]
  %s2 = inlined_call_operand.vmem [shape: f32[1,128], index: 2, kind: input, shape index: {}]
  %s3 = inlined_call_operand.hbm [shape: f32[9,128,128], index: 3, kind: input, shape index: {}]
  %s4 = inlined_call_operand.vmem [shape: f32[1,128], index: 4, kind: input, shape index: {}]
  %s5 = inlined_call_operand.hbm [shape: f32[128,128], index: 5, kind: input, shape index: {}]
  %s6 = inlined_call_operand.vmem [shape: f32[1,128], index: 6, kind: input, shape index: {}]
  %s7 = inlined_call_operand.vmem [shape: f32[256,1], index: 7, kind: input, shape index: {}]
  %s8 = inlined_call_operand.vmem [shape: f32[256,1], index: 8, kind: input, shape index: {}]
  %s9 = inlined_call_operand.hbm [shape: f32[2,16,16,128], index: 9, kind: output, shape index: {}]
  %s10 = sld [smem:[#allocation0]]
  $region81: #{tpu_custom_call.1} parent=0
    _
  %s12 = ssub.s32 1, %s10
  %s13 = scalar_select 0, %s12, %s10
  $region1: #{tpu_custom_call.1} parent=0
    #allocation3 [shape = 'u8[65536]{0}', space=vmem, size = 0x10000, scoped, tag = 'input window, operand 1, single buffered']
    #allocation4 [shape = 's32[2]{0}', space=sflag, size = 0x8, scoped, tag = 'scoped memory for tpu_custom_call.1']
    #allocation5 [shape = 's32[2]{0}', space=sflag, size = 0x8, scoped, tag = 'scoped memory for tpu_custom_call.1']
    #allocation6 [shape = 'u8[589824]{0}', space=vmem, size = 0x90000, scoped, tag = 'input window, operand 3, single buffered']
    #allocation7 [shape = 's32[1]{0}', space=sflag, size = 0x4, scoped, tag = 'scoped memory for tpu_custom_call.1']
    #allocation8 [shape = 'u8[65536]{0}', space=vmem, size = 0x10000, scoped, tag = 'input window, operand 5, single buffered']
    #allocation9 [shape = 'u8[262144]{0}', space=vmem, size = 0x40000, scoped, tag = 'output window, operand 0']
    %14 = vsyncpa [#allocation4], 0
    %15 = vsyncpa [#allocation7], 0
    %16 = vsyncpa [#allocation5], 0
    %s17 = scalar_lea.sflag [#allocation5], 1
    %18 = vsyncpa %s17, 0
    loop: start=0, step=1, limit=4
    $region2: #{tpu_custom_call.1} parent=1 // loop_pre_header
      _
    $region3: #{tpu_custom_call.1} parent=1 // loop_header
      %s20 = sphi 0, %s24
      %p21 = scmp.ge.s32.totalorder %s20, 4
      %s30 = sphi 0, %s32
      %s33 = sphi 0, %s30
      %s34 = sphi 0, %s33
      %s50 = sphi 0, %s34
      %s54 = sphi 0, %s54
      %s56 = sphi 0, %s54
      %s57 = sphi 0, %s56
      %s71 = sphi 0, %s57
      %s75 = sphi 0, %s75
      %s77 = sphi 0, %s75
      %s78 = sphi 0, %s77
      %s92 = sphi 0, %s78
      %s96 = sphi 0, %s96
      %s98 = sphi 0, %s96
      %s99 = sphi 0, %s98
      %s113 = sphi 0, %s99
      %s117 = sphi 0, %s117
      %s119 = sphi 0, %s117
      %s120 = sphi 0, %s119
      %s134 = sphi 0, %s120
      %s138 = sphi 0, %s138
      %s140 = sphi 0, %s138
      %s141 = sphi 0, %s140
      %s155 = sphi 0, %s141
      %s159 = sphi 0, %s159
      %s161 = sphi 0, %s159
      %s162 = sphi 0, %s161
      %s176 = sphi 0, %s162
      %s180 = sphi 0, %s180
      %s182 = sphi 0, %s180
      %s183 = sphi 0, %s182
      %s197 = sphi 0, %s183
      %s201 = sphi 0, %s201
      %s203 = sphi 0, %s201
      %s204 = sphi 0, %s203
      %s218 = sphi 0, %s204
      %s224 = sphi 0, %s226
      %s227 = sphi 0, %s224
      %s228 = sphi 0, %s227
      %s244 = sphi 0, %s228
    $region4: #{tpu_custom_call.1} parent=1 // loop_header_branch
      %23 = sbr.rel (%p21) target = $region8
    $region5: #{tpu_custom_call.1} parent=1 // loop_body
      %s25 = ssub.s32 %s20, 1
      %s26 = ssub.s32 %s20, 2
      %s27 = sadd.s32 %s20, 1
      %s28 = ssub.s32 %s20, %s27
      %p29 = scmp.eq.s32.totalorder %s28, 0
      %s31 = sadd.s32 %s30, 1
      %s32 = scalar_select %p29, %s30, %s31
      %p35 = pneg %p29
      %p36 = scmp.eq.s32.totalorder %s20, 1
      %p37 = por %p35, %p36
      %p38 = scmp.ne.s32.totalorder %s30, %s33
      %p39 = scmp.eq.s32.totalorder %s20, 0
      %p40 = por %p38, %p39
      %p41 = scmp.ne.s32.totalorder %s30, %s33
      %p42 = scmp.eq.s32.totalorder %s25, 1
      %p43 = por %p41, %p42
      %p44 = scmp.ne.s32.totalorder %s33, %s34
      %p45 = scmp.eq.s32.totalorder %s25, 0
      %p46 = por %p44, %p45
      %p47 = scmp.ne.s32.totalorder %s33, %s34
      %p48 = scmp.eq.s32.totalorder %s26, 1
      %p49 = por %p47, %p48
      %p51 = scmp.ne.s32.totalorder %s34, %s50
      %p52 = scmp.eq.s32.totalorder %s26, 0
      %p53 = por %p51, %p52
      %s55 = sadd.s32 %s54, 1
      %p58 = scmp.eq.s32.totalorder %s20, 1
      %p59 = scmp.ne.s32.totalorder %s54, %s56
      %p60 = scmp.eq.s32.totalorder %s20, 0
      %p61 = por %p59, %p60
      %p62 = scmp.ne.s32.totalorder %s54, %s56
      %p63 = scmp.eq.s32.totalorder %s25, 1
      %p64 = por %p62, %p63
      %p65 = scmp.ne.s32.totalorder %s56, %s57
      %p66 = scmp.eq.s32.totalorder %s25, 0
      %p67 = por %p65, %p66
      %p68 = scmp.ne.s32.totalorder %s56, %s57
      %p69 = scmp.eq.s32.totalorder %s26, 1
      %p70 = por %p68, %p69
      %p72 = scmp.ne.s32.totalorder %s57, %s71
      %p73 = scmp.eq.s32.totalorder %s26, 0
      %p74 = por %p72, %p73
      %s76 = sadd.s32 %s75, 1
      %p79 = scmp.eq.s32.totalorder %s20, 1
      %p80 = scmp.ne.s32.totalorder %s75, %s77
      %p81 = scmp.eq.s32.totalorder %s20, 0
      %p82 = por %p80, %p81
      %p83 = scmp.ne.s32.totalorder %s75, %s77
      %p84 = scmp.eq.s32.totalorder %s25, 1
      %p85 = por %p83, %p84
      %p86 = scmp.ne.s32.totalorder %s77, %s78
      %p87 = scmp.eq.s32.totalorder %s25, 0
      %p88 = por %p86, %p87
      %p89 = scmp.ne.s32.totalorder %s77, %s78
      %p90 = scmp.eq.s32.totalorder %s26, 1
      %p91 = por %p89, %p90
      %p93 = scmp.ne.s32.totalorder %s78, %s92
      %p94 = scmp.eq.s32.totalorder %s26, 0
      %p95 = por %p93, %p94
      %s97 = sadd.s32 %s96, 1
      %p100 = scmp.eq.s32.totalorder %s20, 1
      %p101 = scmp.ne.s32.totalorder %s96, %s98
      %p102 = scmp.eq.s32.totalorder %s20, 0
      %p103 = por %p101, %p102
      %p104 = scmp.ne.s32.totalorder %s96, %s98
      %p105 = scmp.eq.s32.totalorder %s25, 1
      %p106 = por %p104, %p105
      %p107 = scmp.ne.s32.totalorder %s98, %s99
      %p108 = scmp.eq.s32.totalorder %s25, 0
      %p109 = por %p107, %p108
      %p110 = scmp.ne.s32.totalorder %s98, %s99
      %p111 = scmp.eq.s32.totalorder %s26, 1
      %p112 = por %p110, %p111
      %p114 = scmp.ne.s32.totalorder %s99, %s113
      %p115 = scmp.eq.s32.totalorder %s26, 0
      %p116 = por %p114, %p115
      %s118 = sadd.s32 %s117, 1
      %p121 = scmp.eq.s32.totalorder %s20, 1
      %p122 = scmp.ne.s32.totalorder %s117, %s119
      %p123 = scmp.eq.s32.totalorder %s20, 0
      %p124 = por %p122, %p123
      %p125 = scmp.ne.s32.totalorder %s117, %s119
      %p126 = scmp.eq.s32.totalorder %s25, 1
      %p127 = por %p125, %p126
      %p128 = scmp.ne.s32.totalorder %s119, %s120
      %p129 = scmp.eq.s32.totalorder %s25, 0
      %p130 = por %p128, %p129
      %p131 = scmp.ne.s32.totalorder %s119, %s120
      %p132 = scmp.eq.s32.totalorder %s26, 1
      %p133 = por %p131, %p132
      %p135 = scmp.ne.s32.totalorder %s120, %s134
      %p136 = scmp.eq.s32.totalorder %s26, 0
      %p137 = por %p135, %p136
      %s139 = sadd.s32 %s138, 1
      %p142 = scmp.eq.s32.totalorder %s20, 1
      %p143 = scmp.ne.s32.totalorder %s138, %s140
      %p144 = scmp.eq.s32.totalorder %s20, 0
      %p145 = por %p143, %p144
      %p146 = scmp.ne.s32.totalorder %s138, %s140
      %p147 = scmp.eq.s32.totalorder %s25, 1
      %p148 = por %p146, %p147
      %p149 = scmp.ne.s32.totalorder %s140, %s141
      %p150 = scmp.eq.s32.totalorder %s25, 0
      %p151 = por %p149, %p150
      %p152 = scmp.ne.s32.totalorder %s140, %s141
      %p153 = scmp.eq.s32.totalorder %s26, 1
      %p154 = por %p152, %p153
      %p156 = scmp.ne.s32.totalorder %s141, %s155
      %p157 = scmp.eq.s32.totalorder %s26, 0
      %p158 = por %p156, %p157
      %s160 = sadd.s32 %s159, 1
      %p163 = scmp.eq.s32.totalorder %s20, 1
      %p164 = scmp.ne.s32.totalorder %s159, %s161
      %p165 = scmp.eq.s32.totalorder %s20, 0
      %p166 = por %p164, %p165
      %p167 = scmp.ne.s32.totalorder %s159, %s161
      %p168 = scmp.eq.s32.totalorder %s25, 1
      %p169 = por %p167, %p168
      %p170 = scmp.ne.s32.totalorder %s161, %s162
      %p171 = scmp.eq.s32.totalorder %s25, 0
      %p172 = por %p170, %p171
      %p173 = scmp.ne.s32.totalorder %s161, %s162
      %p174 = scmp.eq.s32.totalorder %s26, 1
      %p175 = por %p173, %p174
      %p177 = scmp.ne.s32.totalorder %s162, %s176
      %p178 = scmp.eq.s32.totalorder %s26, 0
      %p179 = por %p177, %p178
      %s181 = sadd.s32 %s180, 1
      %p184 = scmp.eq.s32.totalorder %s20, 1
      %p185 = scmp.ne.s32.totalorder %s180, %s182
      %p186 = scmp.eq.s32.totalorder %s20, 0
      %p187 = por %p185, %p186
      %p188 = scmp.ne.s32.totalorder %s180, %s182
      %p189 = scmp.eq.s32.totalorder %s25, 1
      %p190 = por %p188, %p189
      %p191 = scmp.ne.s32.totalorder %s182, %s183
      %p192 = scmp.eq.s32.totalorder %s25, 0
      %p193 = por %p191, %p192
      %p194 = scmp.ne.s32.totalorder %s182, %s183
      %p195 = scmp.eq.s32.totalorder %s26, 1
      %p196 = por %p194, %p195
      %p198 = scmp.ne.s32.totalorder %s183, %s197
      %p199 = scmp.eq.s32.totalorder %s26, 0
      %p200 = por %p198, %p199
      %s202 = sadd.s32 %s201, 1
      %p205 = scmp.eq.s32.totalorder %s20, 1
      %p206 = scmp.ne.s32.totalorder %s201, %s203
      %p207 = scmp.eq.s32.totalorder %s20, 0
      %p208 = por %p206, %p207
      %p209 = scmp.ne.s32.totalorder %s201, %s203
      %p210 = scmp.eq.s32.totalorder %s25, 1
      %p211 = por %p209, %p210
      %p212 = scmp.ne.s32.totalorder %s203, %s204
      %p213 = scmp.eq.s32.totalorder %s25, 0
      %p214 = por %p212, %p213
      %p215 = scmp.ne.s32.totalorder %s203, %s204
      %p216 = scmp.eq.s32.totalorder %s26, 1
      %p217 = por %p215, %p216
      %p219 = scmp.ne.s32.totalorder %s204, %s218
      %p220 = scmp.eq.s32.totalorder %s26, 0
      %p221 = por %p219, %p220
      %s222 = ssub.s32 %s20, %s27
      %p223 = scmp.eq.s32.totalorder %s222, 0
      %s225 = sadd.s32 %s224, 1
      %s226 = scalar_select %p223, %s224, %s225
      %p229 = pneg %p223
      %p230 = scmp.eq.s32.totalorder %s20, 1
      %p231 = por %p229, %p230
      %p232 = scmp.ne.s32.totalorder %s224, %s227
      %p233 = scmp.eq.s32.totalorder %s20, 0
      %p234 = por %p232, %p233
      %p235 = scmp.ne.s32.totalorder %s224, %s227
      %p236 = scmp.eq.s32.totalorder %s25, 1
      %p237 = por %p235, %p236
      %p238 = scmp.ne.s32.totalorder %s227, %s228
      %p239 = scmp.eq.s32.totalorder %s25, 0
      %p240 = por %p238, %p239
      %p241 = scmp.ne.s32.totalorder %s227, %s228
      %p242 = scmp.eq.s32.totalorder %s26, 1
      %p243 = por %p241, %p242
      %p245 = scmp.ne.s32.totalorder %s228, %s244
      %p246 = scmp.eq.s32.totalorder %s26, 0
      %p247 = por %p245, %p246
      %p248 = scmp.le.s32.totalorder 1, %s20
      %p249 = scmp.lt.s32.totalorder %s20, 3
      %p250 = pnand %p248, %p249
      %p251 = pneg %p250
      // Predicated region
      $region9: #{tpu_custom_call.1} parent=5 // pred_check
        _
      $region10: #{tpu_custom_call.1} parent=5 // pred_check_branch
        %253 = sbr.rel (%p250) target = $region12
      $region11: #{tpu_custom_call.1} parent=5 // pred_region
        %s254 = ssub.s32 %s20, 1
        // Predicated region
        $region13: #{tpu_custom_call.1} parent=11 // pred_check
          %p255 = pneg %p67
        $region14: #{tpu_custom_call.1} parent=11 // pred_check_branch
          %257 = sbr.rel (%p255) target = $region16
        $region15: #{tpu_custom_call.1} parent=11 // pred_region
          %s259 = ssub.s32 2048, 2048
          %260 = vsyncadd [#allocation4], %s259
          %s261 = sshll.u32 [#allocation3], 4
          %s262 = int_to_ptr.vmem [resolvable:$true] %s261
          %267 = dma.hbm_to_vmem [thread:$0]  %s1, 2048, %s262, [#allocation4], 128, 128, 8
        $region16: #{tpu_custom_call.1} parent=11 // pred_fallthru
          _
        // Predicated region
        $region17: #{tpu_custom_call.1} parent=11 // pred_check
          %p268 = pneg %p88
        $region18: #{tpu_custom_call.1} parent=11 // pred_check_branch
          %270 = sbr.rel (%p268) target = $region20
        $region19: #{tpu_custom_call.1} parent=11 // pred_region
          _
        $region20: #{tpu_custom_call.1} parent=11 // pred_fallthru
          _
        // Predicated region
        $region21: #{tpu_custom_call.1} parent=11 // pred_check
          %p271 = pneg %p109
        $region22: #{tpu_custom_call.1} parent=11 // pred_check_branch
          %273 = sbr.rel (%p271) target = $region24
        $region23: #{tpu_custom_call.1} parent=11 // pred_region
          %s275 = ssub.s32 18432, 18432
          %276 = vsyncadd [#allocation7], %s275
          %s277 = sshll.u32 [#allocation6], 4
          %s278 = int_to_ptr.vmem [resolvable:$true] %s277
          %283 = dma.hbm_to_vmem [thread:$0]  %s3, 18432, %s278, [#allocation7], 128, 128, 8
        $region24: #{tpu_custom_call.1} parent=11 // pred_fallthru
          _
        // Predicated region
        $region25: #{tpu_custom_call.1} parent=11 // pred_check
          %p284 = pneg %p130
        $region26: #{tpu_custom_call.1} parent=11 // pred_check_branch
          %286 = sbr.rel (%p284) target = $region28
        $region27: #{tpu_custom_call.1} parent=11 // pred_region
          _
        $region28: #{tpu_custom_call.1} parent=11 // pred_fallthru
          _
        // Predicated region
        $region29: #{tpu_custom_call.1} parent=11 // pred_check
          %p287 = pneg %p151
        $region30: #{tpu_custom_call.1} parent=11 // pred_check_branch
          %289 = sbr.rel (%p287) target = $region32
        $region31: #{tpu_custom_call.1} parent=11 // pred_region
          %s291 = ssub.s32 2048, 2048
          %292 = vsyncadd [#allocation7], %s291
          %s293 = sshll.u32 [#allocation8], 4
          %s294 = int_to_ptr.vmem [resolvable:$true] %s293
          %299 = dma.hbm_to_vmem [thread:$0]  %s5, 2048, %s294, [#allocation7], 128, 128, 8
        $region32: #{tpu_custom_call.1} parent=11 // pred_fallthru
          _
        // Predicated region
        $region33: #{tpu_custom_call.1} parent=11 // pred_check
          %p300 = pneg %p172
        $region34: #{tpu_custom_call.1} parent=11 // pred_check_branch
          %302 = sbr.rel (%p300) target = $region36
        $region35: #{tpu_custom_call.1} parent=11 // pred_region
          _
        $region36: #{tpu_custom_call.1} parent=11 // pred_fallthru
          _
        // Predicated region
        $region37: #{tpu_custom_call.1} parent=11 // pred_check
          %p303 = pneg %p193
        $region38: #{tpu_custom_call.1} parent=11 // pred_check_branch
          %305 = sbr.rel (%p303) target = $region40
        $region39: #{tpu_custom_call.1} parent=11 // pred_region
          _
        $region40: #{tpu_custom_call.1} parent=11 // pred_fallthru
          _
        // Predicated region
        $region41: #{tpu_custom_call.1} parent=11 // pred_check
          %p306 = pneg %p214
        $region42: #{tpu_custom_call.1} parent=11 // pred_check_branch
          %308 = sbr.rel (%p306) target = $region44
        $region43: #{tpu_custom_call.1} parent=11 // pred_region
          _
        $region44: #{tpu_custom_call.1} parent=11 // pred_fallthru
          _
      $region12: #{tpu_custom_call.1} parent=5 // pred_fallthru
        _
      %p309 = scmp.lt.s32.totalorder %s20, 2
      // Predicated region
      $region45: #{tpu_custom_call.1} parent=5 // pred_check
        %p310 = pneg %p309
      $region46: #{tpu_custom_call.1} parent=5 // pred_check_branch
        %312 = sbr.rel (%p310) target = $region48
      $region47: #{tpu_custom_call.1} parent=5 // pred_region
        // Predicated region
        $region49: #{tpu_custom_call.1} parent=47 // pred_check
          %p313 = pneg %p40
        $region50: #{tpu_custom_call.1} parent=47 // pred_check_branch
          %315 = sbr.rel (%p313) target = $region52
        $region51: #{tpu_custom_call.1} parent=47 // pred_region
          %p316 = scmp.lt.s32.totalorder %s20, 1
          %s317 = scalar_select %p316, %s20, 1
          %s318 = smul.addr %s317, 32
          %s319 = smul.addr %s318, 8
          %s320 = scalar_lea.vmem %s0, %s319
        $region52: #{tpu_custom_call.1} parent=47 // pred_fallthru
          _
      $region48: #{tpu_custom_call.1} parent=5 // pred_fallthru
        _
      %p321 = scmp.le.s32.totalorder 1, %s20
      %p322 = scmp.lt.s32.totalorder %s20, 3
      %p323 = pnand %p321, %p322
      %p324 = pneg %p323
      // Predicated region
      $region53: #{tpu_custom_call.1} parent=5 // pred_check
        _
      $region54: #{tpu_custom_call.1} parent=5 // pred_check_branch
        %326 = sbr.rel (%p323) target = $region56
      $region55: #{tpu_custom_call.1} parent=5 // pred_region
        %s327 = ssub.s32 %s20, 1
        // Predicated region
        $region57: #{tpu_custom_call.1} parent=55 // pred_check
          %p328 = pneg %p67
        $region58: #{tpu_custom_call.1} parent=55 // pred_check_branch
          %330 = sbr.rel (%p328) target = $region60
        $region59: #{tpu_custom_call.1} parent=55 // pred_region
          %331 = dma.done [#allocation4], 2048
        $region60: #{tpu_custom_call.1} parent=55 // pred_fallthru
          _
        // Predicated region
        $region61: #{tpu_custom_call.1} parent=55 // pred_check
          %p332 = pneg %p109
        $region62: #{tpu_custom_call.1} parent=55 // pred_check_branch
          %334 = sbr.rel (%p332) target = $region64
        $region63: #{tpu_custom_call.1} parent=55 // pred_region
          %335 = dma.done [#allocation7], 18432
        $region64: #{tpu_custom_call.1} parent=55 // pred_fallthru
          _
        // Predicated region
        $region65: #{tpu_custom_call.1} parent=55 // pred_check
          %p336 = pneg %p151
        $region66: #{tpu_custom_call.1} parent=55 // pred_check_branch
          %338 = sbr.rel (%p336) target = $region68
        $region67: #{tpu_custom_call.1} parent=55 // pred_region
          %339 = dma.done [#allocation7], 2048
        $region68: #{tpu_custom_call.1} parent=55 // pred_fallthru
          _
        %p340 = scmp.lt.s32.totalorder %s25, 1
        %s341 = scalar_select %p340, %s25, 1
        %s342 = smul.addr %s341, 32
        %s343 = smul.addr %s342, 8
        %s344 = scalar_lea.vmem %s0, %s343
        %p345 = pneg %p46
        %p346 = pneg %p43
        %p347 = pneg %p67
        %p348 = pneg %p64
        %p349 = pneg %p88
        %p350 = pneg %p85
        %p351 = pneg %p109
        %p352 = pneg %p106
        %p353 = pneg %p130
        %p354 = pneg %p127
        %p355 = pneg %p151
        %p356 = pneg %p148
        %p357 = pneg %p172
        %p358 = pneg %p169
        %p359 = pneg %p193
        %p360 = pneg %p190
        %p361 = pneg %p214
        %p362 = pneg %p211
        %p363 = pneg %p240
        %p364 = pneg %p237
        %s365 = sand.u32 %s227, 1
        %s366 = scalar_lea.sflag [#allocation5], %s365
        %s367 = sand.u32 %s227, 1
        %s368 = smul.addr %s367, 256
        %s369 = scalar_lea.vmem [#allocation9], %s368
        %p370 = scmp.lt.s32.totalorder %s25, 1
        %s371 = scalar_select %p370, %s25, 1
        %s372 = smul.addr %s371, 32
        %s373 = smul.addr %s372, 8
        %s374 = scalar_lea.vmem %s0, %s373
        %375 = vst [vmem:[#allocation2] sm:$0xff] 0.0
        %376 = vst [vmem:[#allocation2 + $0x8] sm:$0xff] 0.0
        %377 = vst [vmem:[#allocation2 + $0x10] sm:$0xff] 0.0
        %378 = vst [vmem:[#allocation2 + $0x118] sm:$0xff] 0.0
        %379 = vst [vmem:[#allocation2 + $0x120] sm:$0xff] 0.0
        %380 = vst [vmem:[#allocation2 + $0x128] sm:$0xff] 0.0
        %v381 = vld [vmem:[%s374] sm:$0xff]
        %v382 = vld [vmem:[%s374 + $0x8] sm:$0xff]
        %v383 = vld [vmem:[%s374 + $0x10] sm:$0xff]
        %v384 = vld [vmem:[%s374 + $0x18] sm:$0xff]
        %v385 = vld [vmem:[%s374 + $0x20] sm:$0xff]
        %v386 = vld [vmem:[%s374 + $0x28] sm:$0xff]
        %v387 = vld [vmem:[%s374 + $0x30] sm:$0xff]
        %v388 = vld [vmem:[%s374 + $0x38] sm:$0xff]
        %v389 = vld [vmem:[%s374 + $0x40] sm:$0xff]
        %v390 = vld [vmem:[%s374 + $0x48] sm:$0xff]
        %v391 = vld [vmem:[%s374 + $0x50] sm:$0xff]
        %v392 = vld [vmem:[%s374 + $0x58] sm:$0xff]
        %v393 = vld [vmem:[%s374 + $0x60] sm:$0xff]
        %v394 = vld [vmem:[%s374 + $0x68] sm:$0xff]
        %v395 = vld [vmem:[%s374 + $0x70] sm:$0xff]
        %v396 = vld [vmem:[%s374 + $0x78] sm:$0xff]
        %v397 = vld [vmem:[%s374 + $0x80] sm:$0xff]
        %v398 = vld [vmem:[%s374 + $0x88] sm:$0xff]
        %v399 = vld [vmem:[%s374 + $0x90] sm:$0xff]
        %v400 = vld [vmem:[%s374 + $0x98] sm:$0xff]
        %v401 = vld [vmem:[%s374 + $0xa0] sm:$0xff]
        %v402 = vld [vmem:[%s374 + $0xa8] sm:$0xff]
        %v403 = vld [vmem:[%s374 + $0xb0] sm:$0xff]
        %v404 = vld [vmem:[%s374 + $0xb8] sm:$0xff]
        %v405 = vld [vmem:[%s374 + $0xc0] sm:$0xff]
        %v406 = vld [vmem:[%s374 + $0xc8] sm:$0xff]
        %v407 = vld [vmem:[%s374 + $0xd0] sm:$0xff]
        %v408 = vld [vmem:[%s374 + $0xd8] sm:$0xff]
        %v409 = vld [vmem:[%s374 + $0xe0] sm:$0xff]
        %v410 = vld [vmem:[%s374 + $0xe8] sm:$0xff]
        %v411 = vld [vmem:[%s374 + $0xf0] sm:$0xff]
        %v412 = vld [vmem:[%s374 + $0xf8] sm:$0xff]
        %v413 = vld [vmem:[#allocation3] sm:$0xff]
        %v414 = vld [vmem:[#allocation3 + $0x8] sm:$0xff]
        %v415 = vld [vmem:[#allocation3 + $0x10] sm:$0xff]
        %v416 = vld [vmem:[#allocation3 + $0x18] sm:$0xff]
        %v417 = vld [vmem:[#allocation3 + $0x20] sm:$0xff]
        %v418 = vld [vmem:[#allocation3 + $0x28] sm:$0xff]
        %v419 = vld [vmem:[#allocation3 + $0x30] sm:$0xff]
        %v420 = vld [vmem:[#allocation3 + $0x38] sm:$0xff]
        %v421 = vld [vmem:[#allocation3 + $0x40] sm:$0xff]
        %v422 = vld [vmem:[#allocation3 + $0x48] sm:$0xff]
        %v423 = vld [vmem:[#allocation3 + $0x50] sm:$0xff]
        %v424 = vld [vmem:[#allocation3 + $0x58] sm:$0xff]
        %v425 = vld [vmem:[#allocation3 + $0x60] sm:$0xff]
        %v426 = vld [vmem:[#allocation3 + $0x68] sm:$0xff]
        %v427 = vld [vmem:[#allocation3 + $0x70] sm:$0xff]
        %v428 = vld [vmem:[#allocation3 + $0x78] sm:$0xff]
        %v429 = vld [vmem:[%s2] sm:$0x1]
        %v431 = vlaneseq
        %v432 = vshrl.u32 %v431, 7
        %v433 = vsub.s32 0, %v432
        %v434 = vrot.slane %v429, %v433
        %436 = vmatprep.subr.mxu0 0.0
        %437 = vmatpush1.msra.mxu0 %v428
        %438 = vmatprep.subr.mxu0 0.0
        %439 = vmatpush1.msra.mxu0 %v427
        %440 = vmatprep.subr.mxu0 0.0
        %441 = vmatpush1.msra.mxu0 %v426
        %442 = vmatprep.subr.mxu0 0.0
        %443 = vmatpush1.msra.mxu0 %v425
        %444 = vmatprep.subr.mxu0 0.0
        %445 = vmatpush1.msra.mxu0 %v424
        %446 = vmatprep.subr.mxu0 0.0
        %447 = vmatpush1.msra.mxu0 %v423
        %448 = vmatprep.subr.mxu0 0.0
        %449 = vmatpush1.msra.mxu0 %v422
        %450 = vmatprep.subr.mxu0 0.0
        %451 = vmatpush1.msra.mxu0 %v421
        %452 = vmatprep.subr.mxu0 0.0
        %453 = vmatpush1.msra.mxu0 %v420
        %454 = vmatprep.subr.mxu0 0.0
        %455 = vmatpush1.msra.mxu0 %v419
        %456 = vmatprep.subr.mxu0 0.0
        %457 = vmatpush1.msra.mxu0 %v418
        %458 = vmatprep.subr.mxu0 0.0
        %459 = vmatpush1.msra.mxu0 %v417
        %460 = vmatprep.subr.mxu0 0.0
        %461 = vmatpush1.msra.mxu0 %v416
        %462 = vmatprep.subr.mxu0 0.0
        %463 = vmatpush1.msra.mxu0 %v415
        %464 = vmatprep.subr.mxu0 0.0
        %465 = vmatpush1.msra.mxu0 %v414
        %466 = vmatprep.subr.mxu0 0.0
        %467 = vmatpush1.msra.mxu0 %v413
        %468 = vmatprep.subr.mxu0 0.0
        %469 = vmatpush2.msra.mxu0 0.0
        %470 = vmatprep.subr.mxu0 0.0
        %471 = vmatpush2.msra.mxu0 0.0
        %472 = vmatprep.subr.mxu0 0.0
        %473 = vmatpush2.msra.mxu0 0.0
        %474 = vmatprep.subr.mxu0 0.0
        %475 = vmatpush2.msra.mxu0 0.0
        %476 = vmatprep.subr.mxu0 0.0
        %477 = vmatpush2.msra.mxu0 0.0
        %478 = vmatprep.subr.mxu0 0.0
        %479 = vmatpush2.msra.mxu0 0.0
        %480 = vmatprep.subr.mxu0 0.0
        %481 = vmatpush2.msra.mxu0 0.0
        %482 = vmatprep.subr.mxu0 0.0
        %483 = vmatpush2.msra.mxu0 0.0
        %484 = vmatprep.subr.mxu0 0.0
        %485 = vmatpush2.msra.mxu0 0.0
        %486 = vmatprep.subr.mxu0 0.0
        %487 = vmatpush2.msra.mxu0 0.0
        %488 = vmatprep.subr.mxu0 0.0
        %489 = vmatpush2.msra.mxu0 0.0
        %490 = vmatprep.subr.mxu0 0.0
        %491 = vmatpush2.msra.mxu0 0.0
        %492 = vmatprep.subr.mxu0 0.0
        %493 = vmatpush2.msra.mxu0 0.0
        %494 = vmatprep.subr.mxu0 0.0
        %495 = vmatpush2.msra.mxu0 0.0
        %496 = vmatprep.subr.mxu0 0.0
        %497 = vmatpush2.msra.mxu0 0.0
        %498 = vmatprep.subr.mxu0 0.0
        %499 = vmatpush2.msra.mxu0 0.0
        %500 = vmatprep.mubr.f32.mxu0 0.0
        %501 = vmatmul.mubr.f32.gmra.mxu0 %v381
        %v502 = vpop.f32.mrf.mxu0
        %v503 = vadd.f32 %v434, %v502
        %v504 = vpop.f32.mrf.mxu0
        %505 = vmatprep.mubr.f32.mxu0 0.0
        %506 = vmatmul.mubr.f32.gmra.mxu0 %v382
        %v507 = vpop.f32.mrf.mxu0
        %v508 = vadd.f32 %v434, %v507
        %v509 = vpop.f32.mrf.mxu0
        %510 = vmatprep.mubr.f32.mxu0 0.0
        %511 = vmatmul.mubr.f32.gmra.mxu0 %v383
        %v512 = vpop.f32.mrf.mxu0
        %v513 = vadd.f32 %v434, %v512
        %v514 = vpop.f32.mrf.mxu0
        %515 = vmatprep.mubr.f32.mxu0 0.0
        %516 = vmatmul.mubr.f32.gmra.mxu0 %v384
        %v517 = vpop.f32.mrf.mxu0
        %v518 = vadd.f32 %v434, %v517
        %v519 = vpop.f32.mrf.mxu0
        %520 = vmatprep.mubr.f32.mxu0 0.0
        %521 = vmatmul.mubr.f32.gmra.mxu0 %v385
        %v522 = vpop.f32.mrf.mxu0
        %v523 = vadd.f32 %v434, %v522
        %v524 = vpop.f32.mrf.mxu0
        %525 = vmatprep.mubr.f32.mxu0 0.0
        %526 = vmatmul.mubr.f32.gmra.mxu0 %v386
        %v527 = vpop.f32.mrf.mxu0
        %v528 = vadd.f32 %v434, %v527
        %v529 = vpop.f32.mrf.mxu0
        %530 = vmatprep.mubr.f32.mxu0 0.0
        %531 = vmatmul.mubr.f32.gmra.mxu0 %v387
        %v532 = vpop.f32.mrf.mxu0
        %v533 = vadd.f32 %v434, %v532
        %v534 = vpop.f32.mrf.mxu0
        %535 = vmatprep.mubr.f32.mxu0 0.0
        %536 = vmatmul.mubr.f32.gmra.mxu0 %v388
        %v537 = vpop.f32.mrf.mxu0
        %v538 = vadd.f32 %v434, %v537
        %v539 = vpop.f32.mrf.mxu0
        %540 = vmatprep.mubr.f32.mxu0 0.0
        %541 = vmatmul.mubr.f32.gmra.mxu0 %v389
        %v542 = vpop.f32.mrf.mxu0
        %v543 = vadd.f32 %v434, %v542
        %v544 = vpop.f32.mrf.mxu0
        %545 = vmatprep.mubr.f32.mxu0 0.0
        %546 = vmatmul.mubr.f32.gmra.mxu0 %v390
        %v547 = vpop.f32.mrf.mxu0
        %v548 = vadd.f32 %v434, %v547
        %v549 = vpop.f32.mrf.mxu0
        %550 = vmatprep.mubr.f32.mxu0 0.0
        %551 = vmatmul.mubr.f32.gmra.mxu0 %v391
        %v552 = vpop.f32.mrf.mxu0
        %v553 = vadd.f32 %v434, %v552
        %v554 = vpop.f32.mrf.mxu0
        %555 = vmatprep.mubr.f32.mxu0 0.0
        %556 = vmatmul.mubr.f32.gmra.mxu0 %v392
        %v557 = vpop.f32.mrf.mxu0
        %v558 = vadd.f32 %v434, %v557
        %v559 = vpop.f32.mrf.mxu0
        %560 = vmatprep.mubr.f32.mxu0 0.0
        %561 = vmatmul.mubr.f32.gmra.mxu0 %v393
        %v562 = vpop.f32.mrf.mxu0
        %v563 = vadd.f32 %v434, %v562
        %v564 = vpop.f32.mrf.mxu0
        %565 = vmatprep.mubr.f32.mxu0 0.0
        %566 = vmatmul.mubr.f32.gmra.mxu0 %v394
        %v567 = vpop.f32.mrf.mxu0
        %v568 = vadd.f32 %v434, %v567
        %v569 = vpop.f32.mrf.mxu0
        %570 = vmatprep.mubr.f32.mxu0 0.0
        %571 = vmatmul.mubr.f32.gmra.mxu0 %v395
        %v572 = vpop.f32.mrf.mxu0
        %v573 = vadd.f32 %v434, %v572
        %v574 = vpop.f32.mrf.mxu0
        %575 = vmatprep.mubr.f32.mxu0 0.0
        %576 = vmatmul.mubr.f32.gmra.mxu0 %v396
        %v577 = vpop.f32.mrf.mxu0
        %v578 = vadd.f32 %v434, %v577
        %v579 = vpop.f32.mrf.mxu0
        %580 = vmatprep.mubr.f32.mxu0 0.0
        %581 = vmatmul.mubr.f32.gmra.mxu0 %v397
        %v582 = vpop.f32.mrf.mxu0
        %v583 = vadd.f32 %v434, %v582
        %v584 = vpop.f32.mrf.mxu0
        %585 = vmatprep.mubr.f32.mxu0 0.0
        %586 = vmatmul.mubr.f32.gmra.mxu0 %v398
        %v587 = vpop.f32.mrf.mxu0
        %v588 = vadd.f32 %v434, %v587
        %v589 = vpop.f32.mrf.mxu0
        %590 = vmatprep.mubr.f32.mxu0 0.0
        %591 = vmatmul.mubr.f32.gmra.mxu0 %v399
        %v592 = vpop.f32.mrf.mxu0
        %v593 = vadd.f32 %v434, %v592
        %v594 = vpop.f32.mrf.mxu0
        %595 = vmatprep.mubr.f32.mxu0 0.0
        %596 = vmatmul.mubr.f32.gmra.mxu0 %v400
        %v597 = vpop.f32.mrf.mxu0
        %v598 = vadd.f32 %v434, %v597
        %v599 = vpop.f32.mrf.mxu0
        %600 = vmatprep.mubr.f32.mxu0 0.0
        %601 = vmatmul.mubr.f32.gmra.mxu0 %v401
        %v602 = vpop.f32.mrf.mxu0
        %v603 = vadd.f32 %v434, %v602
        %v604 = vpop.f32.mrf.mxu0
        %605 = vmatprep.mubr.f32.mxu0 0.0
        %606 = vmatmul.mubr.f32.gmra.mxu0 %v402
        %v607 = vpop.f32.mrf.mxu0
        %v608 = vadd.f32 %v434, %v607
        %v609 = vpop.f32.mrf.mxu0
        %610 = vmatprep.mubr.f32.mxu0 0.0
        %611 = vmatmul.mubr.f32.gmra.mxu0 %v403
        %v612 = vpop.f32.mrf.mxu0
        %v613 = vadd.f32 %v434, %v612
        %v614 = vpop.f32.mrf.mxu0
        %615 = vmatprep.mubr.f32.mxu0 0.0
        %616 = vmatmul.mubr.f32.gmra.mxu0 %v404
        %v617 = vpop.f32.mrf.mxu0
        %v618 = vadd.f32 %v434, %v617
        %v619 = vpop.f32.mrf.mxu0
        %620 = vmatprep.mubr.f32.mxu0 0.0
        %621 = vmatmul.mubr.f32.gmra.mxu0 %v405
        %v622 = vpop.f32.mrf.mxu0
        %v623 = vadd.f32 %v434, %v622
        %v624 = vpop.f32.mrf.mxu0
        %625 = vmatprep.mubr.f32.mxu0 0.0
        %626 = vmatmul.mubr.f32.gmra.mxu0 %v406
        %v627 = vpop.f32.mrf.mxu0
        %v628 = vadd.f32 %v434, %v627
        %v629 = vpop.f32.mrf.mxu0
        %630 = vmatprep.mubr.f32.mxu0 0.0
        %631 = vmatmul.mubr.f32.gmra.mxu0 %v407
        %v632 = vpop.f32.mrf.mxu0
        %v633 = vadd.f32 %v434, %v632
        %v634 = vpop.f32.mrf.mxu0
        %635 = vmatprep.mubr.f32.mxu0 0.0
        %636 = vmatmul.mubr.f32.gmra.mxu0 %v408
        %v637 = vpop.f32.mrf.mxu0
        %v638 = vadd.f32 %v434, %v637
        %v639 = vpop.f32.mrf.mxu0
        %640 = vmatprep.mubr.f32.mxu0 0.0
        %641 = vmatmul.mubr.f32.gmra.mxu0 %v409
        %v642 = vpop.f32.mrf.mxu0
        %v643 = vadd.f32 %v434, %v642
        %v644 = vpop.f32.mrf.mxu0
        %645 = vmatprep.mubr.f32.mxu0 0.0
        %646 = vmatmul.mubr.f32.gmra.mxu0 %v410
        %v647 = vpop.f32.mrf.mxu0
        %v648 = vadd.f32 %v434, %v647
        %v649 = vpop.f32.mrf.mxu0
        %650 = vmatprep.mubr.f32.mxu0 0.0
        %651 = vmatmul.mubr.f32.gmra.mxu0 %v411
        %v652 = vpop.f32.mrf.mxu0
        %v653 = vadd.f32 %v434, %v652
        %v654 = vpop.f32.mrf.mxu0
        %655 = vmatprep.mubr.f32.mxu0 0.0
        %656 = vmatmul.mubr.f32.gmra.mxu0 %v412
        %v657 = vpop.f32.mrf.mxu0
        %v658 = vadd.f32 %v434, %v657
        %v659 = vpop.f32.mrf.mxu0
        %660 = vdwg.mxu0
        %v661 = vmax.f32 %v503, 0.0
        %v662 = vmax.f32 %v508, 0.0
        %v663 = vmax.f32 %v513, 0.0
        %v664 = vmax.f32 %v518, 0.0
        %v665 = vmax.f32 %v523, 0.0
        %v666 = vmax.f32 %v528, 0.0
        %v667 = vmax.f32 %v533, 0.0
        %v668 = vmax.f32 %v538, 0.0
        %v669 = vmax.f32 %v543, 0.0
        %v670 = vmax.f32 %v548, 0.0
        %v671 = vmax.f32 %v553, 0.0
        %v672 = vmax.f32 %v558, 0.0
        %v673 = vmax.f32 %v563, 0.0
        %v674 = vmax.f32 %v568, 0.0
        %v675 = vmax.f32 %v573, 0.0
        %v676 = vmax.f32 %v578, 0.0
        %v677 = vmax.f32 %v583, 0.0
        %v678 = vmax.f32 %v588, 0.0
        %v679 = vmax.f32 %v593, 0.0
        %v680 = vmax.f32 %v598, 0.0
        %v681 = vmax.f32 %v603, 0.0
        %v682 = vmax.f32 %v608, 0.0
        %v683 = vmax.f32 %v613, 0.0
        %v684 = vmax.f32 %v618, 0.0
        %v685 = vmax.f32 %v623, 0.0
        %v686 = vmax.f32 %v628, 0.0
        %v687 = vmax.f32 %v633, 0.0
        %v688 = vmax.f32 %v638, 0.0
        %v689 = vmax.f32 %v643, 0.0
        %v690 = vmax.f32 %v648, 0.0
        %v691 = vmax.f32 %v653, 0.0
        %v692 = vmax.f32 %v658, 0.0
        %693 = vst [vmem:[#allocation2 + $0x18] sm:$0xff] %v661
        %694 = vst [vmem:[#allocation2 + $0x20] sm:$0xff] %v662
        %695 = vst [vmem:[#allocation2 + $0x28] sm:$0xff] %v663
        %696 = vst [vmem:[#allocation2 + $0x30] sm:$0xff] %v664
        %697 = vst [vmem:[#allocation2 + $0x38] sm:$0xff] %v665
        %698 = vst [vmem:[#allocation2 + $0x40] sm:$0xff] %v666
        %699 = vst [vmem:[#allocation2 + $0x48] sm:$0xff] %v667
        %700 = vst [vmem:[#allocation2 + $0x50] sm:$0xff] %v668
        %701 = vst [vmem:[#allocation2 + $0x58] sm:$0xff] %v669
        %702 = vst [vmem:[#allocation2 + $0x60] sm:$0xff] %v670
        %703 = vst [vmem:[#allocation2 + $0x68] sm:$0xff] %v671
        %704 = vst [vmem:[#allocation2 + $0x70] sm:$0xff] %v672
        %705 = vst [vmem:[#allocation2 + $0x78] sm:$0xff] %v673
        %706 = vst [vmem:[#allocation2 + $0x80] sm:$0xff] %v674
        %707 = vst [vmem:[#allocation2 + $0x88] sm:$0xff] %v675
        %708 = vst [vmem:[#allocation2 + $0x90] sm:$0xff] %v676
        %709 = vst [vmem:[#allocation2 + $0x98] sm:$0xff] %v677
        %710 = vst [vmem:[#allocation2 + $0xa0] sm:$0xff] %v678
        %711 = vst [vmem:[#allocation2 + $0xa8] sm:$0xff] %v679
        %712 = vst [vmem:[#allocation2 + $0xb0] sm:$0xff] %v680
        %713 = vst [vmem:[#allocation2 + $0xb8] sm:$0xff] %v681
        %714 = vst [vmem:[#allocation2 + $0xc0] sm:$0xff] %v682
        %715 = vst [vmem:[#allocation2 + $0xc8] sm:$0xff] %v683
        %716 = vst [vmem:[#allocation2 + $0xd0] sm:$0xff] %v684
        %717 = vst [vmem:[#allocation2 + $0xd8] sm:$0xff] %v685
        %718 = vst [vmem:[#allocation2 + $0xe0] sm:$0xff] %v686
        %719 = vst [vmem:[#allocation2 + $0xe8] sm:$0xff] %v687
        %720 = vst [vmem:[#allocation2 + $0xf0] sm:$0xff] %v688
        %721 = vst [vmem:[#allocation2 + $0xf8] sm:$0xff] %v689
        %722 = vst [vmem:[#allocation2 + $0x100] sm:$0xff] %v690
        %723 = vst [vmem:[#allocation2 + $0x108] sm:$0xff] %v691
        %724 = vst [vmem:[#allocation2 + $0x110] sm:$0xff] %v692
        %v725 = vld [vmem:[#allocation2 + $0x7] sm:$0xff]
        %v726 = vld [vmem:[#allocation2 + $0xf] sm:$0xff]
        %v727 = vld [vmem:[#allocation2 + $0x17] sm:$0xff]
        %v728 = vld [vmem:[#allocation2 + $0x1f] sm:$0xff]
        %v729 = vld [vmem:[#allocation2 + $0x27] sm:$0xff]
        %v730 = vld [vmem:[#allocation2 + $0x2f] sm:$0xff]
        %v731 = vld [vmem:[#allocation2 + $0x37] sm:$0xff]
        %v732 = vld [vmem:[#allocation2 + $0x3f] sm:$0xff]
        %v733 = vld [vmem:[#allocation2 + $0x47] sm:$0xff]
        %v734 = vld [vmem:[#allocation2 + $0x4f] sm:$0xff]
        %v735 = vld [vmem:[#allocation2 + $0x57] sm:$0xff]
        %v736 = vld [vmem:[#allocation2 + $0x5f] sm:$0xff]
        %v737 = vld [vmem:[#allocation2 + $0x67] sm:$0xff]
        %v738 = vld [vmem:[#allocation2 + $0x6f] sm:$0xff]
        %v739 = vld [vmem:[#allocation2 + $0x77] sm:$0xff]
        %v740 = vld [vmem:[#allocation2 + $0x7f] sm:$0xff]
        %v741 = vld [vmem:[#allocation2 + $0x87] sm:$0xff]
        %v742 = vld [vmem:[#allocation2 + $0x8f] sm:$0xff]
        %v743 = vld [vmem:[#allocation2 + $0x97] sm:$0xff]
        %v744 = vld [vmem:[#allocation2 + $0x9f] sm:$0xff]
        %v745 = vld [vmem:[#allocation2 + $0xa7] sm:$0xff]
        %v746 = vld [vmem:[#allocation2 + $0xaf] sm:$0xff]
        %v747 = vld [vmem:[#allocation2 + $0xb7] sm:$0xff]
        %v748 = vld [vmem:[#allocation2 + $0xbf] sm:$0xff]
        %v749 = vld [vmem:[#allocation2 + $0xc7] sm:$0xff]
        %v750 = vld [vmem:[#allocation2 + $0xcf] sm:$0xff]
        %v751 = vld [vmem:[#allocation2 + $0xd7] sm:$0xff]
        %v752 = vld [vmem:[#allocation2 + $0xdf] sm:$0xff]
        %v753 = vld [vmem:[#allocation2 + $0xe7] sm:$0xff]
        %v754 = vld [vmem:[#allocation2 + $0xef] sm:$0xff]
        %v755 = vld [vmem:[#allocation2 + $0xf7] sm:$0xff]
        %v756 = vld [vmem:[#allocation2 + $0xff] sm:$0xff]
        %v757 = vld [vmem:[#allocation6] sm:$0xff]
        %v758 = vld [vmem:[#allocation6 + $0x8] sm:$0xff]
        %v759 = vld [vmem:[#allocation6 + $0x10] sm:$0xff]
        %v760 = vld [vmem:[#allocation6 + $0x18] sm:$0xff]
        %v761 = vld [vmem:[#allocation6 + $0x20] sm:$0xff]
        %v762 = vld [vmem:[#allocation6 + $0x28] sm:$0xff]
        %v763 = vld [vmem:[#allocation6 + $0x30] sm:$0xff]
        %v764 = vld [vmem:[#allocation6 + $0x38] sm:$0xff]
        %v765 = vld [vmem:[#allocation6 + $0x40] sm:$0xff]
        %v766 = vld [vmem:[#allocation6 + $0x48] sm:$0xff]
        %v767 = vld [vmem:[#allocation6 + $0x50] sm:$0xff]
        %v768 = vld [vmem:[#allocation6 + $0x58] sm:$0xff]
        %v769 = vld [vmem:[#allocation6 + $0x60] sm:$0xff]
        %v770 = vld [vmem:[#allocation6 + $0x68] sm:$0xff]
        %v771 = vld [vmem:[#allocation6 + $0x70] sm:$0xff]
        %v772 = vld [vmem:[#allocation6 + $0x78] sm:$0xff]
        %v773 = vld [vmem:[#allocation2 + $0x107] sm:$0xff]
        %v774 = vld [vmem:[#allocation2 + $0x10f] sm:$0xff]
        %s775 = scalar_lea.vmem [#allocation6], 384
        %v776 = vld [vmem:[%s775] sm:$0xff]
        %v777 = vld [vmem:[%s775 + $0x8] sm:$0xff]
        %v778 = vld [vmem:[%s775 + $0x10] sm:$0xff]
        %v779 = vld [vmem:[%s775 + $0x18] sm:$0xff]
        %v780 = vld [vmem:[%s775 + $0x20] sm:$0xff]
        %v781 = vld [vmem:[%s775 + $0x28] sm:$0xff]
        %v782 = vld [vmem:[%s775 + $0x30] sm:$0xff]
        %v783 = vld [vmem:[%s775 + $0x38] sm:$0xff]
        %v784 = vld [vmem:[%s775 + $0x40] sm:$0xff]
        %v785 = vld [vmem:[%s775 + $0x48] sm:$0xff]
        %v786 = vld [vmem:[%s775 + $0x50] sm:$0xff]
        %v787 = vld [vmem:[%s775 + $0x58] sm:$0xff]
        %v788 = vld [vmem:[%s775 + $0x60] sm:$0xff]
        %v789 = vld [vmem:[%s775 + $0x68] sm:$0xff]
        %v790 = vld [vmem:[%s775 + $0x70] sm:$0xff]
        %v791 = vld [vmem:[%s775 + $0x78] sm:$0xff]
        %792 = vmatprep.subr.mxu0 0.0
        %793 = vmatpush1.msra.mxu0 %v791
        %794 = vmatprep.subr.mxu0 0.0
        %795 = vmatpush1.msra.mxu0 %v790
        %796 = vmatprep.subr.mxu0 0.0
        %797 = vmatpush1.msra.mxu0 %v789
        %798 = vmatprep.subr.mxu0 0.0
        %799 = vmatpush1.msra.mxu0 %v788
        %800 = vmatprep.subr.mxu0 0.0
        %801 = vmatpush1.msra.mxu0 %v787
        %802 = vmatprep.subr.mxu0 0.0
        %803 = vmatpush1.msra.mxu0 %v786
        %804 = vmatprep.subr.mxu0 0.0
        %805 = vmatpush1.msra.mxu0 %v785
        %806 = vmatprep.subr.mxu0 0.0
        %807 = vmatpush1.msra.mxu0 %v784
        %808 = vmatprep.subr.mxu0 0.0
        %809 = vmatpush1.msra.mxu0 %v783
        %810 = vmatprep.subr.mxu0 0.0
        %811 = vmatpush1.msra.mxu0 %v782
        %812 = vmatprep.subr.mxu0 0.0
        %813 = vmatpush1.msra.mxu0 %v781
        %814 = vmatprep.subr.mxu0 0.0
        %815 = vmatpush1.msra.mxu0 %v780
        %816 = vmatprep.subr.mxu0 0.0
        %817 = vmatpush1.msra.mxu0 %v779
        %818 = vmatprep.subr.mxu0 0.0
        %819 = vmatpush1.msra.mxu0 %v778
        %820 = vmatprep.subr.mxu0 0.0
        %821 = vmatpush1.msra.mxu0 %v777
        %822 = vmatprep.subr.mxu0 0.0
        %823 = vmatpush1.msra.mxu0 %v776
        %824 = vmatprep.subr.mxu0 0.0
        %825 = vmatpush2.msra.mxu0 0.0
        %826 = vmatprep.subr.mxu0 0.0
        %827 = vmatpush2.msra.mxu0 0.0
        %828 = vmatprep.subr.mxu0 0.0
        %829 = vmatpush2.msra.mxu0 0.0
        %830 = vmatprep.subr.mxu0 0.0
        %831 = vmatpush2.msra.mxu0 0.0
        %832 = vmatprep.subr.mxu0 0.0
        %833 = vmatpush2.msra.mxu0 0.0
        %834 = vmatprep.subr.mxu0 0.0
        %835 = vmatpush2.msra.mxu0 0.0
        %836 = vmatprep.subr.mxu0 0.0
        %837 = vmatpush2.msra.mxu0 0.0
        %838 = vmatprep.subr.mxu0 0.0
        %839 = vmatpush2.msra.mxu0 0.0
        %840 = vmatprep.subr.mxu0 0.0
        %841 = vmatpush2.msra.mxu0 0.0
        %842 = vmatprep.subr.mxu0 0.0
        %843 = vmatpush2.msra.mxu0 0.0
        %844 = vmatprep.subr.mxu0 0.0
        %845 = vmatpush2.msra.mxu0 0.0
        %846 = vmatprep.subr.mxu0 0.0
        %847 = vmatpush2.msra.mxu0 0.0
        %848 = vmatprep.subr.mxu0 0.0
        %849 = vmatpush2.msra.mxu0 0.0
        %850 = vmatprep.subr.mxu0 0.0
        %851 = vmatpush2.msra.mxu0 0.0
        %852 = vmatprep.subr.mxu0 0.0
        %853 = vmatpush2.msra.mxu0 0.0
        %854 = vmatprep.subr.mxu0 0.0
        %855 = vmatpush2.msra.mxu0 0.0
        %856 = vmatprep.mubr.f32.mxu0 0.0
        %857 = vmatmul.mubr.f32.gmra.mxu0 %v727
        %v858 = vpop.f32.mrf.mxu0
        %v859 = vadd.f32 0.0, %v858
        %v860 = vpop.f32.mrf.mxu0
        %861 = vmatprep.mubr.f32.mxu0 0.0
        %862 = vmatmul.mubr.f32.gmra.mxu0 %v728
        %v863 = vpop.f32.mrf.mxu0
        %v864 = vadd.f32 0.0, %v863
        %v865 = vpop.f32.mrf.mxu0
        %866 = vmatprep.mubr.f32.mxu0 0.0
        %867 = vmatmul.mubr.f32.gmra.mxu0 %v729
        %v868 = vpop.f32.mrf.mxu0
        %v869 = vadd.f32 0.0, %v868
        %v870 = vpop.f32.mrf.mxu0
        %871 = vmatprep.mubr.f32.mxu0 0.0
        %872 = vmatmul.mubr.f32.gmra.mxu0 %v730
        %v873 = vpop.f32.mrf.mxu0
        %v874 = vadd.f32 0.0, %v873
        %v875 = vpop.f32.mrf.mxu0
        %876 = vmatprep.mubr.f32.mxu0 0.0
        %877 = vmatmul.mubr.f32.gmra.mxu0 %v731
        %v878 = vpop.f32.mrf.mxu0
        %v879 = vadd.f32 0.0, %v878
        %v880 = vpop.f32.mrf.mxu0
        %881 = vmatprep.mubr.f32.mxu0 0.0
        %882 = vmatmul.mubr.f32.gmra.mxu0 %v732
        %v883 = vpop.f32.mrf.mxu0
        %v884 = vadd.f32 0.0, %v883
        %v885 = vpop.f32.mrf.mxu0
        %886 = vmatprep.mubr.f32.mxu0 0.0
        %887 = vmatmul.mubr.f32.gmra.mxu0 %v733
        %v888 = vpop.f32.mrf.mxu0
        %v889 = vadd.f32 0.0, %v888
        %v890 = vpop.f32.mrf.mxu0
        %891 = vmatprep.mubr.f32.mxu0 0.0
        %892 = vmatmul.mubr.f32.gmra.mxu0 %v734
        %v893 = vpop.f32.mrf.mxu0
        %v894 = vadd.f32 0.0, %v893
        %v895 = vpop.f32.mrf.mxu0
        %896 = vmatprep.mubr.f32.mxu0 0.0
        %897 = vmatmul.mubr.f32.gmra.mxu0 %v735
        %v898 = vpop.f32.mrf.mxu0
        %v899 = vadd.f32 0.0, %v898
        %v900 = vpop.f32.mrf.mxu0
        %901 = vmatprep.mubr.f32.mxu0 0.0
        %902 = vmatmul.mubr.f32.gmra.mxu0 %v736
        %v903 = vpop.f32.mrf.mxu0
        %v904 = vadd.f32 0.0, %v903
        %v905 = vpop.f32.mrf.mxu0
        %906 = vmatprep.mubr.f32.mxu0 0.0
        %907 = vmatmul.mubr.f32.gmra.mxu0 %v737
        %v908 = vpop.f32.mrf.mxu0
        %v909 = vadd.f32 0.0, %v908
        %v910 = vpop.f32.mrf.mxu0
        %911 = vmatprep.mubr.f32.mxu0 0.0
        %912 = vmatmul.mubr.f32.gmra.mxu0 %v738
        %v913 = vpop.f32.mrf.mxu0
        %v914 = vadd.f32 0.0, %v913
        %v915 = vpop.f32.mrf.mxu0
        %916 = vmatprep.mubr.f32.mxu0 0.0
        %917 = vmatmul.mubr.f32.gmra.mxu0 %v739
        %v918 = vpop.f32.mrf.mxu0
        %v919 = vadd.f32 0.0, %v918
        %v920 = vpop.f32.mrf.mxu0
        %921 = vmatprep.mubr.f32.mxu0 0.0
        %922 = vmatmul.mubr.f32.gmra.mxu0 %v740
        %v923 = vpop.f32.mrf.mxu0
        %v924 = vadd.f32 0.0, %v923
        %v925 = vpop.f32.mrf.mxu0
        %926 = vmatprep.mubr.f32.mxu0 0.0
        %927 = vmatmul.mubr.f32.gmra.mxu0 %v741
        %v928 = vpop.f32.mrf.mxu0
        %v929 = vadd.f32 0.0, %v928
        %v930 = vpop.f32.mrf.mxu0
        %931 = vmatprep.mubr.f32.mxu0 0.0
        %932 = vmatmul.mubr.f32.gmra.mxu0 %v742
        %v933 = vpop.f32.mrf.mxu0
        %v934 = vadd.f32 0.0, %v933
        %v935 = vpop.f32.mrf.mxu0
        %936 = vmatprep.mubr.f32.mxu0 0.0
        %937 = vmatmul.mubr.f32.gmra.mxu0 %v743
        %v938 = vpop.f32.mrf.mxu0
        %v939 = vadd.f32 0.0, %v938
        %v940 = vpop.f32.mrf.mxu0
        %941 = vmatprep.mubr.f32.mxu0 0.0
        %942 = vmatmul.mubr.f32.gmra.mxu0 %v744
        %v943 = vpop.f32.mrf.mxu0
        %v944 = vadd.f32 0.0, %v943
        %v945 = vpop.f32.mrf.mxu0
        %946 = vmatprep.mubr.f32.mxu0 0.0
        %947 = vmatmul.mubr.f32.gmra.mxu0 %v745
        %v948 = vpop.f32.mrf.mxu0
        %v949 = vadd.f32 0.0, %v948
        %v950 = vpop.f32.mrf.mxu0
        %951 = vmatprep.mubr.f32.mxu0 0.0
        %952 = vmatmul.mubr.f32.gmra.mxu0 %v746
        %v953 = vpop.f32.mrf.mxu0
        %v954 = vadd.f32 0.0, %v953
        %v955 = vpop.f32.mrf.mxu0
        %956 = vmatprep.mubr.f32.mxu0 0.0
        %957 = vmatmul.mubr.f32.gmra.mxu0 %v747
        %v958 = vpop.f32.mrf.mxu0
        %v959 = vadd.f32 0.0, %v958
        %v960 = vpop.f32.mrf.mxu0
        %961 = vmatprep.mubr.f32.mxu0 0.0
        %962 = vmatmul.mubr.f32.gmra.mxu0 %v748
        %v963 = vpop.f32.mrf.mxu0
        %v964 = vadd.f32 0.0, %v963
        %v965 = vpop.f32.mrf.mxu0
        %966 = vmatprep.mubr.f32.mxu0 0.0
        %967 = vmatmul.mubr.f32.gmra.mxu0 %v749
        %v968 = vpop.f32.mrf.mxu0
        %v969 = vadd.f32 0.0, %v968
        %v970 = vpop.f32.mrf.mxu0
        %971 = vmatprep.mubr.f32.mxu0 0.0
        %972 = vmatmul.mubr.f32.gmra.mxu0 %v750
        %v973 = vpop.f32.mrf.mxu0
        %v974 = vadd.f32 0.0, %v973
        %v975 = vpop.f32.mrf.mxu0
        %976 = vmatprep.mubr.f32.mxu0 0.0
        %977 = vmatmul.mubr.f32.gmra.mxu0 %v751
        %v978 = vpop.f32.mrf.mxu0
        %v979 = vadd.f32 0.0, %v978
        %v980 = vpop.f32.mrf.mxu0
        %981 = vmatprep.mubr.f32.mxu0 0.0
        %982 = vmatmul.mubr.f32.gmra.mxu0 %v752
        %v983 = vpop.f32.mrf.mxu0
        %v984 = vadd.f32 0.0, %v983
        %v985 = vpop.f32.mrf.mxu0
        %986 = vmatprep.mubr.f32.mxu0 0.0
        %987 = vmatmul.mubr.f32.gmra.mxu0 %v753
        %v988 = vpop.f32.mrf.mxu0
        %v989 = vadd.f32 0.0, %v988
        %v990 = vpop.f32.mrf.mxu0
        %991 = vmatprep.mubr.f32.mxu0 0.0
        %992 = vmatmul.mubr.f32.gmra.mxu0 %v754
        %v993 = vpop.f32.mrf.mxu0
        %v994 = vadd.f32 0.0, %v993
        %v995 = vpop.f32.mrf.mxu0
        %996 = vmatprep.mubr.f32.mxu0 0.0
        %997 = vmatmul.mubr.f32.gmra.mxu0 %v755
        %v998 = vpop.f32.mrf.mxu0
        %v999 = vadd.f32 0.0, %v998
        %v1000 = vpop.f32.mrf.mxu0
        %1001 = vmatprep.mubr.f32.mxu0 0.0
        %1002 = vmatmul.mubr.f32.gmra.mxu0 %v756
        %v1003 = vpop.f32.mrf.mxu0
        %v1004 = vadd.f32 0.0, %v1003
        %v1005 = vpop.f32.mrf.mxu0
        %1006 = vmatprep.mubr.f32.mxu0 0.0
        %1007 = vmatmul.mubr.f32.gmra.mxu0 %v773
        %v1008 = vpop.f32.mrf.mxu0
        %v1009 = vadd.f32 0.0, %v1008
        %v1010 = vpop.f32.mrf.mxu0
        %1011 = vmatprep.mubr.f32.mxu0 0.0
        %1012 = vmatmul.mubr.f32.gmra.mxu0 %v774
        %v1013 = vpop.f32.mrf.mxu0
        %v1014 = vadd.f32 0.0, %v1013
        %v1015 = vpop.f32.mrf.mxu0
        %1016 = vdwg.mxu0
        %1017 = vmatprep.subr.mxu0 0.0
        %1018 = vmatpush1.msra.mxu0 %v772
        %1019 = vmatprep.subr.mxu0 0.0
        %1020 = vmatpush1.msra.mxu0 %v771
        %1021 = vmatprep.subr.mxu0 0.0
        %1022 = vmatpush1.msra.mxu0 %v770
        %1023 = vmatprep.subr.mxu0 0.0
        %1024 = vmatpush1.msra.mxu0 %v769
        %1025 = vmatprep.subr.mxu0 0.0
        %1026 = vmatpush1.msra.mxu0 %v768
        %1027 = vmatprep.subr.mxu0 0.0
        %1028 = vmatpush1.msra.mxu0 %v767
        %1029 = vmatprep.subr.mxu0 0.0
        %1030 = vmatpush1.msra.mxu0 %v766
        %1031 = vmatprep.subr.mxu0 0.0
        %1032 = vmatpush1.msra.mxu0 %v765
        %1033 = vmatprep.subr.mxu0 0.0
        %1034 = vmatpush1.msra.mxu0 %v764
        %1035 = vmatprep.subr.mxu0 0.0
        %1036 = vmatpush1.msra.mxu0 %v763
        %1037 = vmatprep.subr.mxu0 0.0
        %1038 = vmatpush1.msra.mxu0 %v762
        %1039 = vmatprep.subr.mxu0 0.0
        %1040 = vmatpush1.msra.mxu0 %v761
        %1041 = vmatprep.subr.mxu0 0.0
        %1042 = vmatpush1.msra.mxu0 %v760
        %1043 = vmatprep.subr.mxu0 0.0
        %1044 = vmatpush1.msra.mxu0 %v759
        %1045 = vmatprep.subr.mxu0 0.0
        %1046 = vmatpush1.msra.mxu0 %v758
        %1047 = vmatprep.subr.mxu0 0.0
        %1048 = vmatpush1.msra.mxu0 %v757
        %1049 = vmatprep.subr.mxu0 0.0
        %1050 = vmatpush2.msra.mxu0 0.0
        %1051 = vmatprep.subr.mxu0 0.0
        %1052 = vmatpush2.msra.mxu0 0.0
        %1053 = vmatprep.subr.mxu0 0.0
        %1054 = vmatpush2.msra.mxu0 0.0
        %1055 = vmatprep.subr.mxu0 0.0
        %1056 = vmatpush2.msra.mxu0 0.0
        %1057 = vmatprep.subr.mxu0 0.0
        %1058 = vmatpush2.msra.mxu0 0.0
        %1059 = vmatprep.subr.mxu0 0.0
        %1060 = vmatpush2.msra.mxu0 0.0
        %1061 = vmatprep.subr.mxu0 0.0
        %1062 = vmatpush2.msra.mxu0 0.0
        %1063 = vmatprep.subr.mxu0 0.0
        %1064 = vmatpush2.msra.mxu0 0.0
        %1065 = vmatprep.subr.mxu0 0.0
        %1066 = vmatpush2.msra.mxu0 0.0
        %1067 = vmatprep.subr.mxu0 0.0
        %1068 = vmatpush2.msra.mxu0 0.0
        %1069 = vmatprep.subr.mxu0 0.0
        %1070 = vmatpush2.msra.mxu0 0.0
        %1071 = vmatprep.subr.mxu0 0.0
        %1072 = vmatpush2.msra.mxu0 0.0
        %1073 = vmatprep.subr.mxu0 0.0
        %1074 = vmatpush2.msra.mxu0 0.0
        %1075 = vmatprep.subr.mxu0 0.0
        %1076 = vmatpush2.msra.mxu0 0.0
        %1077 = vmatprep.subr.mxu0 0.0
        %1078 = vmatpush2.msra.mxu0 0.0
        %1079 = vmatprep.subr.mxu0 0.0
        %1080 = vmatpush2.msra.mxu0 0.0
        %1081 = vmatprep.mubr.f32.mxu0 0.0
        %1082 = vmatmul.mubr.f32.gmra.mxu0 %v725
        %v1083 = vpop.f32.mrf.mxu0
        %v1084 = vadd.f32 %v859, %v1083
        %v1085 = vpop.f32.mrf.mxu0
        %1086 = vmatprep.mubr.f32.mxu0 0.0
        %1087 = vmatmul.mubr.f32.gmra.mxu0 %v726
        %v1088 = vpop.f32.mrf.mxu0
        %v1089 = vadd.f32 %v864, %v1088
        %v1090 = vpop.f32.mrf.mxu0
        %1091 = vmatprep.mubr.f32.mxu0 0.0
        %1092 = vmatmul.mubr.f32.gmra.mxu0 %v727
        %v1093 = vpop.f32.mrf.mxu0
        %v1094 = vadd.f32 %v869, %v1093
        %v1095 = vpop.f32.mrf.mxu0
        %1096 = vmatprep.mubr.f32.mxu0 0.0
        %1097 = vmatmul.mubr.f32.gmra.mxu0 %v728
        %v1098 = vpop.f32.mrf.mxu0
        %v1099 = vadd.f32 %v874, %v1098
        %v1100 = vpop.f32.mrf.mxu0
        %1101 = vmatprep.mubr.f32.mxu0 0.0
        %1102 = vmatmul.mubr.f32.gmra.mxu0 %v729
        %v1103 = vpop.f32.mrf.mxu0
        %v1104 = vadd.f32 %v879, %v1103
        %v1105 = vpop.f32.mrf.mxu0
        %1106 = vmatprep.mubr.f32.mxu0 0.0
        %1107 = vmatmul.mubr.f32.gmra.mxu0 %v730
        %v1108 = vpop.f32.mrf.mxu0
        %v1109 = vadd.f32 %v884, %v1108
        %v1110 = vpop.f32.mrf.mxu0
        %1111 = vmatprep.mubr.f32.mxu0 0.0
        %1112 = vmatmul.mubr.f32.gmra.mxu0 %v731
        %v1113 = vpop.f32.mrf.mxu0
        %v1114 = vadd.f32 %v889, %v1113
        %v1115 = vpop.f32.mrf.mxu0
        %1116 = vmatprep.mubr.f32.mxu0 0.0
        %1117 = vmatmul.mubr.f32.gmra.mxu0 %v732
        %v1118 = vpop.f32.mrf.mxu0
        %v1119 = vadd.f32 %v894, %v1118
        %v1120 = vpop.f32.mrf.mxu0
        %1121 = vmatprep.mubr.f32.mxu0 0.0
        %1122 = vmatmul.mubr.f32.gmra.mxu0 %v733
        %v1123 = vpop.f32.mrf.mxu0
        %v1124 = vadd.f32 %v899, %v1123
        %v1125 = vpop.f32.mrf.mxu0
        %1126 = vmatprep.mubr.f32.mxu0 0.0
        %1127 = vmatmul.mubr.f32.gmra.mxu0 %v734
        %v1128 = vpop.f32.mrf.mxu0
        %v1129 = vadd.f32 %v904, %v1128
        %v1130 = vpop.f32.mrf.mxu0
        %1131 = vmatprep.mubr.f32.mxu0 0.0
        %1132 = vmatmul.mubr.f32.gmra.mxu0 %v735
        %v1133 = vpop.f32.mrf.mxu0
        %v1134 = vadd.f32 %v909, %v1133
        %v1135 = vpop.f32.mrf.mxu0
        %1136 = vmatprep.mubr.f32.mxu0 0.0
        %1137 = vmatmul.mubr.f32.gmra.mxu0 %v736
        %v1138 = vpop.f32.mrf.mxu0
        %v1139 = vadd.f32 %v914, %v1138
        %v1140 = vpop.f32.mrf.mxu0
        %1141 = vmatprep.mubr.f32.mxu0 0.0
        %1142 = vmatmul.mubr.f32.gmra.mxu0 %v737
        %v1143 = vpop.f32.mrf.mxu0
        %v1144 = vadd.f32 %v919, %v1143
        %v1145 = vpop.f32.mrf.mxu0
        %1146 = vmatprep.mubr.f32.mxu0 0.0
        %1147 = vmatmul.mubr.f32.gmra.mxu0 %v738
        %v1148 = vpop.f32.mrf.mxu0
        %v1149 = vadd.f32 %v924, %v1148
        %v1150 = vpop.f32.mrf.mxu0
        %1151 = vmatprep.mubr.f32.mxu0 0.0
        %1152 = vmatmul.mubr.f32.gmra.mxu0 %v739
        %v1153 = vpop.f32.mrf.mxu0
        %v1154 = vadd.f32 %v929, %v1153
        %v1155 = vpop.f32.mrf.mxu0
        %1156 = vmatprep.mubr.f32.mxu0 0.0
        %1157 = vmatmul.mubr.f32.gmra.mxu0 %v740
        %v1158 = vpop.f32.mrf.mxu0
        %v1159 = vadd.f32 %v934, %v1158
        %v1160 = vpop.f32.mrf.mxu0
        %1161 = vmatprep.mubr.f32.mxu0 0.0
        %1162 = vmatmul.mubr.f32.gmra.mxu0 %v741
        %v1163 = vpop.f32.mrf.mxu0
        %v1164 = vadd.f32 %v939, %v1163
        %v1165 = vpop.f32.mrf.mxu0
        %1166 = vmatprep.mubr.f32.mxu0 0.0
        %1167 = vmatmul.mubr.f32.gmra.mxu0 %v742
        %v1168 = vpop.f32.mrf.mxu0
        %v1169 = vadd.f32 %v944, %v1168
        %v1170 = vpop.f32.mrf.mxu0
        %1171 = vmatprep.mubr.f32.mxu0 0.0
        %1172 = vmatmul.mubr.f32.gmra.mxu0 %v743
        %v1173 = vpop.f32.mrf.mxu0
        %v1174 = vadd.f32 %v949, %v1173
        %v1175 = vpop.f32.mrf.mxu0
        %1176 = vmatprep.mubr.f32.mxu0 0.0
        %1177 = vmatmul.mubr.f32.gmra.mxu0 %v744
        %v1178 = vpop.f32.mrf.mxu0
        %v1179 = vadd.f32 %v954, %v1178
        %v1180 = vpop.f32.mrf.mxu0
        %1181 = vmatprep.mubr.f32.mxu0 0.0
        %1182 = vmatmul.mubr.f32.gmra.mxu0 %v745
        %v1183 = vpop.f32.mrf.mxu0
        %v1184 = vadd.f32 %v959, %v1183
        %v1185 = vpop.f32.mrf.mxu0
        %1186 = vmatprep.mubr.f32.mxu0 0.0
        %1187 = vmatmul.mubr.f32.gmra.mxu0 %v746
        %v1188 = vpop.f32.mrf.mxu0
        %v1189 = vadd.f32 %v964, %v1188
        %v1190 = vpop.f32.mrf.mxu0
        %1191 = vmatprep.mubr.f32.mxu0 0.0
        %1192 = vmatmul.mubr.f32.gmra.mxu0 %v747
        %v1193 = vpop.f32.mrf.mxu0
        %v1194 = vadd.f32 %v969, %v1193
        %v1195 = vpop.f32.mrf.mxu0
        %1196 = vmatprep.mubr.f32.mxu0 0.0
        %1197 = vmatmul.mubr.f32.gmra.mxu0 %v748
        %v1198 = vpop.f32.mrf.mxu0
        %v1199 = vadd.f32 %v974, %v1198
        %v1200 = vpop.f32.mrf.mxu0
        %1201 = vmatprep.mubr.f32.mxu0 0.0
        %1202 = vmatmul.mubr.f32.gmra.mxu0 %v749
        %v1203 = vpop.f32.mrf.mxu0
        %v1204 = vadd.f32 %v979, %v1203
        %v1205 = vpop.f32.mrf.mxu0
        %1206 = vmatprep.mubr.f32.mxu0 0.0
        %1207 = vmatmul.mubr.f32.gmra.mxu0 %v750
        %v1208 = vpop.f32.mrf.mxu0
        %v1209 = vadd.f32 %v984, %v1208
        %v1210 = vpop.f32.mrf.mxu0
        %1211 = vmatprep.mubr.f32.mxu0 0.0
        %1212 = vmatmul.mubr.f32.gmra.mxu0 %v751
        %v1213 = vpop.f32.mrf.mxu0
        %v1214 = vadd.f32 %v989, %v1213
        %v1215 = vpop.f32.mrf.mxu0
        %1216 = vmatprep.mubr.f32.mxu0 0.0
        %1217 = vmatmul.mubr.f32.gmra.mxu0 %v752
        %v1218 = vpop.f32.mrf.mxu0
        %v1219 = vadd.f32 %v994, %v1218
        %v1220 = vpop.f32.mrf.mxu0
        %1221 = vmatprep.mubr.f32.mxu0 0.0
        %1222 = vmatmul.mubr.f32.gmra.mxu0 %v753
        %v1223 = vpop.f32.mrf.mxu0
        %v1224 = vadd.f32 %v999, %v1223
        %v1225 = vpop.f32.mrf.mxu0
        %1226 = vmatprep.mubr.f32.mxu0 0.0
        %1227 = vmatmul.mubr.f32.gmra.mxu0 %v754
        %v1228 = vpop.f32.mrf.mxu0
        %v1229 = vadd.f32 %v1004, %v1228
        %v1230 = vpop.f32.mrf.mxu0
        %1231 = vmatprep.mubr.f32.mxu0 0.0
        %1232 = vmatmul.mubr.f32.gmra.mxu0 %v755
        %v1233 = vpop.f32.mrf.mxu0
        %v1234 = vadd.f32 %v1009, %v1233
        %v1235 = vpop.f32.mrf.mxu0
        %1236 = vmatprep.mubr.f32.mxu0 0.0
        %1237 = vmatmul.mubr.f32.gmra.mxu0 %v756
        %v1238 = vpop.f32.mrf.mxu0
        %v1239 = vadd.f32 %v1014, %v1238
        %v1240 = vpop.f32.mrf.mxu0
        %1241 = vdwg.mxu0
        %v1242 = vld [vmem:[#allocation2 + $0x27] sm:$0xff]
        %v1243 = vld [vmem:[#allocation2 + $0x2f] sm:$0xff]
        %v1244 = vld [vmem:[#allocation2 + $0x37] sm:$0xff]
        %v1245 = vld [vmem:[#allocation2 + $0x3f] sm:$0xff]
        %v1246 = vld [vmem:[#allocation2 + $0x47] sm:$0xff]
        %v1247 = vld [vmem:[#allocation2 + $0x4f] sm:$0xff]
        %v1248 = vld [vmem:[#allocation2 + $0x57] sm:$0xff]
        %v1249 = vld [vmem:[#allocation2 + $0x5f] sm:$0xff]
        %v1250 = vld [vmem:[#allocation2 + $0x67] sm:$0xff]
        %v1251 = vld [vmem:[#allocation2 + $0x6f] sm:$0xff]
        %v1252 = vld [vmem:[#allocation2 + $0x77] sm:$0xff]
        %v1253 = vld [vmem:[#allocation2 + $0x7f] sm:$0xff]
        %v1254 = vld [vmem:[#allocation2 + $0x87] sm:$0xff]
        %v1255 = vld [vmem:[#allocation2 + $0x8f] sm:$0xff]
        %v1256 = vld [vmem:[#allocation2 + $0x97] sm:$0xff]
        %v1257 = vld [vmem:[#allocation2 + $0x9f] sm:$0xff]
        %v1258 = vld [vmem:[#allocation2 + $0xa7] sm:$0xff]
        %v1259 = vld [vmem:[#allocation2 + $0xaf] sm:$0xff]
        %v1260 = vld [vmem:[#allocation2 + $0xb7] sm:$0xff]
        %v1261 = vld [vmem:[#allocation2 + $0xbf] sm:$0xff]
        %v1262 = vld [vmem:[#allocation2 + $0xc7] sm:$0xff]
        %v1263 = vld [vmem:[#allocation2 + $0xcf] sm:$0xff]
        %v1264 = vld [vmem:[#allocation2 + $0xd7] sm:$0xff]
        %v1265 = vld [vmem:[#allocation2 + $0xdf] sm:$0xff]
        %v1266 = vld [vmem:[#allocation2 + $0xe7] sm:$0xff]
        %v1267 = vld [vmem:[#allocation2 + $0xef] sm:$0xff]
        %v1268 = vld [vmem:[#allocation2 + $0xf7] sm:$0xff]
        %v1269 = vld [vmem:[#allocation2 + $0xff] sm:$0xff]
        %v1270 = vld [vmem:[#allocation2 + $0x107] sm:$0xff]
        %v1271 = vld [vmem:[#allocation2 + $0x10f] sm:$0xff]
        %v1272 = vld [vmem:[#allocation2 + $0x117] sm:$0xff]
        %v1273 = vld [vmem:[#allocation2 + $0x11f] sm:$0xff]
        %s1274 = scalar_lea.vmem [#allocation6], 768
        %v1275 = vld [vmem:[%s1274] sm:$0xff]
        %v1276 = vld [vmem:[%s1274 + $0x8] sm:$0xff]
        %v1277 = vld [vmem:[%s1274 + $0x10] sm:$0xff]
        %v1278 = vld [vmem:[%s1274 + $0x18] sm:$0xff]
        %v1279 = vld [vmem:[%s1274 + $0x20] sm:$0xff]
        %v1280 = vld [vmem:[%s1274 + $0x28] sm:$0xff]
        %v1281 = vld [vmem:[%s1274 + $0x30] sm:$0xff]
        %v1282 = vld [vmem:[%s1274 + $0x38] sm:$0xff]
        %v1283 = vld [vmem:[%s1274 + $0x40] sm:$0xff]
        %v1284 = vld [vmem:[%s1274 + $0x48] sm:$0xff]
        %v1285 = vld [vmem:[%s1274 + $0x50] sm:$0xff]
        %v1286 = vld [vmem:[%s1274 + $0x58] sm:$0xff]
        %v1287 = vld [vmem:[%s1274 + $0x60] sm:$0xff]
        %v1288 = vld [vmem:[%s1274 + $0x68] sm:$0xff]
        %v1289 = vld [vmem:[%s1274 + $0x70] sm:$0xff]
        %v1290 = vld [vmem:[%s1274 + $0x78] sm:$0xff]
        %1291 = vmatprep.subr.mxu0 0.0
        %1292 = vmatpush1.msra.mxu0 %v1290
        %1293 = vmatprep.subr.mxu0 0.0
        %1294 = vmatpush1.msra.mxu0 %v1289
        %1295 = vmatprep.subr.mxu0 0.0
        %1296 = vmatpush1.msra.mxu0 %v1288
        %1297 = vmatprep.subr.mxu0 0.0
        %1298 = vmatpush1.msra.mxu0 %v1287
        %1299 = vmatprep.subr.mxu0 0.0
        %1300 = vmatpush1.msra.mxu0 %v1286
        %1301 = vmatprep.subr.mxu0 0.0
        %1302 = vmatpush1.msra.mxu0 %v1285
        %1303 = vmatprep.subr.mxu0 0.0
        %1304 = vmatpush1.msra.mxu0 %v1284
        %1305 = vmatprep.subr.mxu0 0.0
        %1306 = vmatpush1.msra.mxu0 %v1283
        %1307 = vmatprep.subr.mxu0 0.0
        %1308 = vmatpush1.msra.mxu0 %v1282
        %1309 = vmatprep.subr.mxu0 0.0
        %1310 = vmatpush1.msra.mxu0 %v1281
        %1311 = vmatprep.subr.mxu0 0.0
        %1312 = vmatpush1.msra.mxu0 %v1280
        %1313 = vmatprep.subr.mxu0 0.0
        %1314 = vmatpush1.msra.mxu0 %v1279
        %1315 = vmatprep.subr.mxu0 0.0
        %1316 = vmatpush1.msra.mxu0 %v1278
        %1317 = vmatprep.subr.mxu0 0.0
        %1318 = vmatpush1.msra.mxu0 %v1277
        %1319 = vmatprep.subr.mxu0 0.0
        %1320 = vmatpush1.msra.mxu0 %v1276
        %1321 = vmatprep.subr.mxu0 0.0
        %1322 = vmatpush1.msra.mxu0 %v1275
        %1323 = vmatprep.subr.mxu0 0.0
        %1324 = vmatpush2.msra.mxu0 0.0
        %1325 = vmatprep.subr.mxu0 0.0
        %1326 = vmatpush2.msra.mxu0 0.0
        %1327 = vmatprep.subr.mxu0 0.0
        %1328 = vmatpush2.msra.mxu0 0.0
        %1329 = vmatprep.subr.mxu0 0.0
        %1330 = vmatpush2.msra.mxu0 0.0
        %1331 = vmatprep.subr.mxu0 0.0
        %1332 = vmatpush2.msra.mxu0 0.0
        %1333 = vmatprep.subr.mxu0 0.0
        %1334 = vmatpush2.msra.mxu0 0.0
        %1335 = vmatprep.subr.mxu0 0.0
        %1336 = vmatpush2.msra.mxu0 0.0
        %1337 = vmatprep.subr.mxu0 0.0
        %1338 = vmatpush2.msra.mxu0 0.0
        %1339 = vmatprep.subr.mxu0 0.0
        %1340 = vmatpush2.msra.mxu0 0.0
        %1341 = vmatprep.subr.mxu0 0.0
        %1342 = vmatpush2.msra.mxu0 0.0
        %1343 = vmatprep.subr.mxu0 0.0
        %1344 = vmatpush2.msra.mxu0 0.0
        %1345 = vmatprep.subr.mxu0 0.0
        %1346 = vmatpush2.msra.mxu0 0.0
        %1347 = vmatprep.subr.mxu0 0.0
        %1348 = vmatpush2.msra.mxu0 0.0
        %1349 = vmatprep.subr.mxu0 0.0
        %1350 = vmatpush2.msra.mxu0 0.0
        %1351 = vmatprep.subr.mxu0 0.0
        %1352 = vmatpush2.msra.mxu0 0.0
        %1353 = vmatprep.subr.mxu0 0.0
        %1354 = vmatpush2.msra.mxu0 0.0
        %1355 = vmatprep.mubr.f32.mxu0 0.0
        %1356 = vmatmul.mubr.f32.gmra.mxu0 %v1242
        %v1357 = vpop.f32.mrf.mxu0
        %v1358 = vadd.f32 0.0, %v1357
        %v1359 = vpop.f32.mrf.mxu0
        %1360 = vmatprep.mubr.f32.mxu0 0.0
        %1361 = vmatmul.mubr.f32.gmra.mxu0 %v1243
        %v1362 = vpop.f32.mrf.mxu0
        %v1363 = vadd.f32 0.0, %v1362
        %v1364 = vpop.f32.mrf.mxu0
        %1365 = vmatprep.mubr.f32.mxu0 0.0
        %1366 = vmatmul.mubr.f32.gmra.mxu0 %v1244
        %v1367 = vpop.f32.mrf.mxu0
        %v1368 = vadd.f32 0.0, %v1367
        %v1369 = vpop.f32.mrf.mxu0
        %1370 = vmatprep.mubr.f32.mxu0 0.0
        %1371 = vmatmul.mubr.f32.gmra.mxu0 %v1245
        %v1372 = vpop.f32.mrf.mxu0
        %v1373 = vadd.f32 0.0, %v1372
        %v1374 = vpop.f32.mrf.mxu0
        %1375 = vmatprep.mubr.f32.mxu0 0.0
        %1376 = vmatmul.mubr.f32.gmra.mxu0 %v1246
        %v1377 = vpop.f32.mrf.mxu0
        %v1378 = vadd.f32 0.0, %v1377
        %v1379 = vpop.f32.mrf.mxu0
        %1380 = vmatprep.mubr.f32.mxu0 0.0
        %1381 = vmatmul.mubr.f32.gmra.mxu0 %v1247
        %v1382 = vpop.f32.mrf.mxu0
        %v1383 = vadd.f32 0.0, %v1382
        %v1384 = vpop.f32.mrf.mxu0
        %1385 = vmatprep.mubr.f32.mxu0 0.0
        %1386 = vmatmul.mubr.f32.gmra.mxu0 %v1248
        %v1387 = vpop.f32.mrf.mxu0
        %v1388 = vadd.f32 0.0, %v1387
        %v1389 = vpop.f32.mrf.mxu0
        %1390 = vmatprep.mubr.f32.mxu0 0.0
        %1391 = vmatmul.mubr.f32.gmra.mxu0 %v1249
        %v1392 = vpop.f32.mrf.mxu0
        %v1393 = vadd.f32 0.0, %v1392
        %v1394 = vpop.f32.mrf.mxu0
        %1395 = vmatprep.mubr.f32.mxu0 0.0
        %1396 = vmatmul.mubr.f32.gmra.mxu0 %v1250
        %v1397 = vpop.f32.mrf.mxu0
        %v1398 = vadd.f32 0.0, %v1397
        %v1399 = vpop.f32.mrf.mxu0
        %1400 = vmatprep.mubr.f32.mxu0 0.0
        %1401 = vmatmul.mubr.f32.gmra.mxu0 %v1251
        %v1402 = vpop.f32.mrf.mxu0
        %v1403 = vadd.f32 0.0, %v1402
        %v1404 = vpop.f32.mrf.mxu0
        %1405 = vmatprep.mubr.f32.mxu0 0.0
        %1406 = vmatmul.mubr.f32.gmra.mxu0 %v1252
        %v1407 = vpop.f32.mrf.mxu0
        %v1408 = vadd.f32 0.0, %v1407
        %v1409 = vpop.f32.mrf.mxu0
        %1410 = vmatprep.mubr.f32.mxu0 0.0
        %1411 = vmatmul.mubr.f32.gmra.mxu0 %v1253
        %v1412 = vpop.f32.mrf.mxu0
        %v1413 = vadd.f32 0.0, %v1412
        %v1414 = vpop.f32.mrf.mxu0
        %1415 = vmatprep.mubr.f32.mxu0 0.0
        %1416 = vmatmul.mubr.f32.gmra.mxu0 %v1254
        %v1417 = vpop.f32.mrf.mxu0
        %v1418 = vadd.f32 0.0, %v1417
        %v1419 = vpop.f32.mrf.mxu0
        %1420 = vmatprep.mubr.f32.mxu0 0.0
        %1421 = vmatmul.mubr.f32.gmra.mxu0 %v1255
        %v1422 = vpop.f32.mrf.mxu0
        %v1423 = vadd.f32 0.0, %v1422
        %v1424 = vpop.f32.mrf.mxu0
        %1425 = vmatprep.mubr.f32.mxu0 0.0
        %1426 = vmatmul.mubr.f32.gmra.mxu0 %v1256
        %v1427 = vpop.f32.mrf.mxu0
        %v1428 = vadd.f32 0.0, %v1427
        %v1429 = vpop.f32.mrf.mxu0
        %1430 = vmatprep.mubr.f32.mxu0 0.0
        %1431 = vmatmul.mubr.f32.gmra.mxu0 %v1257
        %v1432 = vpop.f32.mrf.mxu0
        %v1433 = vadd.f32 0.0, %v1432
        %v1434 = vpop.f32.mrf.mxu0
        %1435 = vmatprep.mubr.f32.mxu0 0.0
        %1436 = vmatmul.mubr.f32.gmra.mxu0 %v1258
        %v1437 = vpop.f32.mrf.mxu0
        %v1438 = vadd.f32 0.0, %v1437
        %v1439 = vpop.f32.mrf.mxu0
        %1440 = vmatprep.mubr.f32.mxu0 0.0
        %1441 = vmatmul.mubr.f32.gmra.mxu0 %v1259
        %v1442 = vpop.f32.mrf.mxu0
        %v1443 = vadd.f32 0.0, %v1442
        %v1444 = vpop.f32.mrf.mxu0
        %1445 = vmatprep.mubr.f32.mxu0 0.0
        %1446 = vmatmul.mubr.f32.gmra.mxu0 %v1260
        %v1447 = vpop.f32.mrf.mxu0
        %v1448 = vadd.f32 0.0, %v1447
        %v1449 = vpop.f32.mrf.mxu0
        %1450 = vmatprep.mubr.f32.mxu0 0.0
        %1451 = vmatmul.mubr.f32.gmra.mxu0 %v1261
        %v1452 = vpop.f32.mrf.mxu0
        %v1453 = vadd.f32 0.0, %v1452
        %v1454 = vpop.f32.mrf.mxu0
        %1455 = vmatprep.mubr.f32.mxu0 0.0
        %1456 = vmatmul.mubr.f32.gmra.mxu0 %v1262
        %v1457 = vpop.f32.mrf.mxu0
        %v1458 = vadd.f32 0.0, %v1457
        %v1459 = vpop.f32.mrf.mxu0
        %1460 = vmatprep.mubr.f32.mxu0 0.0
        %1461 = vmatmul.mubr.f32.gmra.mxu0 %v1263
        %v1462 = vpop.f32.mrf.mxu0
        %v1463 = vadd.f32 0.0, %v1462
        %v1464 = vpop.f32.mrf.mxu0
        %1465 = vmatprep.mubr.f32.mxu0 0.0
        %1466 = vmatmul.mubr.f32.gmra.mxu0 %v1264
        %v1467 = vpop.f32.mrf.mxu0
        %v1468 = vadd.f32 0.0, %v1467
        %v1469 = vpop.f32.mrf.mxu0
        %1470 = vmatprep.mubr.f32.mxu0 0.0
        %1471 = vmatmul.mubr.f32.gmra.mxu0 %v1265
        %v1472 = vpop.f32.mrf.mxu0
        %v1473 = vadd.f32 0.0, %v1472
        %v1474 = vpop.f32.mrf.mxu0
        %1475 = vmatprep.mubr.f32.mxu0 0.0
        %1476 = vmatmul.mubr.f32.gmra.mxu0 %v1266
        %v1477 = vpop.f32.mrf.mxu0
        %v1478 = vadd.f32 0.0, %v1477
        %v1479 = vpop.f32.mrf.mxu0
        %1480 = vmatprep.mubr.f32.mxu0 0.0
        %1481 = vmatmul.mubr.f32.gmra.mxu0 %v1267
        %v1482 = vpop.f32.mrf.mxu0
        %v1483 = vadd.f32 0.0, %v1482
        %v1484 = vpop.f32.mrf.mxu0
        %1485 = vmatprep.mubr.f32.mxu0 0.0
        %1486 = vmatmul.mubr.f32.gmra.mxu0 %v1268
        %v1487 = vpop.f32.mrf.mxu0
        %v1488 = vadd.f32 0.0, %v1487
        %v1489 = vpop.f32.mrf.mxu0
        %1490 = vmatprep.mubr.f32.mxu0 0.0
        %1491 = vmatmul.mubr.f32.gmra.mxu0 %v1269
        %v1492 = vpop.f32.mrf.mxu0
        %v1493 = vadd.f32 0.0, %v1492
        %v1494 = vpop.f32.mrf.mxu0
        %1495 = vmatprep.mubr.f32.mxu0 0.0
        %1496 = vmatmul.mubr.f32.gmra.mxu0 %v1270
        %v1497 = vpop.f32.mrf.mxu0
        %v1498 = vadd.f32 0.0, %v1497
        %v1499 = vpop.f32.mrf.mxu0
        %1500 = vmatprep.mubr.f32.mxu0 0.0
        %1501 = vmatmul.mubr.f32.gmra.mxu0 %v1271
        %v1502 = vpop.f32.mrf.mxu0
        %v1503 = vadd.f32 0.0, %v1502
        %v1504 = vpop.f32.mrf.mxu0
        %1505 = vmatprep.mubr.f32.mxu0 0.0
        %1506 = vmatmul.mubr.f32.gmra.mxu0 %v1272
        %v1507 = vpop.f32.mrf.mxu0
        %v1508 = vadd.f32 0.0, %v1507
        %v1509 = vpop.f32.mrf.mxu0
        %1510 = vmatprep.mubr.f32.mxu0 0.0
        %1511 = vmatmul.mubr.f32.gmra.mxu0 %v1273
        %v1512 = vpop.f32.mrf.mxu0
        %v1513 = vadd.f32 0.0, %v1512
        %v1514 = vpop.f32.mrf.mxu0
        %1515 = vdwg.mxu0
        %v1516 = vadd.f32 %v1084, %v1358
        %v1517 = vadd.f32 %v1089, %v1363
        %v1518 = vadd.f32 %v1094, %v1368
        %v1519 = vadd.f32 %v1099, %v1373
        %v1520 = vadd.f32 %v1104, %v1378
        %v1521 = vadd.f32 %v1109, %v1383
        %v1522 = vadd.f32 %v1114, %v1388
        %v1523 = vadd.f32 %v1119, %v1393
        %v1524 = vadd.f32 %v1124, %v1398
        %v1525 = vadd.f32 %v1129, %v1403
        %v1526 = vadd.f32 %v1134, %v1408
        %v1527 = vadd.f32 %v1139, %v1413
        %v1528 = vadd.f32 %v1144, %v1418
        %v1529 = vadd.f32 %v1149, %v1423
        %v1530 = vadd.f32 %v1154, %v1428
        %v1531 = vadd.f32 %v1159, %v1433
        %v1532 = vadd.f32 %v1164, %v1438
        %v1533 = vadd.f32 %v1169, %v1443
        %v1534 = vadd.f32 %v1174, %v1448
        %v1535 = vadd.f32 %v1179, %v1453
        %v1536 = vadd.f32 %v1184, %v1458
        %v1537 = vadd.f32 %v1189, %v1463
        %v1538 = vadd.f32 %v1194, %v1468
        %v1539 = vadd.f32 %v1199, %v1473
        %v1540 = vadd.f32 %v1204, %v1478
        %v1541 = vadd.f32 %v1209, %v1483
        %v1542 = vadd.f32 %v1214, %v1488
        %v1543 = vadd.f32 %v1219, %v1493
        %v1544 = vadd.f32 %v1224, %v1498
        %v1545 = vadd.f32 %v1229, %v1503
        %v1546 = vadd.f32 %v1234, %v1508
        %v1547 = vadd.f32 %v1239, %v1513
        %v1548 = vld [vmem:[%s7] sm:$0xff]
        %v1549 = vld [vmem:[%s7 + $0x8] sm:$0xff]
        %v1550 = vld [vmem:[%s7 + $0x10] sm:$0xff]
        %v1551 = vld [vmem:[%s7 + $0x18] sm:$0xff]
        %v1552 = vld [vmem:[%s7 + $0x20] sm:$0xff]
        %v1553 = vld [vmem:[%s7 + $0x28] sm:$0xff]
        %v1554 = vld [vmem:[%s7 + $0x30] sm:$0xff]
        %v1555 = vld [vmem:[%s7 + $0x38] sm:$0xff]
        %v1556 = vld [vmem:[%s7 + $0x40] sm:$0xff]
        %v1557 = vld [vmem:[%s7 + $0x48] sm:$0xff]
        %v1558 = vld [vmem:[%s7 + $0x50] sm:$0xff]
        %v1559 = vld [vmem:[%s7 + $0x58] sm:$0xff]
        %v1560 = vld [vmem:[%s7 + $0x60] sm:$0xff]
        %v1561 = vld [vmem:[%s7 + $0x68] sm:$0xff]
        %v1562 = vld [vmem:[%s7 + $0x70] sm:$0xff]
        %v1563 = vld [vmem:[%s7 + $0x78] sm:$0xff]
        %v1564 = vld [vmem:[%s7 + $0x80] sm:$0xff]
        %v1565 = vld [vmem:[%s7 + $0x88] sm:$0xff]
        %v1566 = vld [vmem:[%s7 + $0x90] sm:$0xff]
        %v1567 = vld [vmem:[%s7 + $0x98] sm:$0xff]
        %v1568 = vld [vmem:[%s7 + $0xa0] sm:$0xff]
        %v1569 = vld [vmem:[%s7 + $0xa8] sm:$0xff]
        %v1570 = vld [vmem:[%s7 + $0xb0] sm:$0xff]
        %v1571 = vld [vmem:[%s7 + $0xb8] sm:$0xff]
        %v1572 = vld [vmem:[%s7 + $0xc0] sm:$0xff]
        %v1573 = vld [vmem:[%s7 + $0xc8] sm:$0xff]
        %v1574 = vld [vmem:[%s7 + $0xd0] sm:$0xff]
        %v1575 = vld [vmem:[%s7 + $0xd8] sm:$0xff]
        %v1576 = vld [vmem:[%s7 + $0xe0] sm:$0xff]
        %v1577 = vld [vmem:[%s7 + $0xe8] sm:$0xff]
        %v1578 = vld [vmem:[%s7 + $0xf0] sm:$0xff]
        %v1579 = vld [vmem:[%s7 + $0xf8] sm:$0xff]
        %1581 = vset.pattern.permute.xlu0 0
        %1582 = vperm.xlu0 %1581, %v1548
        %v1583 = vpop.permute.xlu0 %1582
        %1586 = vset.pattern.permute.xlu0 0
        %1587 = vperm.xlu0 %1586, %v1549
        %v1588 = vpop.permute.xlu0 %1587
        %1591 = vset.pattern.permute.xlu0 0
        %1592 = vperm.xlu0 %1591, %v1550
        %v1593 = vpop.permute.xlu0 %1592
        %1596 = vset.pattern.permute.xlu0 0
        %1597 = vperm.xlu0 %1596, %v1551
        %v1598 = vpop.permute.xlu0 %1597
        %1601 = vset.pattern.permute.xlu0 0
        %1602 = vperm.xlu0 %1601, %v1552
        %v1603 = vpop.permute.xlu0 %1602
        %1606 = vset.pattern.permute.xlu0 0
        %1607 = vperm.xlu0 %1606, %v1553
        %v1608 = vpop.permute.xlu0 %1607
        %1611 = vset.pattern.permute.xlu0 0
        %1612 = vperm.xlu0 %1611, %v1554
        %v1613 = vpop.permute.xlu0 %1612
        %1616 = vset.pattern.permute.xlu0 0
        %1617 = vperm.xlu0 %1616, %v1555
        %v1618 = vpop.permute.xlu0 %1617
        %1621 = vset.pattern.permute.xlu0 0
        %1622 = vperm.xlu0 %1621, %v1556
        %v1623 = vpop.permute.xlu0 %1622
        %1626 = vset.pattern.permute.xlu0 0
        %1627 = vperm.xlu0 %1626, %v1557
        %v1628 = vpop.permute.xlu0 %1627
        %1631 = vset.pattern.permute.xlu0 0
        %1632 = vperm.xlu0 %1631, %v1558
        %v1633 = vpop.permute.xlu0 %1632
        %1636 = vset.pattern.permute.xlu0 0
        %1637 = vperm.xlu0 %1636, %v1559
        %v1638 = vpop.permute.xlu0 %1637
        %1641 = vset.pattern.permute.xlu0 0
        %1642 = vperm.xlu0 %1641, %v1560
        %v1643 = vpop.permute.xlu0 %1642
        %1646 = vset.pattern.permute.xlu0 0
        %1647 = vperm.xlu0 %1646, %v1561
        %v1648 = vpop.permute.xlu0 %1647
        %1651 = vset.pattern.permute.xlu0 0
        %1652 = vperm.xlu0 %1651, %v1562
        %v1653 = vpop.permute.xlu0 %1652
        %1656 = vset.pattern.permute.xlu0 0
        %1657 = vperm.xlu0 %1656, %v1563
        %v1658 = vpop.permute.xlu0 %1657
        %1661 = vset.pattern.permute.xlu0 0
        %1662 = vperm.xlu0 %1661, %v1564
        %v1663 = vpop.permute.xlu0 %1662
        %1666 = vset.pattern.permute.xlu0 0
        %1667 = vperm.xlu0 %1666, %v1565
        %v1668 = vpop.permute.xlu0 %1667
        %1671 = vset.pattern.permute.xlu0 0
        %1672 = vperm.xlu0 %1671, %v1566
        %v1673 = vpop.permute.xlu0 %1672
        %1676 = vset.pattern.permute.xlu0 0
        %1677 = vperm.xlu0 %1676, %v1567
        %v1678 = vpop.permute.xlu0 %1677
        %1681 = vset.pattern.permute.xlu0 0
        %1682 = vperm.xlu0 %1681, %v1568
        %v1683 = vpop.permute.xlu0 %1682
        %1686 = vset.pattern.permute.xlu0 0
        %1687 = vperm.xlu0 %1686, %v1569
        %v1688 = vpop.permute.xlu0 %1687
        %1691 = vset.pattern.permute.xlu0 0
        %1692 = vperm.xlu0 %1691, %v1570
        %v1693 = vpop.permute.xlu0 %1692
        %1696 = vset.pattern.permute.xlu0 0
        %1697 = vperm.xlu0 %1696, %v1571
        %v1698 = vpop.permute.xlu0 %1697
        %1701 = vset.pattern.permute.xlu0 0
        %1702 = vperm.xlu0 %1701, %v1572
        %v1703 = vpop.permute.xlu0 %1702
        %1706 = vset.pattern.permute.xlu0 0
        %1707 = vperm.xlu0 %1706, %v1573
        %v1708 = vpop.permute.xlu0 %1707
        %1711 = vset.pattern.permute.xlu0 0
        %1712 = vperm.xlu0 %1711, %v1574
        %v1713 = vpop.permute.xlu0 %1712
        %1716 = vset.pattern.permute.xlu0 0
        %1717 = vperm.xlu0 %1716, %v1575
        %v1718 = vpop.permute.xlu0 %1717
        %1721 = vset.pattern.permute.xlu0 0
        %1722 = vperm.xlu0 %1721, %v1576
        %v1723 = vpop.permute.xlu0 %1722
        %1726 = vset.pattern.permute.xlu0 0
        %1727 = vperm.xlu0 %1726, %v1577
        %v1728 = vpop.permute.xlu0 %1727
        %1731 = vset.pattern.permute.xlu0 0
        %1732 = vperm.xlu0 %1731, %v1578
        %v1733 = vpop.permute.xlu0 %1732
        %1736 = vset.pattern.permute.xlu0 0
        %1737 = vperm.xlu0 %1736, %v1579
        %v1738 = vpop.permute.xlu0 %1737
        %v1740 = vmul.f32 %v1516, %v1583
        %v1741 = vmul.f32 %v1517, %v1588
        %v1742 = vmul.f32 %v1518, %v1593
        %v1743 = vmul.f32 %v1519, %v1598
        %v1744 = vmul.f32 %v1520, %v1603
        %v1745 = vmul.f32 %v1521, %v1608
        %v1746 = vmul.f32 %v1522, %v1613
        %v1747 = vmul.f32 %v1523, %v1618
        %v1748 = vmul.f32 %v1524, %v1623
        %v1749 = vmul.f32 %v1525, %v1628
        %v1750 = vmul.f32 %v1526, %v1633
        %v1751 = vmul.f32 %v1527, %v1638
        %v1752 = vmul.f32 %v1528, %v1643
        %v1753 = vmul.f32 %v1529, %v1648
        %v1754 = vmul.f32 %v1530, %v1653
        %v1755 = vmul.f32 %v1531, %v1658
        %v1756 = vmul.f32 %v1532, %v1663
        %v1757 = vmul.f32 %v1533, %v1668
        %v1758 = vmul.f32 %v1534, %v1673
        %v1759 = vmul.f32 %v1535, %v1678
        %v1760 = vmul.f32 %v1536, %v1683
        %v1761 = vmul.f32 %v1537, %v1688
        %v1762 = vmul.f32 %v1538, %v1693
        %v1763 = vmul.f32 %v1539, %v1698
        %v1764 = vmul.f32 %v1540, %v1703
        %v1765 = vmul.f32 %v1541, %v1708
        %v1766 = vmul.f32 %v1542, %v1713
        %v1767 = vmul.f32 %v1543, %v1718
        %v1768 = vmul.f32 %v1544, %v1723
        %v1769 = vmul.f32 %v1545, %v1728
        %v1770 = vmul.f32 %v1546, %v1733
        %v1771 = vmul.f32 %v1547, %v1738
        %v1772 = vld [vmem:[#allocation2 + $0x8] sm:$0xff]
        %v1773 = vld [vmem:[#allocation2 + $0x10] sm:$0xff]
        %v1774 = vld [vmem:[#allocation2 + $0x18] sm:$0xff]
        %v1775 = vld [vmem:[#allocation2 + $0x20] sm:$0xff]
        %v1776 = vld [vmem:[#allocation2 + $0x28] sm:$0xff]
        %v1777 = vld [vmem:[#allocation2 + $0x30] sm:$0xff]
        %v1778 = vld [vmem:[#allocation2 + $0x38] sm:$0xff]
        %v1779 = vld [vmem:[#allocation2 + $0x40] sm:$0xff]
        %v1780 = vld [vmem:[#allocation2 + $0x48] sm:$0xff]
        %v1781 = vld [vmem:[#allocation2 + $0x50] sm:$0xff]
        %v1782 = vld [vmem:[#allocation2 + $0x58] sm:$0xff]
        %v1783 = vld [vmem:[#allocation2 + $0x60] sm:$0xff]
        %v1784 = vld [vmem:[#allocation2 + $0x68] sm:$0xff]
        %v1785 = vld [vmem:[#allocation2 + $0x70] sm:$0xff]
        %v1786 = vld [vmem:[#allocation2 + $0x78] sm:$0xff]
        %v1787 = vld [vmem:[#allocation2 + $0x80] sm:$0xff]
        %v1788 = vld [vmem:[#allocation2 + $0x88] sm:$0xff]
        %v1789 = vld [vmem:[#allocation2 + $0x90] sm:$0xff]
        %v1790 = vld [vmem:[#allocation2 + $0x98] sm:$0xff]
        %v1791 = vld [vmem:[#allocation2 + $0xa0] sm:$0xff]
        %v1792 = vld [vmem:[#allocation2 + $0xa8] sm:$0xff]
        %v1793 = vld [vmem:[#allocation2 + $0xb0] sm:$0xff]
        %v1794 = vld [vmem:[#allocation2 + $0xb8] sm:$0xff]
        %v1795 = vld [vmem:[#allocation2 + $0xc0] sm:$0xff]
        %v1796 = vld [vmem:[#allocation2 + $0xc8] sm:$0xff]
        %v1797 = vld [vmem:[#allocation2 + $0xd0] sm:$0xff]
        %v1798 = vld [vmem:[#allocation2 + $0xd8] sm:$0xff]
        %v1799 = vld [vmem:[#allocation2 + $0xe0] sm:$0xff]
        %v1800 = vld [vmem:[#allocation2 + $0xe8] sm:$0xff]
        %v1801 = vld [vmem:[#allocation2 + $0xf0] sm:$0xff]
        %v1802 = vld [vmem:[#allocation2 + $0xf8] sm:$0xff]
        %v1803 = vld [vmem:[#allocation2 + $0x100] sm:$0xff]
        %s1804 = scalar_lea.vmem [#allocation6], 128
        %v1805 = vld [vmem:[%s1804] sm:$0xff]
        %v1806 = vld [vmem:[%s1804 + $0x8] sm:$0xff]
        %v1807 = vld [vmem:[%s1804 + $0x10] sm:$0xff]
        %v1808 = vld [vmem:[%s1804 + $0x18] sm:$0xff]
        %v1809 = vld [vmem:[%s1804 + $0x20] sm:$0xff]
        %v1810 = vld [vmem:[%s1804 + $0x28] sm:$0xff]
        %v1811 = vld [vmem:[%s1804 + $0x30] sm:$0xff]
        %v1812 = vld [vmem:[%s1804 + $0x38] sm:$0xff]
        %v1813 = vld [vmem:[%s1804 + $0x40] sm:$0xff]
        %v1814 = vld [vmem:[%s1804 + $0x48] sm:$0xff]
        %v1815 = vld [vmem:[%s1804 + $0x50] sm:$0xff]
        %v1816 = vld [vmem:[%s1804 + $0x58] sm:$0xff]
        %v1817 = vld [vmem:[%s1804 + $0x60] sm:$0xff]
        %v1818 = vld [vmem:[%s1804 + $0x68] sm:$0xff]
        %v1819 = vld [vmem:[%s1804 + $0x70] sm:$0xff]
        %v1820 = vld [vmem:[%s1804 + $0x78] sm:$0xff]
        %v1821 = vld [vmem:[#allocation2 + $0x108] sm:$0xff]
        %v1822 = vld [vmem:[#allocation2 + $0x110] sm:$0xff]
        %s1823 = scalar_lea.vmem [#allocation6], 512
        %v1824 = vld [vmem:[%s1823] sm:$0xff]
        %v1825 = vld [vmem:[%s1823 + $0x8] sm:$0xff]
        %v1826 = vld [vmem:[%s1823 + $0x10] sm:$0xff]
        %v1827 = vld [vmem:[%s1823 + $0x18] sm:$0xff]
        %v1828 = vld [vmem:[%s1823 + $0x20] sm:$0xff]
        %v1829 = vld [vmem:[%s1823 + $0x28] sm:$0xff]
        %v1830 = vld [vmem:[%s1823 + $0x30] sm:$0xff]
        %v1831 = vld [vmem:[%s1823 + $0x38] sm:$0xff]
        %v1832 = vld [vmem:[%s1823 + $0x40] sm:$0xff]
        %v1833 = vld [vmem:[%s1823 + $0x48] sm:$0xff]
        %v1834 = vld [vmem:[%s1823 + $0x50] sm:$0xff]
        %v1835 = vld [vmem:[%s1823 + $0x58] sm:$0xff]
        %v1836 = vld [vmem:[%s1823 + $0x60] sm:$0xff]
        %v1837 = vld [vmem:[%s1823 + $0x68] sm:$0xff]
        %v1838 = vld [vmem:[%s1823 + $0x70] sm:$0xff]
        %v1839 = vld [vmem:[%s1823 + $0x78] sm:$0xff]
        %1840 = vmatprep.subr.mxu0 0.0
        %1841 = vmatpush1.msra.mxu0 %v1839
        %1842 = vmatprep.subr.mxu0 0.0
        %1843 = vmatpush1.msra.mxu0 %v1838
        %1844 = vmatprep.subr.mxu0 0.0
        %1845 = vmatpush1.msra.mxu0 %v1837
        %1846 = vmatprep.subr.mxu0 0.0
        %1847 = vmatpush1.msra.mxu0 %v1836
        %1848 = vmatprep.subr.mxu0 0.0
        %1849 = vmatpush1.msra.mxu0 %v1835
        %1850 = vmatprep.subr.mxu0 0.0
        %1851 = vmatpush1.msra.mxu0 %v1834
        %1852 = vmatprep.subr.mxu0 0.0
        %1853 = vmatpush1.msra.mxu0 %v1833
        %1854 = vmatprep.subr.mxu0 0.0
        %1855 = vmatpush1.msra.mxu0 %v1832
        %1856 = vmatprep.subr.mxu0 0.0
        %1857 = vmatpush1.msra.mxu0 %v1831
        %1858 = vmatprep.subr.mxu0 0.0
        %1859 = vmatpush1.msra.mxu0 %v1830
        %1860 = vmatprep.subr.mxu0 0.0
        %1861 = vmatpush1.msra.mxu0 %v1829
        %1862 = vmatprep.subr.mxu0 0.0
        %1863 = vmatpush1.msra.mxu0 %v1828
        %1864 = vmatprep.subr.mxu0 0.0
        %1865 = vmatpush1.msra.mxu0 %v1827
        %1866 = vmatprep.subr.mxu0 0.0
        %1867 = vmatpush1.msra.mxu0 %v1826
        %1868 = vmatprep.subr.mxu0 0.0
        %1869 = vmatpush1.msra.mxu0 %v1825
        %1870 = vmatprep.subr.mxu0 0.0
        %1871 = vmatpush1.msra.mxu0 %v1824
        %1872 = vmatprep.subr.mxu0 0.0
        %1873 = vmatpush2.msra.mxu0 0.0
        %1874 = vmatprep.subr.mxu0 0.0
        %1875 = vmatpush2.msra.mxu0 0.0
        %1876 = vmatprep.subr.mxu0 0.0
        %1877 = vmatpush2.msra.mxu0 0.0
        %1878 = vmatprep.subr.mxu0 0.0
        %1879 = vmatpush2.msra.mxu0 0.0
        %1880 = vmatprep.subr.mxu0 0.0
        %1881 = vmatpush2.msra.mxu0 0.0
        %1882 = vmatprep.subr.mxu0 0.0
        %1883 = vmatpush2.msra.mxu0 0.0
        %1884 = vmatprep.subr.mxu0 0.0
        %1885 = vmatpush2.msra.mxu0 0.0
        %1886 = vmatprep.subr.mxu0 0.0
        %1887 = vmatpush2.msra.mxu0 0.0
        %1888 = vmatprep.subr.mxu0 0.0
        %1889 = vmatpush2.msra.mxu0 0.0
        %1890 = vmatprep.subr.mxu0 0.0
        %1891 = vmatpush2.msra.mxu0 0.0
        %1892 = vmatprep.subr.mxu0 0.0
        %1893 = vmatpush2.msra.mxu0 0.0
        %1894 = vmatprep.subr.mxu0 0.0
        %1895 = vmatpush2.msra.mxu0 0.0
        %1896 = vmatprep.subr.mxu0 0.0
        %1897 = vmatpush2.msra.mxu0 0.0
        %1898 = vmatprep.subr.mxu0 0.0
        %1899 = vmatpush2.msra.mxu0 0.0
        %1900 = vmatprep.subr.mxu0 0.0
        %1901 = vmatpush2.msra.mxu0 0.0
        %1902 = vmatprep.subr.mxu0 0.0
        %1903 = vmatpush2.msra.mxu0 0.0
        %1904 = vmatprep.mubr.f32.mxu0 0.0
        %1905 = vmatmul.mubr.f32.gmra.mxu0 %v1774
        %v1906 = vpop.f32.mrf.mxu0
        %v1907 = vadd.f32 0.0, %v1906
        %v1908 = vpop.f32.mrf.mxu0
        %1909 = vmatprep.mubr.f32.mxu0 0.0
        %1910 = vmatmul.mubr.f32.gmra.mxu0 %v1775
        %v1911 = vpop.f32.mrf.mxu0
        %v1912 = vadd.f32 0.0, %v1911
        %v1913 = vpop.f32.mrf.mxu0
        %1914 = vmatprep.mubr.f32.mxu0 0.0
        %1915 = vmatmul.mubr.f32.gmra.mxu0 %v1776
        %v1916 = vpop.f32.mrf.mxu0
        %v1917 = vadd.f32 0.0, %v1916
        %v1918 = vpop.f32.mrf.mxu0
        %1919 = vmatprep.mubr.f32.mxu0 0.0
        %1920 = vmatmul.mubr.f32.gmra.mxu0 %v1777
        %v1921 = vpop.f32.mrf.mxu0
        %v1922 = vadd.f32 0.0, %v1921
        %v1923 = vpop.f32.mrf.mxu0
        %1924 = vmatprep.mubr.f32.mxu0 0.0
        %1925 = vmatmul.mubr.f32.gmra.mxu0 %v1778
        %v1926 = vpop.f32.mrf.mxu0
        %v1927 = vadd.f32 0.0, %v1926
        %v1928 = vpop.f32.mrf.mxu0
        %1929 = vmatprep.mubr.f32.mxu0 0.0
        %1930 = vmatmul.mubr.f32.gmra.mxu0 %v1779
        %v1931 = vpop.f32.mrf.mxu0
        %v1932 = vadd.f32 0.0, %v1931
        %v1933 = vpop.f32.mrf.mxu0
        %1934 = vmatprep.mubr.f32.mxu0 0.0
        %1935 = vmatmul.mubr.f32.gmra.mxu0 %v1780
        %v1936 = vpop.f32.mrf.mxu0
        %v1937 = vadd.f32 0.0, %v1936
        %v1938 = vpop.f32.mrf.mxu0
        %1939 = vmatprep.mubr.f32.mxu0 0.0
        %1940 = vmatmul.mubr.f32.gmra.mxu0 %v1781
        %v1941 = vpop.f32.mrf.mxu0
        %v1942 = vadd.f32 0.0, %v1941
        %v1943 = vpop.f32.mrf.mxu0
        %1944 = vmatprep.mubr.f32.mxu0 0.0
        %1945 = vmatmul.mubr.f32.gmra.mxu0 %v1782
        %v1946 = vpop.f32.mrf.mxu0
        %v1947 = vadd.f32 0.0, %v1946
        %v1948 = vpop.f32.mrf.mxu0
        %1949 = vmatprep.mubr.f32.mxu0 0.0
        %1950 = vmatmul.mubr.f32.gmra.mxu0 %v1783
        %v1951 = vpop.f32.mrf.mxu0
        %v1952 = vadd.f32 0.0, %v1951
        %v1953 = vpop.f32.mrf.mxu0
        %1954 = vmatprep.mubr.f32.mxu0 0.0
        %1955 = vmatmul.mubr.f32.gmra.mxu0 %v1784
        %v1956 = vpop.f32.mrf.mxu0
        %v1957 = vadd.f32 0.0, %v1956
        %v1958 = vpop.f32.mrf.mxu0
        %1959 = vmatprep.mubr.f32.mxu0 0.0
        %1960 = vmatmul.mubr.f32.gmra.mxu0 %v1785
        %v1961 = vpop.f32.mrf.mxu0
        %v1962 = vadd.f32 0.0, %v1961
        %v1963 = vpop.f32.mrf.mxu0
        %1964 = vmatprep.mubr.f32.mxu0 0.0
        %1965 = vmatmul.mubr.f32.gmra.mxu0 %v1786
        %v1966 = vpop.f32.mrf.mxu0
        %v1967 = vadd.f32 0.0, %v1966
        %v1968 = vpop.f32.mrf.mxu0
        %1969 = vmatprep.mubr.f32.mxu0 0.0
        %1970 = vmatmul.mubr.f32.gmra.mxu0 %v1787
        %v1971 = vpop.f32.mrf.mxu0
        %v1972 = vadd.f32 0.0, %v1971
        %v1973 = vpop.f32.mrf.mxu0
        %1974 = vmatprep.mubr.f32.mxu0 0.0
        %1975 = vmatmul.mubr.f32.gmra.mxu0 %v1788
        %v1976 = vpop.f32.mrf.mxu0
        %v1977 = vadd.f32 0.0, %v1976
        %v1978 = vpop.f32.mrf.mxu0
        %1979 = vmatprep.mubr.f32.mxu0 0.0
        %1980 = vmatmul.mubr.f32.gmra.mxu0 %v1789
        %v1981 = vpop.f32.mrf.mxu0
        %v1982 = vadd.f32 0.0, %v1981
        %v1983 = vpop.f32.mrf.mxu0
        %1984 = vmatprep.mubr.f32.mxu0 0.0
        %1985 = vmatmul.mubr.f32.gmra.mxu0 %v1790
        %v1986 = vpop.f32.mrf.mxu0
        %v1987 = vadd.f32 0.0, %v1986
        %v1988 = vpop.f32.mrf.mxu0
        %1989 = vmatprep.mubr.f32.mxu0 0.0
        %1990 = vmatmul.mubr.f32.gmra.mxu0 %v1791
        %v1991 = vpop.f32.mrf.mxu0
        %v1992 = vadd.f32 0.0, %v1991
        %v1993 = vpop.f32.mrf.mxu0
        %1994 = vmatprep.mubr.f32.mxu0 0.0
        %1995 = vmatmul.mubr.f32.gmra.mxu0 %v1792
        %v1996 = vpop.f32.mrf.mxu0
        %v1997 = vadd.f32 0.0, %v1996
        %v1998 = vpop.f32.mrf.mxu0
        %1999 = vmatprep.mubr.f32.mxu0 0.0
        %2000 = vmatmul.mubr.f32.gmra.mxu0 %v1793
        %v2001 = vpop.f32.mrf.mxu0
        %v2002 = vadd.f32 0.0, %v2001
        %v2003 = vpop.f32.mrf.mxu0
        %2004 = vmatprep.mubr.f32.mxu0 0.0
        %2005 = vmatmul.mubr.f32.gmra.mxu0 %v1794
        %v2006 = vpop.f32.mrf.mxu0
        %v2007 = vadd.f32 0.0, %v2006
        %v2008 = vpop.f32.mrf.mxu0
        %2009 = vmatprep.mubr.f32.mxu0 0.0
        %2010 = vmatmul.mubr.f32.gmra.mxu0 %v1795
        %v2011 = vpop.f32.mrf.mxu0
        %v2012 = vadd.f32 0.0, %v2011
        %v2013 = vpop.f32.mrf.mxu0
        %2014 = vmatprep.mubr.f32.mxu0 0.0
        %2015 = vmatmul.mubr.f32.gmra.mxu0 %v1796
        %v2016 = vpop.f32.mrf.mxu0
        %v2017 = vadd.f32 0.0, %v2016
        %v2018 = vpop.f32.mrf.mxu0
        %2019 = vmatprep.mubr.f32.mxu0 0.0
        %2020 = vmatmul.mubr.f32.gmra.mxu0 %v1797
        %v2021 = vpop.f32.mrf.mxu0
        %v2022 = vadd.f32 0.0, %v2021
        %v2023 = vpop.f32.mrf.mxu0
        %2024 = vmatprep.mubr.f32.mxu0 0.0
        %2025 = vmatmul.mubr.f32.gmra.mxu0 %v1798
        %v2026 = vpop.f32.mrf.mxu0
        %v2027 = vadd.f32 0.0, %v2026
        %v2028 = vpop.f32.mrf.mxu0
        %2029 = vmatprep.mubr.f32.mxu0 0.0
        %2030 = vmatmul.mubr.f32.gmra.mxu0 %v1799
        %v2031 = vpop.f32.mrf.mxu0
        %v2032 = vadd.f32 0.0, %v2031
        %v2033 = vpop.f32.mrf.mxu0
        %2034 = vmatprep.mubr.f32.mxu0 0.0
        %2035 = vmatmul.mubr.f32.gmra.mxu0 %v1800
        %v2036 = vpop.f32.mrf.mxu0
        %v2037 = vadd.f32 0.0, %v2036
        %v2038 = vpop.f32.mrf.mxu0
        %2039 = vmatprep.mubr.f32.mxu0 0.0
        %2040 = vmatmul.mubr.f32.gmra.mxu0 %v1801
        %v2041 = vpop.f32.mrf.mxu0
        %v2042 = vadd.f32 0.0, %v2041
        %v2043 = vpop.f32.mrf.mxu0
        %2044 = vmatprep.mubr.f32.mxu0 0.0
        %2045 = vmatmul.mubr.f32.gmra.mxu0 %v1802
        %v2046 = vpop.f32.mrf.mxu0
        %v2047 = vadd.f32 0.0, %v2046
        %v2048 = vpop.f32.mrf.mxu0
        %2049 = vmatprep.mubr.f32.mxu0 0.0
        %2050 = vmatmul.mubr.f32.gmra.mxu0 %v1803
        %v2051 = vpop.f32.mrf.mxu0
        %v2052 = vadd.f32 0.0, %v2051
        %v2053 = vpop.f32.mrf.mxu0
        %2054 = vmatprep.mubr.f32.mxu0 0.0
        %2055 = vmatmul.mubr.f32.gmra.mxu0 %v1821
        %v2056 = vpop.f32.mrf.mxu0
        %v2057 = vadd.f32 0.0, %v2056
        %v2058 = vpop.f32.mrf.mxu0
        %2059 = vmatprep.mubr.f32.mxu0 0.0
        %2060 = vmatmul.mubr.f32.gmra.mxu0 %v1822
        %v2061 = vpop.f32.mrf.mxu0
        %v2062 = vadd.f32 0.0, %v2061
        %v2063 = vpop.f32.mrf.mxu0
        %2064 = vdwg.mxu0
        %2065 = vmatprep.subr.mxu0 0.0
        %2066 = vmatpush1.msra.mxu0 %v1820
        %2067 = vmatprep.subr.mxu0 0.0
        %2068 = vmatpush1.msra.mxu0 %v1819
        %2069 = vmatprep.subr.mxu0 0.0
        %2070 = vmatpush1.msra.mxu0 %v1818
        %2071 = vmatprep.subr.mxu0 0.0
        %2072 = vmatpush1.msra.mxu0 %v1817
        %2073 = vmatprep.subr.mxu0 0.0
        %2074 = vmatpush1.msra.mxu0 %v1816
        %2075 = vmatprep.subr.mxu0 0.0
        %2076 = vmatpush1.msra.mxu0 %v1815
        %2077 = vmatprep.subr.mxu0 0.0
        %2078 = vmatpush1.msra.mxu0 %v1814
        %2079 = vmatprep.subr.mxu0 0.0
        %2080 = vmatpush1.msra.mxu0 %v1813
        %2081 = vmatprep.subr.mxu0 0.0
        %2082 = vmatpush1.msra.mxu0 %v1812
        %2083 = vmatprep.subr.mxu0 0.0
        %2084 = vmatpush1.msra.mxu0 %v1811
        %2085 = vmatprep.subr.mxu0 0.0
        %2086 = vmatpush1.msra.mxu0 %v1810
        %2087 = vmatprep.subr.mxu0 0.0
        %2088 = vmatpush1.msra.mxu0 %v1809
        %2089 = vmatprep.subr.mxu0 0.0
        %2090 = vmatpush1.msra.mxu0 %v1808
        %2091 = vmatprep.subr.mxu0 0.0
        %2092 = vmatpush1.msra.mxu0 %v1807
        %2093 = vmatprep.subr.mxu0 0.0
        %2094 = vmatpush1.msra.mxu0 %v1806
        %2095 = vmatprep.subr.mxu0 0.0
        %2096 = vmatpush1.msra.mxu0 %v1805
        %2097 = vmatprep.subr.mxu0 0.0
        %2098 = vmatpush2.msra.mxu0 0.0
        %2099 = vmatprep.subr.mxu0 0.0
        %2100 = vmatpush2.msra.mxu0 0.0
        %2101 = vmatprep.subr.mxu0 0.0
        %2102 = vmatpush2.msra.mxu0 0.0
        %2103 = vmatprep.subr.mxu0 0.0
        %2104 = vmatpush2.msra.mxu0 0.0
        %2105 = vmatprep.subr.mxu0 0.0
        %2106 = vmatpush2.msra.mxu0 0.0
        %2107 = vmatprep.subr.mxu0 0.0
        %2108 = vmatpush2.msra.mxu0 0.0
        %2109 = vmatprep.subr.mxu0 0.0
        %2110 = vmatpush2.msra.mxu0 0.0
        %2111 = vmatprep.subr.mxu0 0.0
        %2112 = vmatpush2.msra.mxu0 0.0
        %2113 = vmatprep.subr.mxu0 0.0
        %2114 = vmatpush2.msra.mxu0 0.0
        %2115 = vmatprep.subr.mxu0 0.0
        %2116 = vmatpush2.msra.mxu0 0.0
        %2117 = vmatprep.subr.mxu0 0.0
        %2118 = vmatpush2.msra.mxu0 0.0
        %2119 = vmatprep.subr.mxu0 0.0
        %2120 = vmatpush2.msra.mxu0 0.0
        %2121 = vmatprep.subr.mxu0 0.0
        %2122 = vmatpush2.msra.mxu0 0.0
        %2123 = vmatprep.subr.mxu0 0.0
        %2124 = vmatpush2.msra.mxu0 0.0
        %2125 = vmatprep.subr.mxu0 0.0
        %2126 = vmatpush2.msra.mxu0 0.0
        %2127 = vmatprep.subr.mxu0 0.0
        %2128 = vmatpush2.msra.mxu0 0.0
        %2129 = vmatprep.mubr.f32.mxu0 0.0
        %2130 = vmatmul.mubr.f32.gmra.mxu0 %v1772
        %v2131 = vpop.f32.mrf.mxu0
        %v2132 = vadd.f32 %v1907, %v2131
        %v2133 = vpop.f32.mrf.mxu0
        %2134 = vmatprep.mubr.f32.mxu0 0.0
        %2135 = vmatmul.mubr.f32.gmra.mxu0 %v1773
        %v2136 = vpop.f32.mrf.mxu0
        %v2137 = vadd.f32 %v1912, %v2136
        %v2138 = vpop.f32.mrf.mxu0
        %2139 = vmatprep.mubr.f32.mxu0 0.0
        %2140 = vmatmul.mubr.f32.gmra.mxu0 %v1774
        %v2141 = vpop.f32.mrf.mxu0
        %v2142 = vadd.f32 %v1917, %v2141
        %v2143 = vpop.f32.mrf.mxu0
        %2144 = vmatprep.mubr.f32.mxu0 0.0
        %2145 = vmatmul.mubr.f32.gmra.mxu0 %v1775
        %v2146 = vpop.f32.mrf.mxu0
        %v2147 = vadd.f32 %v1922, %v2146
        %v2148 = vpop.f32.mrf.mxu0
        %2149 = vmatprep.mubr.f32.mxu0 0.0
        %2150 = vmatmul.mubr.f32.gmra.mxu0 %v1776
        %v2151 = vpop.f32.mrf.mxu0
        %v2152 = vadd.f32 %v1927, %v2151
        %v2153 = vpop.f32.mrf.mxu0
        %2154 = vmatprep.mubr.f32.mxu0 0.0
        %2155 = vmatmul.mubr.f32.gmra.mxu0 %v1777
        %v2156 = vpop.f32.mrf.mxu0
        %v2157 = vadd.f32 %v1932, %v2156
        %v2158 = vpop.f32.mrf.mxu0
        %2159 = vmatprep.mubr.f32.mxu0 0.0
        %2160 = vmatmul.mubr.f32.gmra.mxu0 %v1778
        %v2161 = vpop.f32.mrf.mxu0
        %v2162 = vadd.f32 %v1937, %v2161
        %v2163 = vpop.f32.mrf.mxu0
        %2164 = vmatprep.mubr.f32.mxu0 0.0
        %2165 = vmatmul.mubr.f32.gmra.mxu0 %v1779
        %v2166 = vpop.f32.mrf.mxu0
        %v2167 = vadd.f32 %v1942, %v2166
        %v2168 = vpop.f32.mrf.mxu0
        %2169 = vmatprep.mubr.f32.mxu0 0.0
        %2170 = vmatmul.mubr.f32.gmra.mxu0 %v1780
        %v2171 = vpop.f32.mrf.mxu0
        %v2172 = vadd.f32 %v1947, %v2171
        %v2173 = vpop.f32.mrf.mxu0
        %2174 = vmatprep.mubr.f32.mxu0 0.0
        %2175 = vmatmul.mubr.f32.gmra.mxu0 %v1781
        %v2176 = vpop.f32.mrf.mxu0
        %v2177 = vadd.f32 %v1952, %v2176
        %v2178 = vpop.f32.mrf.mxu0
        %2179 = vmatprep.mubr.f32.mxu0 0.0
        %2180 = vmatmul.mubr.f32.gmra.mxu0 %v1782
        %v2181 = vpop.f32.mrf.mxu0
        %v2182 = vadd.f32 %v1957, %v2181
        %v2183 = vpop.f32.mrf.mxu0
        %2184 = vmatprep.mubr.f32.mxu0 0.0
        %2185 = vmatmul.mubr.f32.gmra.mxu0 %v1783
        %v2186 = vpop.f32.mrf.mxu0
        %v2187 = vadd.f32 %v1962, %v2186
        %v2188 = vpop.f32.mrf.mxu0
        %2189 = vmatprep.mubr.f32.mxu0 0.0
        %2190 = vmatmul.mubr.f32.gmra.mxu0 %v1784
        %v2191 = vpop.f32.mrf.mxu0
        %v2192 = vadd.f32 %v1967, %v2191
        %v2193 = vpop.f32.mrf.mxu0
        %2194 = vmatprep.mubr.f32.mxu0 0.0
        %2195 = vmatmul.mubr.f32.gmra.mxu0 %v1785
        %v2196 = vpop.f32.mrf.mxu0
        %v2197 = vadd.f32 %v1972, %v2196
        %v2198 = vpop.f32.mrf.mxu0
        %2199 = vmatprep.mubr.f32.mxu0 0.0
        %2200 = vmatmul.mubr.f32.gmra.mxu0 %v1786
        %v2201 = vpop.f32.mrf.mxu0
        %v2202 = vadd.f32 %v1977, %v2201
        %v2203 = vpop.f32.mrf.mxu0
        %2204 = vmatprep.mubr.f32.mxu0 0.0
        %2205 = vmatmul.mubr.f32.gmra.mxu0 %v1787
        %v2206 = vpop.f32.mrf.mxu0
        %v2207 = vadd.f32 %v1982, %v2206
        %v2208 = vpop.f32.mrf.mxu0
        %2209 = vmatprep.mubr.f32.mxu0 0.0
        %2210 = vmatmul.mubr.f32.gmra.mxu0 %v1788
        %v2211 = vpop.f32.mrf.mxu0
        %v2212 = vadd.f32 %v1987, %v2211
        %v2213 = vpop.f32.mrf.mxu0
        %2214 = vmatprep.mubr.f32.mxu0 0.0
        %2215 = vmatmul.mubr.f32.gmra.mxu0 %v1789
        %v2216 = vpop.f32.mrf.mxu0
        %v2217 = vadd.f32 %v1992, %v2216
        %v2218 = vpop.f32.mrf.mxu0
        %2219 = vmatprep.mubr.f32.mxu0 0.0
        %2220 = vmatmul.mubr.f32.gmra.mxu0 %v1790
        %v2221 = vpop.f32.mrf.mxu0
        %v2222 = vadd.f32 %v1997, %v2221
        %v2223 = vpop.f32.mrf.mxu0
        %2224 = vmatprep.mubr.f32.mxu0 0.0
        %2225 = vmatmul.mubr.f32.gmra.mxu0 %v1791
        %v2226 = vpop.f32.mrf.mxu0
        %v2227 = vadd.f32 %v2002, %v2226
        %v2228 = vpop.f32.mrf.mxu0
        %2229 = vmatprep.mubr.f32.mxu0 0.0
        %2230 = vmatmul.mubr.f32.gmra.mxu0 %v1792
        %v2231 = vpop.f32.mrf.mxu0
        %v2232 = vadd.f32 %v2007, %v2231
        %v2233 = vpop.f32.mrf.mxu0
        %2234 = vmatprep.mubr.f32.mxu0 0.0
        %2235 = vmatmul.mubr.f32.gmra.mxu0 %v1793
        %v2236 = vpop.f32.mrf.mxu0
        %v2237 = vadd.f32 %v2012, %v2236
        %v2238 = vpop.f32.mrf.mxu0
        %2239 = vmatprep.mubr.f32.mxu0 0.0
        %2240 = vmatmul.mubr.f32.gmra.mxu0 %v1794
        %v2241 = vpop.f32.mrf.mxu0
        %v2242 = vadd.f32 %v2017, %v2241
        %v2243 = vpop.f32.mrf.mxu0
        %2244 = vmatprep.mubr.f32.mxu0 0.0
        %2245 = vmatmul.mubr.f32.gmra.mxu0 %v1795
        %v2246 = vpop.f32.mrf.mxu0
        %v2247 = vadd.f32 %v2022, %v2246
        %v2248 = vpop.f32.mrf.mxu0
        %2249 = vmatprep.mubr.f32.mxu0 0.0
        %2250 = vmatmul.mubr.f32.gmra.mxu0 %v1796
        %v2251 = vpop.f32.mrf.mxu0
        %v2252 = vadd.f32 %v2027, %v2251
        %v2253 = vpop.f32.mrf.mxu0
        %2254 = vmatprep.mubr.f32.mxu0 0.0
        %2255 = vmatmul.mubr.f32.gmra.mxu0 %v1797
        %v2256 = vpop.f32.mrf.mxu0
        %v2257 = vadd.f32 %v2032, %v2256
        %v2258 = vpop.f32.mrf.mxu0
        %2259 = vmatprep.mubr.f32.mxu0 0.0
        %2260 = vmatmul.mubr.f32.gmra.mxu0 %v1798
        %v2261 = vpop.f32.mrf.mxu0
        %v2262 = vadd.f32 %v2037, %v2261
        %v2263 = vpop.f32.mrf.mxu0
        %2264 = vmatprep.mubr.f32.mxu0 0.0
        %2265 = vmatmul.mubr.f32.gmra.mxu0 %v1799
        %v2266 = vpop.f32.mrf.mxu0
        %v2267 = vadd.f32 %v2042, %v2266
        %v2268 = vpop.f32.mrf.mxu0
        %2269 = vmatprep.mubr.f32.mxu0 0.0
        %2270 = vmatmul.mubr.f32.gmra.mxu0 %v1800
        %v2271 = vpop.f32.mrf.mxu0
        %v2272 = vadd.f32 %v2047, %v2271
        %v2273 = vpop.f32.mrf.mxu0
        %2274 = vmatprep.mubr.f32.mxu0 0.0
        %2275 = vmatmul.mubr.f32.gmra.mxu0 %v1801
        %v2276 = vpop.f32.mrf.mxu0
        %v2277 = vadd.f32 %v2052, %v2276
        %v2278 = vpop.f32.mrf.mxu0
        %2279 = vmatprep.mubr.f32.mxu0 0.0
        %2280 = vmatmul.mubr.f32.gmra.mxu0 %v1802
        %v2281 = vpop.f32.mrf.mxu0
        %v2282 = vadd.f32 %v2057, %v2281
        %v2283 = vpop.f32.mrf.mxu0
        %2284 = vmatprep.mubr.f32.mxu0 0.0
        %2285 = vmatmul.mubr.f32.gmra.mxu0 %v1803
        %v2286 = vpop.f32.mrf.mxu0
        %v2287 = vadd.f32 %v2062, %v2286
        %v2288 = vpop.f32.mrf.mxu0
        %2289 = vdwg.mxu0
        %v2290 = vld [vmem:[#allocation2 + $0x28] sm:$0xff]
        %v2291 = vld [vmem:[#allocation2 + $0x30] sm:$0xff]
        %v2292 = vld [vmem:[#allocation2 + $0x38] sm:$0xff]
        %v2293 = vld [vmem:[#allocation2 + $0x40] sm:$0xff]
        %v2294 = vld [vmem:[#allocation2 + $0x48] sm:$0xff]
        %v2295 = vld [vmem:[#allocation2 + $0x50] sm:$0xff]
        %v2296 = vld [vmem:[#allocation2 + $0x58] sm:$0xff]
        %v2297 = vld [vmem:[#allocation2 + $0x60] sm:$0xff]
        %v2298 = vld [vmem:[#allocation2 + $0x68] sm:$0xff]
        %v2299 = vld [vmem:[#allocation2 + $0x70] sm:$0xff]
        %v2300 = vld [vmem:[#allocation2 + $0x78] sm:$0xff]
        %v2301 = vld [vmem:[#allocation2 + $0x80] sm:$0xff]
        %v2302 = vld [vmem:[#allocation2 + $0x88] sm:$0xff]
        %v2303 = vld [vmem:[#allocation2 + $0x90] sm:$0xff]
        %v2304 = vld [vmem:[#allocation2 + $0x98] sm:$0xff]
        %v2305 = vld [vmem:[#allocation2 + $0xa0] sm:$0xff]
        %v2306 = vld [vmem:[#allocation2 + $0xa8] sm:$0xff]
        %v2307 = vld [vmem:[#allocation2 + $0xb0] sm:$0xff]
        %v2308 = vld [vmem:[#allocation2 + $0xb8] sm:$0xff]
        %v2309 = vld [vmem:[#allocation2 + $0xc0] sm:$0xff]
        %v2310 = vld [vmem:[#allocation2 + $0xc8] sm:$0xff]
        %v2311 = vld [vmem:[#allocation2 + $0xd0] sm:$0xff]
        %v2312 = vld [vmem:[#allocation2 + $0xd8] sm:$0xff]
        %v2313 = vld [vmem:[#allocation2 + $0xe0] sm:$0xff]
        %v2314 = vld [vmem:[#allocation2 + $0xe8] sm:$0xff]
        %v2315 = vld [vmem:[#allocation2 + $0xf0] sm:$0xff]
        %v2316 = vld [vmem:[#allocation2 + $0xf8] sm:$0xff]
        %v2317 = vld [vmem:[#allocation2 + $0x100] sm:$0xff]
        %v2318 = vld [vmem:[#allocation2 + $0x108] sm:$0xff]
        %v2319 = vld [vmem:[#allocation2 + $0x110] sm:$0xff]
        %v2320 = vld [vmem:[#allocation2 + $0x118] sm:$0xff]
        %v2321 = vld [vmem:[#allocation2 + $0x120] sm:$0xff]
        %s2322 = scalar_lea.vmem [#allocation6], 896
        %v2323 = vld [vmem:[%s2322] sm:$0xff]
        %v2324 = vld [vmem:[%s2322 + $0x8] sm:$0xff]
        %v2325 = vld [vmem:[%s2322 + $0x10] sm:$0xff]
        %v2326 = vld [vmem:[%s2322 + $0x18] sm:$0xff]
        %v2327 = vld [vmem:[%s2322 + $0x20] sm:$0xff]
        %v2328 = vld [vmem:[%s2322 + $0x28] sm:$0xff]
        %v2329 = vld [vmem:[%s2322 + $0x30] sm:$0xff]
        %v2330 = vld [vmem:[%s2322 + $0x38] sm:$0xff]
        %v2331 = vld [vmem:[%s2322 + $0x40] sm:$0xff]
        %v2332 = vld [vmem:[%s2322 + $0x48] sm:$0xff]
        %v2333 = vld [vmem:[%s2322 + $0x50] sm:$0xff]
        %v2334 = vld [vmem:[%s2322 + $0x58] sm:$0xff]
        %v2335 = vld [vmem:[%s2322 + $0x60] sm:$0xff]
        %v2336 = vld [vmem:[%s2322 + $0x68] sm:$0xff]
        %v2337 = vld [vmem:[%s2322 + $0x70] sm:$0xff]
        %v2338 = vld [vmem:[%s2322 + $0x78] sm:$0xff]
        %2339 = vmatprep.subr.mxu0 0.0
        %2340 = vmatpush1.msra.mxu0 %v2338
        %2341 = vmatprep.subr.mxu0 0.0
        %2342 = vmatpush1.msra.mxu0 %v2337
        %2343 = vmatprep.subr.mxu0 0.0
        %2344 = vmatpush1.msra.mxu0 %v2336
        %2345 = vmatprep.subr.mxu0 0.0
        %2346 = vmatpush1.msra.mxu0 %v2335
        %2347 = vmatprep.subr.mxu0 0.0
        %2348 = vmatpush1.msra.mxu0 %v2334
        %2349 = vmatprep.subr.mxu0 0.0
        %2350 = vmatpush1.msra.mxu0 %v2333
        %2351 = vmatprep.subr.mxu0 0.0
        %2352 = vmatpush1.msra.mxu0 %v2332
        %2353 = vmatprep.subr.mxu0 0.0
        %2354 = vmatpush1.msra.mxu0 %v2331
        %2355 = vmatprep.subr.mxu0 0.0
        %2356 = vmatpush1.msra.mxu0 %v2330
        %2357 = vmatprep.subr.mxu0 0.0
        %2358 = vmatpush1.msra.mxu0 %v2329
        %2359 = vmatprep.subr.mxu0 0.0
        %2360 = vmatpush1.msra.mxu0 %v2328
        %2361 = vmatprep.subr.mxu0 0.0
        %2362 = vmatpush1.msra.mxu0 %v2327
        %2363 = vmatprep.subr.mxu0 0.0
        %2364 = vmatpush1.msra.mxu0 %v2326
        %2365 = vmatprep.subr.mxu0 0.0
        %2366 = vmatpush1.msra.mxu0 %v2325
        %2367 = vmatprep.subr.mxu0 0.0
        %2368 = vmatpush1.msra.mxu0 %v2324
        %2369 = vmatprep.subr.mxu0 0.0
        %2370 = vmatpush1.msra.mxu0 %v2323
        %2371 = vmatprep.subr.mxu0 0.0
        %2372 = vmatpush2.msra.mxu0 0.0
        %2373 = vmatprep.subr.mxu0 0.0
        %2374 = vmatpush2.msra.mxu0 0.0
        %2375 = vmatprep.subr.mxu0 0.0
        %2376 = vmatpush2.msra.mxu0 0.0
        %2377 = vmatprep.subr.mxu0 0.0
        %2378 = vmatpush2.msra.mxu0 0.0
        %2379 = vmatprep.subr.mxu0 0.0
        %2380 = vmatpush2.msra.mxu0 0.0
        %2381 = vmatprep.subr.mxu0 0.0
        %2382 = vmatpush2.msra.mxu0 0.0
        %2383 = vmatprep.subr.mxu0 0.0
        %2384 = vmatpush2.msra.mxu0 0.0
        %2385 = vmatprep.subr.mxu0 0.0
        %2386 = vmatpush2.msra.mxu0 0.0
        %2387 = vmatprep.subr.mxu0 0.0
        %2388 = vmatpush2.msra.mxu0 0.0
        %2389 = vmatprep.subr.mxu0 0.0
        %2390 = vmatpush2.msra.mxu0 0.0
        %2391 = vmatprep.subr.mxu0 0.0
        %2392 = vmatpush2.msra.mxu0 0.0
        %2393 = vmatprep.subr.mxu0 0.0
        %2394 = vmatpush2.msra.mxu0 0.0
        %2395 = vmatprep.subr.mxu0 0.0
        %2396 = vmatpush2.msra.mxu0 0.0
        %2397 = vmatprep.subr.mxu0 0.0
        %2398 = vmatpush2.msra.mxu0 0.0
        %2399 = vmatprep.subr.mxu0 0.0
        %2400 = vmatpush2.msra.mxu0 0.0
        %2401 = vmatprep.subr.mxu0 0.0
        %2402 = vmatpush2.msra.mxu0 0.0
        %2403 = vmatprep.mubr.f32.mxu0 0.0
        %2404 = vmatmul.mubr.f32.gmra.mxu0 %v2290
        %v2405 = vpop.f32.mrf.mxu0
        %v2406 = vadd.f32 0.0, %v2405
        %v2407 = vpop.f32.mrf.mxu0
        %2408 = vmatprep.mubr.f32.mxu0 0.0
        %2409 = vmatmul.mubr.f32.gmra.mxu0 %v2291
        %v2410 = vpop.f32.mrf.mxu0
        %v2411 = vadd.f32 0.0, %v2410
        %v2412 = vpop.f32.mrf.mxu0
        %2413 = vmatprep.mubr.f32.mxu0 0.0
        %2414 = vmatmul.mubr.f32.gmra.mxu0 %v2292
        %v2415 = vpop.f32.mrf.mxu0
        %v2416 = vadd.f32 0.0, %v2415
        %v2417 = vpop.f32.mrf.mxu0
        %2418 = vmatprep.mubr.f32.mxu0 0.0
        %2419 = vmatmul.mubr.f32.gmra.mxu0 %v2293
        %v2420 = vpop.f32.mrf.mxu0
        %v2421 = vadd.f32 0.0, %v2420
        %v2422 = vpop.f32.mrf.mxu0
        %2423 = vmatprep.mubr.f32.mxu0 0.0
        %2424 = vmatmul.mubr.f32.gmra.mxu0 %v2294
        %v2425 = vpop.f32.mrf.mxu0
        %v2426 = vadd.f32 0.0, %v2425
        %v2427 = vpop.f32.mrf.mxu0
        %2428 = vmatprep.mubr.f32.mxu0 0.0
        %2429 = vmatmul.mubr.f32.gmra.mxu0 %v2295
        %v2430 = vpop.f32.mrf.mxu0
        %v2431 = vadd.f32 0.0, %v2430
        %v2432 = vpop.f32.mrf.mxu0
        %2433 = vmatprep.mubr.f32.mxu0 0.0
        %2434 = vmatmul.mubr.f32.gmra.mxu0 %v2296
        %v2435 = vpop.f32.mrf.mxu0
        %v2436 = vadd.f32 0.0, %v2435
        %v2437 = vpop.f32.mrf.mxu0
        %2438 = vmatprep.mubr.f32.mxu0 0.0
        %2439 = vmatmul.mubr.f32.gmra.mxu0 %v2297
        %v2440 = vpop.f32.mrf.mxu0
        %v2441 = vadd.f32 0.0, %v2440
        %v2442 = vpop.f32.mrf.mxu0
        %2443 = vmatprep.mubr.f32.mxu0 0.0
        %2444 = vmatmul.mubr.f32.gmra.mxu0 %v2298
        %v2445 = vpop.f32.mrf.mxu0
        %v2446 = vadd.f32 0.0, %v2445
        %v2447 = vpop.f32.mrf.mxu0
        %2448 = vmatprep.mubr.f32.mxu0 0.0
        %2449 = vmatmul.mubr.f32.gmra.mxu0 %v2299
        %v2450 = vpop.f32.mrf.mxu0
        %v2451 = vadd.f32 0.0, %v2450
        %v2452 = vpop.f32.mrf.mxu0
        %2453 = vmatprep.mubr.f32.mxu0 0.0
        %2454 = vmatmul.mubr.f32.gmra.mxu0 %v2300
        %v2455 = vpop.f32.mrf.mxu0
        %v2456 = vadd.f32 0.0, %v2455
        %v2457 = vpop.f32.mrf.mxu0
        %2458 = vmatprep.mubr.f32.mxu0 0.0
        %2459 = vmatmul.mubr.f32.gmra.mxu0 %v2301
        %v2460 = vpop.f32.mrf.mxu0
        %v2461 = vadd.f32 0.0, %v2460
        %v2462 = vpop.f32.mrf.mxu0
        %2463 = vmatprep.mubr.f32.mxu0 0.0
        %2464 = vmatmul.mubr.f32.gmra.mxu0 %v2302
        %v2465 = vpop.f32.mrf.mxu0
        %v2466 = vadd.f32 0.0, %v2465
        %v2467 = vpop.f32.mrf.mxu0
        %2468 = vmatprep.mubr.f32.mxu0 0.0
        %2469 = vmatmul.mubr.f32.gmra.mxu0 %v2303
        %v2470 = vpop.f32.mrf.mxu0
        %v2471 = vadd.f32 0.0, %v2470
        %v2472 = vpop.f32.mrf.mxu0
        %2473 = vmatprep.mubr.f32.mxu0 0.0
        %2474 = vmatmul.mubr.f32.gmra.mxu0 %v2304
        %v2475 = vpop.f32.mrf.mxu0
        %v2476 = vadd.f32 0.0, %v2475
        %v2477 = vpop.f32.mrf.mxu0
        %2478 = vmatprep.mubr.f32.mxu0 0.0
        %2479 = vmatmul.mubr.f32.gmra.mxu0 %v2305
        %v2480 = vpop.f32.mrf.mxu0
        %v2481 = vadd.f32 0.0, %v2480
        %v2482 = vpop.f32.mrf.mxu0
        %2483 = vmatprep.mubr.f32.mxu0 0.0
        %2484 = vmatmul.mubr.f32.gmra.mxu0 %v2306
        %v2485 = vpop.f32.mrf.mxu0
        %v2486 = vadd.f32 0.0, %v2485
        %v2487 = vpop.f32.mrf.mxu0
        %2488 = vmatprep.mubr.f32.mxu0 0.0
        %2489 = vmatmul.mubr.f32.gmra.mxu0 %v2307
        %v2490 = vpop.f32.mrf.mxu0
        %v2491 = vadd.f32 0.0, %v2490
        %v2492 = vpop.f32.mrf.mxu0
        %2493 = vmatprep.mubr.f32.mxu0 0.0
        %2494 = vmatmul.mubr.f32.gmra.mxu0 %v2308
        %v2495 = vpop.f32.mrf.mxu0
        %v2496 = vadd.f32 0.0, %v2495
        %v2497 = vpop.f32.mrf.mxu0
        %2498 = vmatprep.mubr.f32.mxu0 0.0
        %2499 = vmatmul.mubr.f32.gmra.mxu0 %v2309
        %v2500 = vpop.f32.mrf.mxu0
        %v2501 = vadd.f32 0.0, %v2500
        %v2502 = vpop.f32.mrf.mxu0
        %2503 = vmatprep.mubr.f32.mxu0 0.0
        %2504 = vmatmul.mubr.f32.gmra.mxu0 %v2310
        %v2505 = vpop.f32.mrf.mxu0
        %v2506 = vadd.f32 0.0, %v2505
        %v2507 = vpop.f32.mrf.mxu0
        %2508 = vmatprep.mubr.f32.mxu0 0.0
        %2509 = vmatmul.mubr.f32.gmra.mxu0 %v2311
        %v2510 = vpop.f32.mrf.mxu0
        %v2511 = vadd.f32 0.0, %v2510
        %v2512 = vpop.f32.mrf.mxu0
        %2513 = vmatprep.mubr.f32.mxu0 0.0
        %2514 = vmatmul.mubr.f32.gmra.mxu0 %v2312
        %v2515 = vpop.f32.mrf.mxu0
        %v2516 = vadd.f32 0.0, %v2515
        %v2517 = vpop.f32.mrf.mxu0
        %2518 = vmatprep.mubr.f32.mxu0 0.0
        %2519 = vmatmul.mubr.f32.gmra.mxu0 %v2313
        %v2520 = vpop.f32.mrf.mxu0
        %v2521 = vadd.f32 0.0, %v2520
        %v2522 = vpop.f32.mrf.mxu0
        %2523 = vmatprep.mubr.f32.mxu0 0.0
        %2524 = vmatmul.mubr.f32.gmra.mxu0 %v2314
        %v2525 = vpop.f32.mrf.mxu0
        %v2526 = vadd.f32 0.0, %v2525
        %v2527 = vpop.f32.mrf.mxu0
        %2528 = vmatprep.mubr.f32.mxu0 0.0
        %2529 = vmatmul.mubr.f32.gmra.mxu0 %v2315
        %v2530 = vpop.f32.mrf.mxu0
        %v2531 = vadd.f32 0.0, %v2530
        %v2532 = vpop.f32.mrf.mxu0
        %2533 = vmatprep.mubr.f32.mxu0 0.0
        %2534 = vmatmul.mubr.f32.gmra.mxu0 %v2316
        %v2535 = vpop.f32.mrf.mxu0
        %v2536 = vadd.f32 0.0, %v2535
        %v2537 = vpop.f32.mrf.mxu0
        %2538 = vmatprep.mubr.f32.mxu0 0.0
        %2539 = vmatmul.mubr.f32.gmra.mxu0 %v2317
        %v2540 = vpop.f32.mrf.mxu0
        %v2541 = vadd.f32 0.0, %v2540
        %v2542 = vpop.f32.mrf.mxu0
        %2543 = vmatprep.mubr.f32.mxu0 0.0
        %2544 = vmatmul.mubr.f32.gmra.mxu0 %v2318
        %v2545 = vpop.f32.mrf.mxu0
        %v2546 = vadd.f32 0.0, %v2545
        %v2547 = vpop.f32.mrf.mxu0
        %2548 = vmatprep.mubr.f32.mxu0 0.0
        %2549 = vmatmul.mubr.f32.gmra.mxu0 %v2319
        %v2550 = vpop.f32.mrf.mxu0
        %v2551 = vadd.f32 0.0, %v2550
        %v2552 = vpop.f32.mrf.mxu0
        %2553 = vmatprep.mubr.f32.mxu0 0.0
        %2554 = vmatmul.mubr.f32.gmra.mxu0 %v2320
        %v2555 = vpop.f32.mrf.mxu0
        %v2556 = vadd.f32 0.0, %v2555
        %v2557 = vpop.f32.mrf.mxu0
        %2558 = vmatprep.mubr.f32.mxu0 0.0
        %2559 = vmatmul.mubr.f32.gmra.mxu0 %v2321
        %v2560 = vpop.f32.mrf.mxu0
        %v2561 = vadd.f32 0.0, %v2560
        %v2562 = vpop.f32.mrf.mxu0
        %2563 = vdwg.mxu0
        %v2564 = vadd.f32 %v2132, %v2406
        %v2565 = vadd.f32 %v2137, %v2411
        %v2566 = vadd.f32 %v2142, %v2416
        %v2567 = vadd.f32 %v2147, %v2421
        %v2568 = vadd.f32 %v2152, %v2426
        %v2569 = vadd.f32 %v2157, %v2431
        %v2570 = vadd.f32 %v2162, %v2436
        %v2571 = vadd.f32 %v2167, %v2441
        %v2572 = vadd.f32 %v2172, %v2446
        %v2573 = vadd.f32 %v2177, %v2451
        %v2574 = vadd.f32 %v2182, %v2456
        %v2575 = vadd.f32 %v2187, %v2461
        %v2576 = vadd.f32 %v2192, %v2466
        %v2577 = vadd.f32 %v2197, %v2471
        %v2578 = vadd.f32 %v2202, %v2476
        %v2579 = vadd.f32 %v2207, %v2481
        %v2580 = vadd.f32 %v2212, %v2486
        %v2581 = vadd.f32 %v2217, %v2491
        %v2582 = vadd.f32 %v2222, %v2496
        %v2583 = vadd.f32 %v2227, %v2501
        %v2584 = vadd.f32 %v2232, %v2506
        %v2585 = vadd.f32 %v2237, %v2511
        %v2586 = vadd.f32 %v2242, %v2516
        %v2587 = vadd.f32 %v2247, %v2521
        %v2588 = vadd.f32 %v2252, %v2526
        %v2589 = vadd.f32 %v2257, %v2531
        %v2590 = vadd.f32 %v2262, %v2536
        %v2591 = vadd.f32 %v2267, %v2541
        %v2592 = vadd.f32 %v2272, %v2546
        %v2593 = vadd.f32 %v2277, %v2551
        %v2594 = vadd.f32 %v2282, %v2556
        %v2595 = vadd.f32 %v2287, %v2561
        %v2596 = vadd.f32 %v1740, %v2564
        %v2597 = vadd.f32 %v1741, %v2565
        %v2598 = vadd.f32 %v1742, %v2566
        %v2599 = vadd.f32 %v1743, %v2567
        %v2600 = vadd.f32 %v1744, %v2568
        %v2601 = vadd.f32 %v1745, %v2569
        %v2602 = vadd.f32 %v1746, %v2570
        %v2603 = vadd.f32 %v1747, %v2571
        %v2604 = vadd.f32 %v1748, %v2572
        %v2605 = vadd.f32 %v1749, %v2573
        %v2606 = vadd.f32 %v1750, %v2574
        %v2607 = vadd.f32 %v1751, %v2575
        %v2608 = vadd.f32 %v1752, %v2576
        %v2609 = vadd.f32 %v1753, %v2577
        %v2610 = vadd.f32 %v1754, %v2578
        %v2611 = vadd.f32 %v1755, %v2579
        %v2612 = vadd.f32 %v1756, %v2580
        %v2613 = vadd.f32 %v1757, %v2581
        %v2614 = vadd.f32 %v1758, %v2582
        %v2615 = vadd.f32 %v1759, %v2583
        %v2616 = vadd.f32 %v1760, %v2584
        %v2617 = vadd.f32 %v1761, %v2585
        %v2618 = vadd.f32 %v1762, %v2586
        %v2619 = vadd.f32 %v1763, %v2587
        %v2620 = vadd.f32 %v1764, %v2588
        %v2621 = vadd.f32 %v1765, %v2589
        %v2622 = vadd.f32 %v1766, %v2590
        %v2623 = vadd.f32 %v1767, %v2591
        %v2624 = vadd.f32 %v1768, %v2592
        %v2625 = vadd.f32 %v1769, %v2593
        %v2626 = vadd.f32 %v1770, %v2594
        %v2627 = vadd.f32 %v1771, %v2595
        %v2628 = vld [vmem:[#allocation2 + $0x9] sm:$0xff]
        %v2629 = vld [vmem:[#allocation2 + $0x11] sm:$0xff]
        %v2630 = vld [vmem:[#allocation2 + $0x19] sm:$0xff]
        %v2631 = vld [vmem:[#allocation2 + $0x21] sm:$0xff]
        %v2632 = vld [vmem:[#allocation2 + $0x29] sm:$0xff]
        %v2633 = vld [vmem:[#allocation2 + $0x31] sm:$0xff]
        %v2634 = vld [vmem:[#allocation2 + $0x39] sm:$0xff]
        %v2635 = vld [vmem:[#allocation2 + $0x41] sm:$0xff]
        %v2636 = vld [vmem:[#allocation2 + $0x49] sm:$0xff]
        %v2637 = vld [vmem:[#allocation2 + $0x51] sm:$0xff]
        %v2638 = vld [vmem:[#allocation2 + $0x59] sm:$0xff]
        %v2639 = vld [vmem:[#allocation2 + $0x61] sm:$0xff]
        %v2640 = vld [vmem:[#allocation2 + $0x69] sm:$0xff]
        %v2641 = vld [vmem:[#allocation2 + $0x71] sm:$0xff]
        %v2642 = vld [vmem:[#allocation2 + $0x79] sm:$0xff]
        %v2643 = vld [vmem:[#allocation2 + $0x81] sm:$0xff]
        %v2644 = vld [vmem:[#allocation2 + $0x89] sm:$0xff]
        %v2645 = vld [vmem:[#allocation2 + $0x91] sm:$0xff]
        %v2646 = vld [vmem:[#allocation2 + $0x99] sm:$0xff]
        %v2647 = vld [vmem:[#allocation2 + $0xa1] sm:$0xff]
        %v2648 = vld [vmem:[#allocation2 + $0xa9] sm:$0xff]
        %v2649 = vld [vmem:[#allocation2 + $0xb1] sm:$0xff]
        %v2650 = vld [vmem:[#allocation2 + $0xb9] sm:$0xff]
        %v2651 = vld [vmem:[#allocation2 + $0xc1] sm:$0xff]
        %v2652 = vld [vmem:[#allocation2 + $0xc9] sm:$0xff]
        %v2653 = vld [vmem:[#allocation2 + $0xd1] sm:$0xff]
        %v2654 = vld [vmem:[#allocation2 + $0xd9] sm:$0xff]
        %v2655 = vld [vmem:[#allocation2 + $0xe1] sm:$0xff]
        %v2656 = vld [vmem:[#allocation2 + $0xe9] sm:$0xff]
        %v2657 = vld [vmem:[#allocation2 + $0xf1] sm:$0xff]
        %v2658 = vld [vmem:[#allocation2 + $0xf9] sm:$0xff]
        %v2659 = vld [vmem:[#allocation2 + $0x101] sm:$0xff]
        %s2660 = scalar_lea.vmem [#allocation6], 256
        %v2661 = vld [vmem:[%s2660] sm:$0xff]
        %v2662 = vld [vmem:[%s2660 + $0x8] sm:$0xff]
        %v2663 = vld [vmem:[%s2660 + $0x10] sm:$0xff]
        %v2664 = vld [vmem:[%s2660 + $0x18] sm:$0xff]
        %v2665 = vld [vmem:[%s2660 + $0x20] sm:$0xff]
        %v2666 = vld [vmem:[%s2660 + $0x28] sm:$0xff]
        %v2667 = vld [vmem:[%s2660 + $0x30] sm:$0xff]
        %v2668 = vld [vmem:[%s2660 + $0x38] sm:$0xff]
        %v2669 = vld [vmem:[%s2660 + $0x40] sm:$0xff]
        %v2670 = vld [vmem:[%s2660 + $0x48] sm:$0xff]
        %v2671 = vld [vmem:[%s2660 + $0x50] sm:$0xff]
        %v2672 = vld [vmem:[%s2660 + $0x58] sm:$0xff]
        %v2673 = vld [vmem:[%s2660 + $0x60] sm:$0xff]
        %v2674 = vld [vmem:[%s2660 + $0x68] sm:$0xff]
        %v2675 = vld [vmem:[%s2660 + $0x70] sm:$0xff]
        %v2676 = vld [vmem:[%s2660 + $0x78] sm:$0xff]
        %v2677 = vld [vmem:[#allocation2 + $0x109] sm:$0xff]
        %v2678 = vld [vmem:[#allocation2 + $0x111] sm:$0xff]
        %s2679 = scalar_lea.vmem [#allocation6], 640
        %v2680 = vld [vmem:[%s2679] sm:$0xff]
        %v2681 = vld [vmem:[%s2679 + $0x8] sm:$0xff]
        %v2682 = vld [vmem:[%s2679 + $0x10] sm:$0xff]
        %v2683 = vld [vmem:[%s2679 + $0x18] sm:$0xff]
        %v2684 = vld [vmem:[%s2679 + $0x20] sm:$0xff]
        %v2685 = vld [vmem:[%s2679 + $0x28] sm:$0xff]
        %v2686 = vld [vmem:[%s2679 + $0x30] sm:$0xff]
        %v2687 = vld [vmem:[%s2679 + $0x38] sm:$0xff]
        %v2688 = vld [vmem:[%s2679 + $0x40] sm:$0xff]
        %v2689 = vld [vmem:[%s2679 + $0x48] sm:$0xff]
        %v2690 = vld [vmem:[%s2679 + $0x50] sm:$0xff]
        %v2691 = vld [vmem:[%s2679 + $0x58] sm:$0xff]
        %v2692 = vld [vmem:[%s2679 + $0x60] sm:$0xff]
        %v2693 = vld [vmem:[%s2679 + $0x68] sm:$0xff]
        %v2694 = vld [vmem:[%s2679 + $0x70] sm:$0xff]
        %v2695 = vld [vmem:[%s2679 + $0x78] sm:$0xff]
        %2696 = vmatprep.subr.mxu0 0.0
        %2697 = vmatpush1.msra.mxu0 %v2695
        %2698 = vmatprep.subr.mxu0 0.0
        %2699 = vmatpush1.msra.mxu0 %v2694
        %2700 = vmatprep.subr.mxu0 0.0
        %2701 = vmatpush1.msra.mxu0 %v2693
        %2702 = vmatprep.subr.mxu0 0.0
        %2703 = vmatpush1.msra.mxu0 %v2692
        %2704 = vmatprep.subr.mxu0 0.0
        %2705 = vmatpush1.msra.mxu0 %v2691
        %2706 = vmatprep.subr.mxu0 0.0
        %2707 = vmatpush1.msra.mxu0 %v2690
        %2708 = vmatprep.subr.mxu0 0.0
        %2709 = vmatpush1.msra.mxu0 %v2689
        %2710 = vmatprep.subr.mxu0 0.0
        %2711 = vmatpush1.msra.mxu0 %v2688
        %2712 = vmatprep.subr.mxu0 0.0
        %2713 = vmatpush1.msra.mxu0 %v2687
        %2714 = vmatprep.subr.mxu0 0.0
        %2715 = vmatpush1.msra.mxu0 %v2686
        %2716 = vmatprep.subr.mxu0 0.0
        %2717 = vmatpush1.msra.mxu0 %v2685
        %2718 = vmatprep.subr.mxu0 0.0
        %2719 = vmatpush1.msra.mxu0 %v2684
        %2720 = vmatprep.subr.mxu0 0.0
        %2721 = vmatpush1.msra.mxu0 %v2683
        %2722 = vmatprep.subr.mxu0 0.0
        %2723 = vmatpush1.msra.mxu0 %v2682
        %2724 = vmatprep.subr.mxu0 0.0
        %2725 = vmatpush1.msra.mxu0 %v2681
        %2726 = vmatprep.subr.mxu0 0.0
        %2727 = vmatpush1.msra.mxu0 %v2680
        %2728 = vmatprep.subr.mxu0 0.0
        %2729 = vmatpush2.msra.mxu0 0.0
        %2730 = vmatprep.subr.mxu0 0.0
        %2731 = vmatpush2.msra.mxu0 0.0
        %2732 = vmatprep.subr.mxu0 0.0
        %2733 = vmatpush2.msra.mxu0 0.0
        %2734 = vmatprep.subr.mxu0 0.0
        %2735 = vmatpush2.msra.mxu0 0.0
        %2736 = vmatprep.subr.mxu0 0.0
        %2737 = vmatpush2.msra.mxu0 0.0
        %2738 = vmatprep.subr.mxu0 0.0
        %2739 = vmatpush2.msra.mxu0 0.0
        %2740 = vmatprep.subr.mxu0 0.0
        %2741 = vmatpush2.msra.mxu0 0.0
        %2742 = vmatprep.subr.mxu0 0.0
        %2743 = vmatpush2.msra.mxu0 0.0
        %2744 = vmatprep.subr.mxu0 0.0
        %2745 = vmatpush2.msra.mxu0 0.0
        %2746 = vmatprep.subr.mxu0 0.0
        %2747 = vmatpush2.msra.mxu0 0.0
        %2748 = vmatprep.subr.mxu0 0.0
        %2749 = vmatpush2.msra.mxu0 0.0
        %2750 = vmatprep.subr.mxu0 0.0
        %2751 = vmatpush2.msra.mxu0 0.0
        %2752 = vmatprep.subr.mxu0 0.0
        %2753 = vmatpush2.msra.mxu0 0.0
        %2754 = vmatprep.subr.mxu0 0.0
        %2755 = vmatpush2.msra.mxu0 0.0
        %2756 = vmatprep.subr.mxu0 0.0
        %2757 = vmatpush2.msra.mxu0 0.0
        %2758 = vmatprep.subr.mxu0 0.0
        %2759 = vmatpush2.msra.mxu0 0.0
        %2760 = vmatprep.mubr.f32.mxu0 0.0
        %2761 = vmatmul.mubr.f32.gmra.mxu0 %v2630
        %v2762 = vpop.f32.mrf.mxu0
        %v2763 = vadd.f32 0.0, %v2762
        %v2764 = vpop.f32.mrf.mxu0
        %2765 = vmatprep.mubr.f32.mxu0 0.0
        %2766 = vmatmul.mubr.f32.gmra.mxu0 %v2631
        %v2767 = vpop.f32.mrf.mxu0
        %v2768 = vadd.f32 0.0, %v2767
        %v2769 = vpop.f32.mrf.mxu0
        %2770 = vmatprep.mubr.f32.mxu0 0.0
        %2771 = vmatmul.mubr.f32.gmra.mxu0 %v2632
        %v2772 = vpop.f32.mrf.mxu0
        %v2773 = vadd.f32 0.0, %v2772
        %v2774 = vpop.f32.mrf.mxu0
        %2775 = vmatprep.mubr.f32.mxu0 0.0
        %2776 = vmatmul.mubr.f32.gmra.mxu0 %v2633
        %v2777 = vpop.f32.mrf.mxu0
        %v2778 = vadd.f32 0.0, %v2777
        %v2779 = vpop.f32.mrf.mxu0
        %2780 = vmatprep.mubr.f32.mxu0 0.0
        %2781 = vmatmul.mubr.f32.gmra.mxu0 %v2634
        %v2782 = vpop.f32.mrf.mxu0
        %v2783 = vadd.f32 0.0, %v2782
        %v2784 = vpop.f32.mrf.mxu0
        %2785 = vmatprep.mubr.f32.mxu0 0.0
        %2786 = vmatmul.mubr.f32.gmra.mxu0 %v2635
        %v2787 = vpop.f32.mrf.mxu0
        %v2788 = vadd.f32 0.0, %v2787
        %v2789 = vpop.f32.mrf.mxu0
        %2790 = vmatprep.mubr.f32.mxu0 0.0
        %2791 = vmatmul.mubr.f32.gmra.mxu0 %v2636
        %v2792 = vpop.f32.mrf.mxu0
        %v2793 = vadd.f32 0.0, %v2792
        %v2794 = vpop.f32.mrf.mxu0
        %2795 = vmatprep.mubr.f32.mxu0 0.0
        %2796 = vmatmul.mubr.f32.gmra.mxu0 %v2637
        %v2797 = vpop.f32.mrf.mxu0
        %v2798 = vadd.f32 0.0, %v2797
        %v2799 = vpop.f32.mrf.mxu0
        %2800 = vmatprep.mubr.f32.mxu0 0.0
        %2801 = vmatmul.mubr.f32.gmra.mxu0 %v2638
        %v2802 = vpop.f32.mrf.mxu0
        %v2803 = vadd.f32 0.0, %v2802
        %v2804 = vpop.f32.mrf.mxu0
        %2805 = vmatprep.mubr.f32.mxu0 0.0
        %2806 = vmatmul.mubr.f32.gmra.mxu0 %v2639
        %v2807 = vpop.f32.mrf.mxu0
        %v2808 = vadd.f32 0.0, %v2807
        %v2809 = vpop.f32.mrf.mxu0
        %2810 = vmatprep.mubr.f32.mxu0 0.0
        %2811 = vmatmul.mubr.f32.gmra.mxu0 %v2640
        %v2812 = vpop.f32.mrf.mxu0
        %v2813 = vadd.f32 0.0, %v2812
        %v2814 = vpop.f32.mrf.mxu0
        %2815 = vmatprep.mubr.f32.mxu0 0.0
        %2816 = vmatmul.mubr.f32.gmra.mxu0 %v2641
        %v2817 = vpop.f32.mrf.mxu0
        %v2818 = vadd.f32 0.0, %v2817
        %v2819 = vpop.f32.mrf.mxu0
        %2820 = vmatprep.mubr.f32.mxu0 0.0
        %2821 = vmatmul.mubr.f32.gmra.mxu0 %v2642
        %v2822 = vpop.f32.mrf.mxu0
        %v2823 = vadd.f32 0.0, %v2822
        %v2824 = vpop.f32.mrf.mxu0
        %2825 = vmatprep.mubr.f32.mxu0 0.0
        %2826 = vmatmul.mubr.f32.gmra.mxu0 %v2643
        %v2827 = vpop.f32.mrf.mxu0
        %v2828 = vadd.f32 0.0, %v2827
        %v2829 = vpop.f32.mrf.mxu0
        %2830 = vmatprep.mubr.f32.mxu0 0.0
        %2831 = vmatmul.mubr.f32.gmra.mxu0 %v2644
        %v2832 = vpop.f32.mrf.mxu0
        %v2833 = vadd.f32 0.0, %v2832
        %v2834 = vpop.f32.mrf.mxu0
        %2835 = vmatprep.mubr.f32.mxu0 0.0
        %2836 = vmatmul.mubr.f32.gmra.mxu0 %v2645
        %v2837 = vpop.f32.mrf.mxu0
        %v2838 = vadd.f32 0.0, %v2837
        %v2839 = vpop.f32.mrf.mxu0
        %2840 = vmatprep.mubr.f32.mxu0 0.0
        %2841 = vmatmul.mubr.f32.gmra.mxu0 %v2646
        %v2842 = vpop.f32.mrf.mxu0
        %v2843 = vadd.f32 0.0, %v2842
        %v2844 = vpop.f32.mrf.mxu0
        %2845 = vmatprep.mubr.f32.mxu0 0.0
        %2846 = vmatmul.mubr.f32.gmra.mxu0 %v2647
        %v2847 = vpop.f32.mrf.mxu0
        %v2848 = vadd.f32 0.0, %v2847
        %v2849 = vpop.f32.mrf.mxu0
        %2850 = vmatprep.mubr.f32.mxu0 0.0
        %2851 = vmatmul.mubr.f32.gmra.mxu0 %v2648
        %v2852 = vpop.f32.mrf.mxu0
        %v2853 = vadd.f32 0.0, %v2852
        %v2854 = vpop.f32.mrf.mxu0
        %2855 = vmatprep.mubr.f32.mxu0 0.0
        %2856 = vmatmul.mubr.f32.gmra.mxu0 %v2649
        %v2857 = vpop.f32.mrf.mxu0
        %v2858 = vadd.f32 0.0, %v2857
        %v2859 = vpop.f32.mrf.mxu0
        %2860 = vmatprep.mubr.f32.mxu0 0.0
        %2861 = vmatmul.mubr.f32.gmra.mxu0 %v2650
        %v2862 = vpop.f32.mrf.mxu0
        %v2863 = vadd.f32 0.0, %v2862
        %v2864 = vpop.f32.mrf.mxu0
        %2865 = vmatprep.mubr.f32.mxu0 0.0
        %2866 = vmatmul.mubr.f32.gmra.mxu0 %v2651
        %v2867 = vpop.f32.mrf.mxu0
        %v2868 = vadd.f32 0.0, %v2867
        %v2869 = vpop.f32.mrf.mxu0
        %2870 = vmatprep.mubr.f32.mxu0 0.0
        %2871 = vmatmul.mubr.f32.gmra.mxu0 %v2652
        %v2872 = vpop.f32.mrf.mxu0
        %v2873 = vadd.f32 0.0, %v2872
        %v2874 = vpop.f32.mrf.mxu0
        %2875 = vmatprep.mubr.f32.mxu0 0.0
        %2876 = vmatmul.mubr.f32.gmra.mxu0 %v2653
        %v2877 = vpop.f32.mrf.mxu0
        %v2878 = vadd.f32 0.0, %v2877
        %v2879 = vpop.f32.mrf.mxu0
        %2880 = vmatprep.mubr.f32.mxu0 0.0
        %2881 = vmatmul.mubr.f32.gmra.mxu0 %v2654
        %v2882 = vpop.f32.mrf.mxu0
        %v2883 = vadd.f32 0.0, %v2882
        %v2884 = vpop.f32.mrf.mxu0
        %2885 = vmatprep.mubr.f32.mxu0 0.0
        %2886 = vmatmul.mubr.f32.gmra.mxu0 %v2655
        %v2887 = vpop.f32.mrf.mxu0
        %v2888 = vadd.f32 0.0, %v2887
        %v2889 = vpop.f32.mrf.mxu0
        %2890 = vmatprep.mubr.f32.mxu0 0.0
        %2891 = vmatmul.mubr.f32.gmra.mxu0 %v2656
        %v2892 = vpop.f32.mrf.mxu0
        %v2893 = vadd.f32 0.0, %v2892
        %v2894 = vpop.f32.mrf.mxu0
        %2895 = vmatprep.mubr.f32.mxu0 0.0
        %2896 = vmatmul.mubr.f32.gmra.mxu0 %v2657
        %v2897 = vpop.f32.mrf.mxu0
        %v2898 = vadd.f32 0.0, %v2897
        %v2899 = vpop.f32.mrf.mxu0
        %2900 = vmatprep.mubr.f32.mxu0 0.0
        %2901 = vmatmul.mubr.f32.gmra.mxu0 %v2658
        %v2902 = vpop.f32.mrf.mxu0
        %v2903 = vadd.f32 0.0, %v2902
        %v2904 = vpop.f32.mrf.mxu0
        %2905 = vmatprep.mubr.f32.mxu0 0.0
        %2906 = vmatmul.mubr.f32.gmra.mxu0 %v2659
        %v2907 = vpop.f32.mrf.mxu0
        %v2908 = vadd.f32 0.0, %v2907
        %v2909 = vpop.f32.mrf.mxu0
        %2910 = vmatprep.mubr.f32.mxu0 0.0
        %2911 = vmatmul.mubr.f32.gmra.mxu0 %v2677
        %v2912 = vpop.f32.mrf.mxu0
        %v2913 = vadd.f32 0.0, %v2912
        %v2914 = vpop.f32.mrf.mxu0
        %2915 = vmatprep.mubr.f32.mxu0 0.0
        %2916 = vmatmul.mubr.f32.gmra.mxu0 %v2678
        %v2917 = vpop.f32.mrf.mxu0
        %v2918 = vadd.f32 0.0, %v2917
        %v2919 = vpop.f32.mrf.mxu0
        %2920 = vdwg.mxu0
        %2921 = vmatprep.subr.mxu0 0.0
        %2922 = vmatpush1.msra.mxu0 %v2676
        %2923 = vmatprep.subr.mxu0 0.0
        %2924 = vmatpush1.msra.mxu0 %v2675
        %2925 = vmatprep.subr.mxu0 0.0
        %2926 = vmatpush1.msra.mxu0 %v2674
        %2927 = vmatprep.subr.mxu0 0.0
        %2928 = vmatpush1.msra.mxu0 %v2673
        %2929 = vmatprep.subr.mxu0 0.0
        %2930 = vmatpush1.msra.mxu0 %v2672
        %2931 = vmatprep.subr.mxu0 0.0
        %2932 = vmatpush1.msra.mxu0 %v2671
        %2933 = vmatprep.subr.mxu0 0.0
        %2934 = vmatpush1.msra.mxu0 %v2670
        %2935 = vmatprep.subr.mxu0 0.0
        %2936 = vmatpush1.msra.mxu0 %v2669
        %2937 = vmatprep.subr.mxu0 0.0
        %2938 = vmatpush1.msra.mxu0 %v2668
        %2939 = vmatprep.subr.mxu0 0.0
        %2940 = vmatpush1.msra.mxu0 %v2667
        %2941 = vmatprep.subr.mxu0 0.0
        %2942 = vmatpush1.msra.mxu0 %v2666
        %2943 = vmatprep.subr.mxu0 0.0
        %2944 = vmatpush1.msra.mxu0 %v2665
        %2945 = vmatprep.subr.mxu0 0.0
        %2946 = vmatpush1.msra.mxu0 %v2664
        %2947 = vmatprep.subr.mxu0 0.0
        %2948 = vmatpush1.msra.mxu0 %v2663
        %2949 = vmatprep.subr.mxu0 0.0
        %2950 = vmatpush1.msra.mxu0 %v2662
        %2951 = vmatprep.subr.mxu0 0.0
        %2952 = vmatpush1.msra.mxu0 %v2661
        %2953 = vmatprep.subr.mxu0 0.0
        %2954 = vmatpush2.msra.mxu0 0.0
        %2955 = vmatprep.subr.mxu0 0.0
        %2956 = vmatpush2.msra.mxu0 0.0
        %2957 = vmatprep.subr.mxu0 0.0
        %2958 = vmatpush2.msra.mxu0 0.0
        %2959 = vmatprep.subr.mxu0 0.0
        %2960 = vmatpush2.msra.mxu0 0.0
        %2961 = vmatprep.subr.mxu0 0.0
        %2962 = vmatpush2.msra.mxu0 0.0
        %2963 = vmatprep.subr.mxu0 0.0
        %2964 = vmatpush2.msra.mxu0 0.0
        %2965 = vmatprep.subr.mxu0 0.0
        %2966 = vmatpush2.msra.mxu0 0.0
        %2967 = vmatprep.subr.mxu0 0.0
        %2968 = vmatpush2.msra.mxu0 0.0
        %2969 = vmatprep.subr.mxu0 0.0
        %2970 = vmatpush2.msra.mxu0 0.0
        %2971 = vmatprep.subr.mxu0 0.0
        %2972 = vmatpush2.msra.mxu0 0.0
        %2973 = vmatprep.subr.mxu0 0.0
        %2974 = vmatpush2.msra.mxu0 0.0
        %2975 = vmatprep.subr.mxu0 0.0
        %2976 = vmatpush2.msra.mxu0 0.0
        %2977 = vmatprep.subr.mxu0 0.0
        %2978 = vmatpush2.msra.mxu0 0.0
        %2979 = vmatprep.subr.mxu0 0.0
        %2980 = vmatpush2.msra.mxu0 0.0
        %2981 = vmatprep.subr.mxu0 0.0
        %2982 = vmatpush2.msra.mxu0 0.0
        %2983 = vmatprep.subr.mxu0 0.0
        %2984 = vmatpush2.msra.mxu0 0.0
        %2985 = vmatprep.mubr.f32.mxu0 0.0
        %2986 = vmatmul.mubr.f32.gmra.mxu0 %v2628
        %v2987 = vpop.f32.mrf.mxu0
        %v2988 = vadd.f32 %v2763, %v2987
        %v2989 = vpop.f32.mrf.mxu0
        %2990 = vmatprep.mubr.f32.mxu0 0.0
        %2991 = vmatmul.mubr.f32.gmra.mxu0 %v2629
        %v2992 = vpop.f32.mrf.mxu0
        %v2993 = vadd.f32 %v2768, %v2992
        %v2994 = vpop.f32.mrf.mxu0
        %2995 = vmatprep.mubr.f32.mxu0 0.0
        %2996 = vmatmul.mubr.f32.gmra.mxu0 %v2630
        %v2997 = vpop.f32.mrf.mxu0
        %v2998 = vadd.f32 %v2773, %v2997
        %v2999 = vpop.f32.mrf.mxu0
        %3000 = vmatprep.mubr.f32.mxu0 0.0
        %3001 = vmatmul.mubr.f32.gmra.mxu0 %v2631
        %v3002 = vpop.f32.mrf.mxu0
        %v3003 = vadd.f32 %v2778, %v3002
        %v3004 = vpop.f32.mrf.mxu0
        %3005 = vmatprep.mubr.f32.mxu0 0.0
        %3006 = vmatmul.mubr.f32.gmra.mxu0 %v2632
        %v3007 = vpop.f32.mrf.mxu0
        %v3008 = vadd.f32 %v2783, %v3007
        %v3009 = vpop.f32.mrf.mxu0
        %3010 = vmatprep.mubr.f32.mxu0 0.0
        %3011 = vmatmul.mubr.f32.gmra.mxu0 %v2633
        %v3012 = vpop.f32.mrf.mxu0
        %v3013 = vadd.f32 %v2788, %v3012
        %v3014 = vpop.f32.mrf.mxu0
        %3015 = vmatprep.mubr.f32.mxu0 0.0
        %3016 = vmatmul.mubr.f32.gmra.mxu0 %v2634
        %v3017 = vpop.f32.mrf.mxu0
        %v3018 = vadd.f32 %v2793, %v3017
        %v3019 = vpop.f32.mrf.mxu0
        %3020 = vmatprep.mubr.f32.mxu0 0.0
        %3021 = vmatmul.mubr.f32.gmra.mxu0 %v2635
        %v3022 = vpop.f32.mrf.mxu0
        %v3023 = vadd.f32 %v2798, %v3022
        %v3024 = vpop.f32.mrf.mxu0
        %3025 = vmatprep.mubr.f32.mxu0 0.0
        %3026 = vmatmul.mubr.f32.gmra.mxu0 %v2636
        %v3027 = vpop.f32.mrf.mxu0
        %v3028 = vadd.f32 %v2803, %v3027
        %v3029 = vpop.f32.mrf.mxu0
        %3030 = vmatprep.mubr.f32.mxu0 0.0
        %3031 = vmatmul.mubr.f32.gmra.mxu0 %v2637
        %v3032 = vpop.f32.mrf.mxu0
        %v3033 = vadd.f32 %v2808, %v3032
        %v3034 = vpop.f32.mrf.mxu0
        %3035 = vmatprep.mubr.f32.mxu0 0.0
        %3036 = vmatmul.mubr.f32.gmra.mxu0 %v2638
        %v3037 = vpop.f32.mrf.mxu0
        %v3038 = vadd.f32 %v2813, %v3037
        %v3039 = vpop.f32.mrf.mxu0
        %3040 = vmatprep.mubr.f32.mxu0 0.0
        %3041 = vmatmul.mubr.f32.gmra.mxu0 %v2639
        %v3042 = vpop.f32.mrf.mxu0
        %v3043 = vadd.f32 %v2818, %v3042
        %v3044 = vpop.f32.mrf.mxu0
        %3045 = vmatprep.mubr.f32.mxu0 0.0
        %3046 = vmatmul.mubr.f32.gmra.mxu0 %v2640
        %v3047 = vpop.f32.mrf.mxu0
        %v3048 = vadd.f32 %v2823, %v3047
        %v3049 = vpop.f32.mrf.mxu0
        %3050 = vmatprep.mubr.f32.mxu0 0.0
        %3051 = vmatmul.mubr.f32.gmra.mxu0 %v2641
        %v3052 = vpop.f32.mrf.mxu0
        %v3053 = vadd.f32 %v2828, %v3052
        %v3054 = vpop.f32.mrf.mxu0
        %3055 = vmatprep.mubr.f32.mxu0 0.0
        %3056 = vmatmul.mubr.f32.gmra.mxu0 %v2642
        %v3057 = vpop.f32.mrf.mxu0
        %v3058 = vadd.f32 %v2833, %v3057
        %v3059 = vpop.f32.mrf.mxu0
        %3060 = vmatprep.mubr.f32.mxu0 0.0
        %3061 = vmatmul.mubr.f32.gmra.mxu0 %v2643
        %v3062 = vpop.f32.mrf.mxu0
        %v3063 = vadd.f32 %v2838, %v3062
        %v3064 = vpop.f32.mrf.mxu0
        %3065 = vmatprep.mubr.f32.mxu0 0.0
        %3066 = vmatmul.mubr.f32.gmra.mxu0 %v2644
        %v3067 = vpop.f32.mrf.mxu0
        %v3068 = vadd.f32 %v2843, %v3067
        %v3069 = vpop.f32.mrf.mxu0
        %3070 = vmatprep.mubr.f32.mxu0 0.0
        %3071 = vmatmul.mubr.f32.gmra.mxu0 %v2645
        %v3072 = vpop.f32.mrf.mxu0
        %v3073 = vadd.f32 %v2848, %v3072
        %v3074 = vpop.f32.mrf.mxu0
        %3075 = vmatprep.mubr.f32.mxu0 0.0
        %3076 = vmatmul.mubr.f32.gmra.mxu0 %v2646
        %v3077 = vpop.f32.mrf.mxu0
        %v3078 = vadd.f32 %v2853, %v3077
        %v3079 = vpop.f32.mrf.mxu0
        %3080 = vmatprep.mubr.f32.mxu0 0.0
        %3081 = vmatmul.mubr.f32.gmra.mxu0 %v2647
        %v3082 = vpop.f32.mrf.mxu0
        %v3083 = vadd.f32 %v2858, %v3082
        %v3084 = vpop.f32.mrf.mxu0
        %3085 = vmatprep.mubr.f32.mxu0 0.0
        %3086 = vmatmul.mubr.f32.gmra.mxu0 %v2648
        %v3087 = vpop.f32.mrf.mxu0
        %v3088 = vadd.f32 %v2863, %v3087
        %v3089 = vpop.f32.mrf.mxu0
        %3090 = vmatprep.mubr.f32.mxu0 0.0
        %3091 = vmatmul.mubr.f32.gmra.mxu0 %v2649
        %v3092 = vpop.f32.mrf.mxu0
        %v3093 = vadd.f32 %v2868, %v3092
        %v3094 = vpop.f32.mrf.mxu0
        %3095 = vmatprep.mubr.f32.mxu0 0.0
        %3096 = vmatmul.mubr.f32.gmra.mxu0 %v2650
        %v3097 = vpop.f32.mrf.mxu0
        %v3098 = vadd.f32 %v2873, %v3097
        %v3099 = vpop.f32.mrf.mxu0
        %3100 = vmatprep.mubr.f32.mxu0 0.0
        %3101 = vmatmul.mubr.f32.gmra.mxu0 %v2651
        %v3102 = vpop.f32.mrf.mxu0
        %v3103 = vadd.f32 %v2878, %v3102
        %v3104 = vpop.f32.mrf.mxu0
        %3105 = vmatprep.mubr.f32.mxu0 0.0
        %3106 = vmatmul.mubr.f32.gmra.mxu0 %v2652
        %v3107 = vpop.f32.mrf.mxu0
        %v3108 = vadd.f32 %v2883, %v3107
        %v3109 = vpop.f32.mrf.mxu0
        %3110 = vmatprep.mubr.f32.mxu0 0.0
        %3111 = vmatmul.mubr.f32.gmra.mxu0 %v2653
        %v3112 = vpop.f32.mrf.mxu0
        %v3113 = vadd.f32 %v2888, %v3112
        %v3114 = vpop.f32.mrf.mxu0
        %3115 = vmatprep.mubr.f32.mxu0 0.0
        %3116 = vmatmul.mubr.f32.gmra.mxu0 %v2654
        %v3117 = vpop.f32.mrf.mxu0
        %v3118 = vadd.f32 %v2893, %v3117
        %v3119 = vpop.f32.mrf.mxu0
        %3120 = vmatprep.mubr.f32.mxu0 0.0
        %3121 = vmatmul.mubr.f32.gmra.mxu0 %v2655
        %v3122 = vpop.f32.mrf.mxu0
        %v3123 = vadd.f32 %v2898, %v3122
        %v3124 = vpop.f32.mrf.mxu0
        %3125 = vmatprep.mubr.f32.mxu0 0.0
        %3126 = vmatmul.mubr.f32.gmra.mxu0 %v2656
        %v3127 = vpop.f32.mrf.mxu0
        %v3128 = vadd.f32 %v2903, %v3127
        %v3129 = vpop.f32.mrf.mxu0
        %3130 = vmatprep.mubr.f32.mxu0 0.0
        %3131 = vmatmul.mubr.f32.gmra.mxu0 %v2657
        %v3132 = vpop.f32.mrf.mxu0
        %v3133 = vadd.f32 %v2908, %v3132
        %v3134 = vpop.f32.mrf.mxu0
        %3135 = vmatprep.mubr.f32.mxu0 0.0
        %3136 = vmatmul.mubr.f32.gmra.mxu0 %v2658
        %v3137 = vpop.f32.mrf.mxu0
        %v3138 = vadd.f32 %v2913, %v3137
        %v3139 = vpop.f32.mrf.mxu0
        %3140 = vmatprep.mubr.f32.mxu0 0.0
        %3141 = vmatmul.mubr.f32.gmra.mxu0 %v2659
        %v3142 = vpop.f32.mrf.mxu0
        %v3143 = vadd.f32 %v2918, %v3142
        %v3144 = vpop.f32.mrf.mxu0
        %3145 = vdwg.mxu0
        %v3146 = vld [vmem:[#allocation2 + $0x29] sm:$0xff]
        %v3147 = vld [vmem:[#allocation2 + $0x31] sm:$0xff]
        %v3148 = vld [vmem:[#allocation2 + $0x39] sm:$0xff]
        %v3149 = vld [vmem:[#allocation2 + $0x41] sm:$0xff]
        %v3150 = vld [vmem:[#allocation2 + $0x49] sm:$0xff]
        %v3151 = vld [vmem:[#allocation2 + $0x51] sm:$0xff]
        %v3152 = vld [vmem:[#allocation2 + $0x59] sm:$0xff]
        %v3153 = vld [vmem:[#allocation2 + $0x61] sm:$0xff]
        %v3154 = vld [vmem:[#allocation2 + $0x69] sm:$0xff]
        %v3155 = vld [vmem:[#allocation2 + $0x71] sm:$0xff]
        %v3156 = vld [vmem:[#allocation2 + $0x79] sm:$0xff]
        %v3157 = vld [vmem:[#allocation2 + $0x81] sm:$0xff]
        %v3158 = vld [vmem:[#allocation2 + $0x89] sm:$0xff]
        %v3159 = vld [vmem:[#allocation2 + $0x91] sm:$0xff]
        %v3160 = vld [vmem:[#allocation2 + $0x99] sm:$0xff]
        %v3161 = vld [vmem:[#allocation2 + $0xa1] sm:$0xff]
        %v3162 = vld [vmem:[#allocation2 + $0xa9] sm:$0xff]
        %v3163 = vld [vmem:[#allocation2 + $0xb1] sm:$0xff]
        %v3164 = vld [vmem:[#allocation2 + $0xb9] sm:$0xff]
        %v3165 = vld [vmem:[#allocation2 + $0xc1] sm:$0xff]
        %v3166 = vld [vmem:[#allocation2 + $0xc9] sm:$0xff]
        %v3167 = vld [vmem:[#allocation2 + $0xd1] sm:$0xff]
        %v3168 = vld [vmem:[#allocation2 + $0xd9] sm:$0xff]
        %v3169 = vld [vmem:[#allocation2 + $0xe1] sm:$0xff]
        %v3170 = vld [vmem:[#allocation2 + $0xe9] sm:$0xff]
        %v3171 = vld [vmem:[#allocation2 + $0xf1] sm:$0xff]
        %v3172 = vld [vmem:[#allocation2 + $0xf9] sm:$0xff]
        %v3173 = vld [vmem:[#allocation2 + $0x101] sm:$0xff]
        %v3174 = vld [vmem:[#allocation2 + $0x109] sm:$0xff]
        %v3175 = vld [vmem:[#allocation2 + $0x111] sm:$0xff]
        %v3176 = vld [vmem:[#allocation2 + $0x119] sm:$0xff]
        %v3177 = vld [vmem:[#allocation2 + $0x121] sm:$0xff]
        %s3178 = scalar_lea.vmem [#allocation6], 1024
        %v3179 = vld [vmem:[%s3178] sm:$0xff]
        %v3180 = vld [vmem:[%s3178 + $0x8] sm:$0xff]
        %v3181 = vld [vmem:[%s3178 + $0x10] sm:$0xff]
        %v3182 = vld [vmem:[%s3178 + $0x18] sm:$0xff]
        %v3183 = vld [vmem:[%s3178 + $0x20] sm:$0xff]
        %v3184 = vld [vmem:[%s3178 + $0x28] sm:$0xff]
        %v3185 = vld [vmem:[%s3178 + $0x30] sm:$0xff]
        %v3186 = vld [vmem:[%s3178 + $0x38] sm:$0xff]
        %v3187 = vld [vmem:[%s3178 + $0x40] sm:$0xff]
        %v3188 = vld [vmem:[%s3178 + $0x48] sm:$0xff]
        %v3189 = vld [vmem:[%s3178 + $0x50] sm:$0xff]
        %v3190 = vld [vmem:[%s3178 + $0x58] sm:$0xff]
        %v3191 = vld [vmem:[%s3178 + $0x60] sm:$0xff]
        %v3192 = vld [vmem:[%s3178 + $0x68] sm:$0xff]
        %v3193 = vld [vmem:[%s3178 + $0x70] sm:$0xff]
        %v3194 = vld [vmem:[%s3178 + $0x78] sm:$0xff]
        %3195 = vmatprep.subr.mxu0 0.0
        %3196 = vmatpush1.msra.mxu0 %v3194
        %3197 = vmatprep.subr.mxu0 0.0
        %3198 = vmatpush1.msra.mxu0 %v3193
        %3199 = vmatprep.subr.mxu0 0.0
        %3200 = vmatpush1.msra.mxu0 %v3192
        %3201 = vmatprep.subr.mxu0 0.0
        %3202 = vmatpush1.msra.mxu0 %v3191
        %3203 = vmatprep.subr.mxu0 0.0
        %3204 = vmatpush1.msra.mxu0 %v3190
        %3205 = vmatprep.subr.mxu0 0.0
        %3206 = vmatpush1.msra.mxu0 %v3189
        %3207 = vmatprep.subr.mxu0 0.0
        %3208 = vmatpush1.msra.mxu0 %v3188
        %3209 = vmatprep.subr.mxu0 0.0
        %3210 = vmatpush1.msra.mxu0 %v3187
        %3211 = vmatprep.subr.mxu0 0.0
        %3212 = vmatpush1.msra.mxu0 %v3186
        %3213 = vmatprep.subr.mxu0 0.0
        %3214 = vmatpush1.msra.mxu0 %v3185
        %3215 = vmatprep.subr.mxu0 0.0
        %3216 = vmatpush1.msra.mxu0 %v3184
        %3217 = vmatprep.subr.mxu0 0.0
        %3218 = vmatpush1.msra.mxu0 %v3183
        %3219 = vmatprep.subr.mxu0 0.0
        %3220 = vmatpush1.msra.mxu0 %v3182
        %3221 = vmatprep.subr.mxu0 0.0
        %3222 = vmatpush1.msra.mxu0 %v3181
        %3223 = vmatprep.subr.mxu0 0.0
        %3224 = vmatpush1.msra.mxu0 %v3180
        %3225 = vmatprep.subr.mxu0 0.0
        %3226 = vmatpush1.msra.mxu0 %v3179
        %3227 = vmatprep.subr.mxu0 0.0
        %3228 = vmatpush2.msra.mxu0 0.0
        %3229 = vmatprep.subr.mxu0 0.0
        %3230 = vmatpush2.msra.mxu0 0.0
        %3231 = vmatprep.subr.mxu0 0.0
        %3232 = vmatpush2.msra.mxu0 0.0
        %3233 = vmatprep.subr.mxu0 0.0
        %3234 = vmatpush2.msra.mxu0 0.0
        %3235 = vmatprep.subr.mxu0 0.0
        %3236 = vmatpush2.msra.mxu0 0.0
        %3237 = vmatprep.subr.mxu0 0.0
        %3238 = vmatpush2.msra.mxu0 0.0
        %3239 = vmatprep.subr.mxu0 0.0
        %3240 = vmatpush2.msra.mxu0 0.0
        %3241 = vmatprep.subr.mxu0 0.0
        %3242 = vmatpush2.msra.mxu0 0.0
        %3243 = vmatprep.subr.mxu0 0.0
        %3244 = vmatpush2.msra.mxu0 0.0
        %3245 = vmatprep.subr.mxu0 0.0
        %3246 = vmatpush2.msra.mxu0 0.0
        %3247 = vmatprep.subr.mxu0 0.0
        %3248 = vmatpush2.msra.mxu0 0.0
        %3249 = vmatprep.subr.mxu0 0.0
        %3250 = vmatpush2.msra.mxu0 0.0
        %3251 = vmatprep.subr.mxu0 0.0
        %3252 = vmatpush2.msra.mxu0 0.0
        %3253 = vmatprep.subr.mxu0 0.0
        %3254 = vmatpush2.msra.mxu0 0.0
        %3255 = vmatprep.subr.mxu0 0.0
        %3256 = vmatpush2.msra.mxu0 0.0
        %3257 = vmatprep.subr.mxu0 0.0
        %3258 = vmatpush2.msra.mxu0 0.0
        %3259 = vmatprep.mubr.f32.mxu0 0.0
        %3260 = vmatmul.mubr.f32.gmra.mxu0 %v3146
        %v3261 = vpop.f32.mrf.mxu0
        %v3262 = vadd.f32 0.0, %v3261
        %v3263 = vpop.f32.mrf.mxu0
        %3264 = vmatprep.mubr.f32.mxu0 0.0
        %3265 = vmatmul.mubr.f32.gmra.mxu0 %v3147
        %v3266 = vpop.f32.mrf.mxu0
        %v3267 = vadd.f32 0.0, %v3266
        %v3268 = vpop.f32.mrf.mxu0
        %3269 = vmatprep.mubr.f32.mxu0 0.0
        %3270 = vmatmul.mubr.f32.gmra.mxu0 %v3148
        %v3271 = vpop.f32.mrf.mxu0
        %v3272 = vadd.f32 0.0, %v3271
        %v3273 = vpop.f32.mrf.mxu0
        %3274 = vmatprep.mubr.f32.mxu0 0.0
        %3275 = vmatmul.mubr.f32.gmra.mxu0 %v3149
        %v3276 = vpop.f32.mrf.mxu0
        %v3277 = vadd.f32 0.0, %v3276
        %v3278 = vpop.f32.mrf.mxu0
        %3279 = vmatprep.mubr.f32.mxu0 0.0
        %3280 = vmatmul.mubr.f32.gmra.mxu0 %v3150
        %v3281 = vpop.f32.mrf.mxu0
        %v3282 = vadd.f32 0.0, %v3281
        %v3283 = vpop.f32.mrf.mxu0
        %3284 = vmatprep.mubr.f32.mxu0 0.0
        %3285 = vmatmul.mubr.f32.gmra.mxu0 %v3151
        %v3286 = vpop.f32.mrf.mxu0
        %v3287 = vadd.f32 0.0, %v3286
        %v3288 = vpop.f32.mrf.mxu0
        %3289 = vmatprep.mubr.f32.mxu0 0.0
        %3290 = vmatmul.mubr.f32.gmra.mxu0 %v3152
        %v3291 = vpop.f32.mrf.mxu0
        %v3292 = vadd.f32 0.0, %v3291
        %v3293 = vpop.f32.mrf.mxu0
        %3294 = vmatprep.mubr.f32.mxu0 0.0
        %3295 = vmatmul.mubr.f32.gmra.mxu0 %v3153
        %v3296 = vpop.f32.mrf.mxu0
        %v3297 = vadd.f32 0.0, %v3296
        %v3298 = vpop.f32.mrf.mxu0
        %3299 = vmatprep.mubr.f32.mxu0 0.0
        %3300 = vmatmul.mubr.f32.gmra.mxu0 %v3154
        %v3301 = vpop.f32.mrf.mxu0
        %v3302 = vadd.f32 0.0, %v3301
        %v3303 = vpop.f32.mrf.mxu0
        %3304 = vmatprep.mubr.f32.mxu0 0.0
        %3305 = vmatmul.mubr.f32.gmra.mxu0 %v3155
        %v3306 = vpop.f32.mrf.mxu0
        %v3307 = vadd.f32 0.0, %v3306
        %v3308 = vpop.f32.mrf.mxu0
        %3309 = vmatprep.mubr.f32.mxu0 0.0
        %3310 = vmatmul.mubr.f32.gmra.mxu0 %v3156
        %v3311 = vpop.f32.mrf.mxu0
        %v3312 = vadd.f32 0.0, %v3311
        %v3313 = vpop.f32.mrf.mxu0
        %3314 = vmatprep.mubr.f32.mxu0 0.0
        %3315 = vmatmul.mubr.f32.gmra.mxu0 %v3157
        %v3316 = vpop.f32.mrf.mxu0
        %v3317 = vadd.f32 0.0, %v3316
        %v3318 = vpop.f32.mrf.mxu0
        %3319 = vmatprep.mubr.f32.mxu0 0.0
        %3320 = vmatmul.mubr.f32.gmra.mxu0 %v3158
        %v3321 = vpop.f32.mrf.mxu0
        %v3322 = vadd.f32 0.0, %v3321
        %v3323 = vpop.f32.mrf.mxu0
        %3324 = vmatprep.mubr.f32.mxu0 0.0
        %3325 = vmatmul.mubr.f32.gmra.mxu0 %v3159
        %v3326 = vpop.f32.mrf.mxu0
        %v3327 = vadd.f32 0.0, %v3326
        %v3328 = vpop.f32.mrf.mxu0
        %3329 = vmatprep.mubr.f32.mxu0 0.0
        %3330 = vmatmul.mubr.f32.gmra.mxu0 %v3160
        %v3331 = vpop.f32.mrf.mxu0
        %v3332 = vadd.f32 0.0, %v3331
        %v3333 = vpop.f32.mrf.mxu0
        %3334 = vmatprep.mubr.f32.mxu0 0.0
        %3335 = vmatmul.mubr.f32.gmra.mxu0 %v3161
        %v3336 = vpop.f32.mrf.mxu0
        %v3337 = vadd.f32 0.0, %v3336
        %v3338 = vpop.f32.mrf.mxu0
        %3339 = vmatprep.mubr.f32.mxu0 0.0
        %3340 = vmatmul.mubr.f32.gmra.mxu0 %v3162
        %v3341 = vpop.f32.mrf.mxu0
        %v3342 = vadd.f32 0.0, %v3341
        %v3343 = vpop.f32.mrf.mxu0
        %3344 = vmatprep.mubr.f32.mxu0 0.0
        %3345 = vmatmul.mubr.f32.gmra.mxu0 %v3163
        %v3346 = vpop.f32.mrf.mxu0
        %v3347 = vadd.f32 0.0, %v3346
        %v3348 = vpop.f32.mrf.mxu0
        %3349 = vmatprep.mubr.f32.mxu0 0.0
        %3350 = vmatmul.mubr.f32.gmra.mxu0 %v3164
        %v3351 = vpop.f32.mrf.mxu0
        %v3352 = vadd.f32 0.0, %v3351
        %v3353 = vpop.f32.mrf.mxu0
        %3354 = vmatprep.mubr.f32.mxu0 0.0
        %3355 = vmatmul.mubr.f32.gmra.mxu0 %v3165
        %v3356 = vpop.f32.mrf.mxu0
        %v3357 = vadd.f32 0.0, %v3356
        %v3358 = vpop.f32.mrf.mxu0
        %3359 = vmatprep.mubr.f32.mxu0 0.0
        %3360 = vmatmul.mubr.f32.gmra.mxu0 %v3166
        %v3361 = vpop.f32.mrf.mxu0
        %v3362 = vadd.f32 0.0, %v3361
        %v3363 = vpop.f32.mrf.mxu0
        %3364 = vmatprep.mubr.f32.mxu0 0.0
        %3365 = vmatmul.mubr.f32.gmra.mxu0 %v3167
        %v3366 = vpop.f32.mrf.mxu0
        %v3367 = vadd.f32 0.0, %v3366
        %v3368 = vpop.f32.mrf.mxu0
        %3369 = vmatprep.mubr.f32.mxu0 0.0
        %3370 = vmatmul.mubr.f32.gmra.mxu0 %v3168
        %v3371 = vpop.f32.mrf.mxu0
        %v3372 = vadd.f32 0.0, %v3371
        %v3373 = vpop.f32.mrf.mxu0
        %3374 = vmatprep.mubr.f32.mxu0 0.0
        %3375 = vmatmul.mubr.f32.gmra.mxu0 %v3169
        %v3376 = vpop.f32.mrf.mxu0
        %v3377 = vadd.f32 0.0, %v3376
        %v3378 = vpop.f32.mrf.mxu0
        %3379 = vmatprep.mubr.f32.mxu0 0.0
        %3380 = vmatmul.mubr.f32.gmra.mxu0 %v3170
        %v3381 = vpop.f32.mrf.mxu0
        %v3382 = vadd.f32 0.0, %v3381
        %v3383 = vpop.f32.mrf.mxu0
        %3384 = vmatprep.mubr.f32.mxu0 0.0
        %3385 = vmatmul.mubr.f32.gmra.mxu0 %v3171
        %v3386 = vpop.f32.mrf.mxu0
        %v3387 = vadd.f32 0.0, %v3386
        %v3388 = vpop.f32.mrf.mxu0
        %3389 = vmatprep.mubr.f32.mxu0 0.0
        %3390 = vmatmul.mubr.f32.gmra.mxu0 %v3172
        %v3391 = vpop.f32.mrf.mxu0
        %v3392 = vadd.f32 0.0, %v3391
        %v3393 = vpop.f32.mrf.mxu0
        %3394 = vmatprep.mubr.f32.mxu0 0.0
        %3395 = vmatmul.mubr.f32.gmra.mxu0 %v3173
        %v3396 = vpop.f32.mrf.mxu0
        %v3397 = vadd.f32 0.0, %v3396
        %v3398 = vpop.f32.mrf.mxu0
        %3399 = vmatprep.mubr.f32.mxu0 0.0
        %3400 = vmatmul.mubr.f32.gmra.mxu0 %v3174
        %v3401 = vpop.f32.mrf.mxu0
        %v3402 = vadd.f32 0.0, %v3401
        %v3403 = vpop.f32.mrf.mxu0
        %3404 = vmatprep.mubr.f32.mxu0 0.0
        %3405 = vmatmul.mubr.f32.gmra.mxu0 %v3175
        %v3406 = vpop.f32.mrf.mxu0
        %v3407 = vadd.f32 0.0, %v3406
        %v3408 = vpop.f32.mrf.mxu0
        %3409 = vmatprep.mubr.f32.mxu0 0.0
        %3410 = vmatmul.mubr.f32.gmra.mxu0 %v3176
        %v3411 = vpop.f32.mrf.mxu0
        %v3412 = vadd.f32 0.0, %v3411
        %v3413 = vpop.f32.mrf.mxu0
        %3414 = vmatprep.mubr.f32.mxu0 0.0
        %3415 = vmatmul.mubr.f32.gmra.mxu0 %v3177
        %v3416 = vpop.f32.mrf.mxu0
        %v3417 = vadd.f32 0.0, %v3416
        %v3418 = vpop.f32.mrf.mxu0
        %3419 = vdwg.mxu0
        %v3420 = vadd.f32 %v2988, %v3262
        %v3421 = vadd.f32 %v2993, %v3267
        %v3422 = vadd.f32 %v2998, %v3272
        %v3423 = vadd.f32 %v3003, %v3277
        %v3424 = vadd.f32 %v3008, %v3282
        %v3425 = vadd.f32 %v3013, %v3287
        %v3426 = vadd.f32 %v3018, %v3292
        %v3427 = vadd.f32 %v3023, %v3297
        %v3428 = vadd.f32 %v3028, %v3302
        %v3429 = vadd.f32 %v3033, %v3307
        %v3430 = vadd.f32 %v3038, %v3312
        %v3431 = vadd.f32 %v3043, %v3317
        %v3432 = vadd.f32 %v3048, %v3322
        %v3433 = vadd.f32 %v3053, %v3327
        %v3434 = vadd.f32 %v3058, %v3332
        %v3435 = vadd.f32 %v3063, %v3337
        %v3436 = vadd.f32 %v3068, %v3342
        %v3437 = vadd.f32 %v3073, %v3347
        %v3438 = vadd.f32 %v3078, %v3352
        %v3439 = vadd.f32 %v3083, %v3357
        %v3440 = vadd.f32 %v3088, %v3362
        %v3441 = vadd.f32 %v3093, %v3367
        %v3442 = vadd.f32 %v3098, %v3372
        %v3443 = vadd.f32 %v3103, %v3377
        %v3444 = vadd.f32 %v3108, %v3382
        %v3445 = vadd.f32 %v3113, %v3387
        %v3446 = vadd.f32 %v3118, %v3392
        %v3447 = vadd.f32 %v3123, %v3397
        %v3448 = vadd.f32 %v3128, %v3402
        %v3449 = vadd.f32 %v3133, %v3407
        %v3450 = vadd.f32 %v3138, %v3412
        %v3451 = vadd.f32 %v3143, %v3417
        %v3452 = vld [vmem:[%s8] sm:$0xff]
        %v3453 = vld [vmem:[%s8 + $0x8] sm:$0xff]
        %v3454 = vld [vmem:[%s8 + $0x10] sm:$0xff]
        %v3455 = vld [vmem:[%s8 + $0x18] sm:$0xff]
        %v3456 = vld [vmem:[%s8 + $0x20] sm:$0xff]
        %v3457 = vld [vmem:[%s8 + $0x28] sm:$0xff]
        %v3458 = vld [vmem:[%s8 + $0x30] sm:$0xff]
        %v3459 = vld [vmem:[%s8 + $0x38] sm:$0xff]
        %v3460 = vld [vmem:[%s8 + $0x40] sm:$0xff]
        %v3461 = vld [vmem:[%s8 + $0x48] sm:$0xff]
        %v3462 = vld [vmem:[%s8 + $0x50] sm:$0xff]
        %v3463 = vld [vmem:[%s8 + $0x58] sm:$0xff]
        %v3464 = vld [vmem:[%s8 + $0x60] sm:$0xff]
        %v3465 = vld [vmem:[%s8 + $0x68] sm:$0xff]
        %v3466 = vld [vmem:[%s8 + $0x70] sm:$0xff]
        %v3467 = vld [vmem:[%s8 + $0x78] sm:$0xff]
        %v3468 = vld [vmem:[%s8 + $0x80] sm:$0xff]
        %v3469 = vld [vmem:[%s8 + $0x88] sm:$0xff]
        %v3470 = vld [vmem:[%s8 + $0x90] sm:$0xff]
        %v3471 = vld [vmem:[%s8 + $0x98] sm:$0xff]
        %v3472 = vld [vmem:[%s8 + $0xa0] sm:$0xff]
        %v3473 = vld [vmem:[%s8 + $0xa8] sm:$0xff]
        %v3474 = vld [vmem:[%s8 + $0xb0] sm:$0xff]
        %v3475 = vld [vmem:[%s8 + $0xb8] sm:$0xff]
        %v3476 = vld [vmem:[%s8 + $0xc0] sm:$0xff]
        %v3477 = vld [vmem:[%s8 + $0xc8] sm:$0xff]
        %v3478 = vld [vmem:[%s8 + $0xd0] sm:$0xff]
        %v3479 = vld [vmem:[%s8 + $0xd8] sm:$0xff]
        %v3480 = vld [vmem:[%s8 + $0xe0] sm:$0xff]
        %v3481 = vld [vmem:[%s8 + $0xe8] sm:$0xff]
        %v3482 = vld [vmem:[%s8 + $0xf0] sm:$0xff]
        %v3483 = vld [vmem:[%s8 + $0xf8] sm:$0xff]
        %3485 = vset.pattern.permute.xlu0 0
        %3486 = vperm.xlu0 %3485, %v3452
        %v3487 = vpop.permute.xlu0 %3486
        %3490 = vset.pattern.permute.xlu0 0
        %3491 = vperm.xlu0 %3490, %v3453
        %v3492 = vpop.permute.xlu0 %3491
        %3495 = vset.pattern.permute.xlu0 0
        %3496 = vperm.xlu0 %3495, %v3454
        %v3497 = vpop.permute.xlu0 %3496
        %3500 = vset.pattern.permute.xlu0 0
        %3501 = vperm.xlu0 %3500, %v3455
        %v3502 = vpop.permute.xlu0 %3501
        %3505 = vset.pattern.permute.xlu0 0
        %3506 = vperm.xlu0 %3505, %v3456
        %v3507 = vpop.permute.xlu0 %3506
        %3510 = vset.pattern.permute.xlu0 0
        %3511 = vperm.xlu0 %3510, %v3457
        %v3512 = vpop.permute.xlu0 %3511
        %3515 = vset.pattern.permute.xlu0 0
        %3516 = vperm.xlu0 %3515, %v3458
        %v3517 = vpop.permute.xlu0 %3516
        %3520 = vset.pattern.permute.xlu0 0
        %3521 = vperm.xlu0 %3520, %v3459
        %v3522 = vpop.permute.xlu0 %3521
        %3525 = vset.pattern.permute.xlu0 0
        %3526 = vperm.xlu0 %3525, %v3460
        %v3527 = vpop.permute.xlu0 %3526
        %3530 = vset.pattern.permute.xlu0 0
        %3531 = vperm.xlu0 %3530, %v3461
        %v3532 = vpop.permute.xlu0 %3531
        %3535 = vset.pattern.permute.xlu0 0
        %3536 = vperm.xlu0 %3535, %v3462
        %v3537 = vpop.permute.xlu0 %3536
        %3540 = vset.pattern.permute.xlu0 0
        %3541 = vperm.xlu0 %3540, %v3463
        %v3542 = vpop.permute.xlu0 %3541
        %3545 = vset.pattern.permute.xlu0 0
        %3546 = vperm.xlu0 %3545, %v3464
        %v3547 = vpop.permute.xlu0 %3546
        %3550 = vset.pattern.permute.xlu0 0
        %3551 = vperm.xlu0 %3550, %v3465
        %v3552 = vpop.permute.xlu0 %3551
        %3555 = vset.pattern.permute.xlu0 0
        %3556 = vperm.xlu0 %3555, %v3466
        %v3557 = vpop.permute.xlu0 %3556
        %3560 = vset.pattern.permute.xlu0 0
        %3561 = vperm.xlu0 %3560, %v3467
        %v3562 = vpop.permute.xlu0 %3561
        %3565 = vset.pattern.permute.xlu0 0
        %3566 = vperm.xlu0 %3565, %v3468
        %v3567 = vpop.permute.xlu0 %3566
        %3570 = vset.pattern.permute.xlu0 0
        %3571 = vperm.xlu0 %3570, %v3469
        %v3572 = vpop.permute.xlu0 %3571
        %3575 = vset.pattern.permute.xlu0 0
        %3576 = vperm.xlu0 %3575, %v3470
        %v3577 = vpop.permute.xlu0 %3576
        %3580 = vset.pattern.permute.xlu0 0
        %3581 = vperm.xlu0 %3580, %v3471
        %v3582 = vpop.permute.xlu0 %3581
        %3585 = vset.pattern.permute.xlu0 0
        %3586 = vperm.xlu0 %3585, %v3472
        %v3587 = vpop.permute.xlu0 %3586
        %3590 = vset.pattern.permute.xlu0 0
        %3591 = vperm.xlu0 %3590, %v3473
        %v3592 = vpop.permute.xlu0 %3591
        %3595 = vset.pattern.permute.xlu0 0
        %3596 = vperm.xlu0 %3595, %v3474
        %v3597 = vpop.permute.xlu0 %3596
        %3600 = vset.pattern.permute.xlu0 0
        %3601 = vperm.xlu0 %3600, %v3475
        %v3602 = vpop.permute.xlu0 %3601
        %3605 = vset.pattern.permute.xlu0 0
        %3606 = vperm.xlu0 %3605, %v3476
        %v3607 = vpop.permute.xlu0 %3606
        %3610 = vset.pattern.permute.xlu0 0
        %3611 = vperm.xlu0 %3610, %v3477
        %v3612 = vpop.permute.xlu0 %3611
        %3615 = vset.pattern.permute.xlu0 0
        %3616 = vperm.xlu0 %3615, %v3478
        %v3617 = vpop.permute.xlu0 %3616
        %3620 = vset.pattern.permute.xlu0 0
        %3621 = vperm.xlu0 %3620, %v3479
        %v3622 = vpop.permute.xlu0 %3621
        %3625 = vset.pattern.permute.xlu0 0
        %3626 = vperm.xlu0 %3625, %v3480
        %v3627 = vpop.permute.xlu0 %3626
        %3630 = vset.pattern.permute.xlu0 0
        %3631 = vperm.xlu0 %3630, %v3481
        %v3632 = vpop.permute.xlu0 %3631
        %3635 = vset.pattern.permute.xlu0 0
        %3636 = vperm.xlu0 %3635, %v3482
        %v3637 = vpop.permute.xlu0 %3636
        %3640 = vset.pattern.permute.xlu0 0
        %3641 = vperm.xlu0 %3640, %v3483
        %v3642 = vpop.permute.xlu0 %3641
        %v3644 = vmul.f32 %v3420, %v3487
        %v3645 = vmul.f32 %v3421, %v3492
        %v3646 = vmul.f32 %v3422, %v3497
        %v3647 = vmul.f32 %v3423, %v3502
        %v3648 = vmul.f32 %v3424, %v3507
        %v3649 = vmul.f32 %v3425, %v3512
        %v3650 = vmul.f32 %v3426, %v3517
        %v3651 = vmul.f32 %v3427, %v3522
        %v3652 = vmul.f32 %v3428, %v3527
        %v3653 = vmul.f32 %v3429, %v3532
        %v3654 = vmul.f32 %v3430, %v3537
        %v3655 = vmul.f32 %v3431, %v3542
        %v3656 = vmul.f32 %v3432, %v3547
        %v3657 = vmul.f32 %v3433, %v3552
        %v3658 = vmul.f32 %v3434, %v3557
        %v3659 = vmul.f32 %v3435, %v3562
        %v3660 = vmul.f32 %v3436, %v3567
        %v3661 = vmul.f32 %v3437, %v3572
        %v3662 = vmul.f32 %v3438, %v3577
        %v3663 = vmul.f32 %v3439, %v3582
        %v3664 = vmul.f32 %v3440, %v3587
        %v3665 = vmul.f32 %v3441, %v3592
        %v3666 = vmul.f32 %v3442, %v3597
        %v3667 = vmul.f32 %v3443, %v3602
        %v3668 = vmul.f32 %v3444, %v3607
        %v3669 = vmul.f32 %v3445, %v3612
        %v3670 = vmul.f32 %v3446, %v3617
        %v3671 = vmul.f32 %v3447, %v3622
        %v3672 = vmul.f32 %v3448, %v3627
        %v3673 = vmul.f32 %v3449, %v3632
        %v3674 = vmul.f32 %v3450, %v3637
        %v3675 = vmul.f32 %v3451, %v3642
        %v3676 = vadd.f32 %v2596, %v3644
        %v3677 = vadd.f32 %v2597, %v3645
        %v3678 = vadd.f32 %v2598, %v3646
        %v3679 = vadd.f32 %v2599, %v3647
        %v3680 = vadd.f32 %v2600, %v3648
        %v3681 = vadd.f32 %v2601, %v3649
        %v3682 = vadd.f32 %v2602, %v3650
        %v3683 = vadd.f32 %v2603, %v3651
        %v3684 = vadd.f32 %v2604, %v3652
        %v3685 = vadd.f32 %v2605, %v3653
        %v3686 = vadd.f32 %v2606, %v3654
        %v3687 = vadd.f32 %v2607, %v3655
        %v3688 = vadd.f32 %v2608, %v3656
        %v3689 = vadd.f32 %v2609, %v3657
        %v3690 = vadd.f32 %v2610, %v3658
        %v3691 = vadd.f32 %v2611, %v3659
        %v3692 = vadd.f32 %v2612, %v3660
        %v3693 = vadd.f32 %v2613, %v3661
        %v3694 = vadd.f32 %v2614, %v3662
        %v3695 = vadd.f32 %v2615, %v3663
        %v3696 = vadd.f32 %v2616, %v3664
        %v3697 = vadd.f32 %v2617, %v3665
        %v3698 = vadd.f32 %v2618, %v3666
        %v3699 = vadd.f32 %v2619, %v3667
        %v3700 = vadd.f32 %v2620, %v3668
        %v3701 = vadd.f32 %v2621, %v3669
        %v3702 = vadd.f32 %v2622, %v3670
        %v3703 = vadd.f32 %v2623, %v3671
        %v3704 = vadd.f32 %v2624, %v3672
        %v3705 = vadd.f32 %v2625, %v3673
        %v3706 = vadd.f32 %v2626, %v3674
        %v3707 = vadd.f32 %v2627, %v3675
        %v3708 = vld [vmem:[%s4] sm:$0x1]
        %v3710 = vlaneseq
        %v3711 = vshrl.u32 %v3710, 7
        %v3712 = vsub.s32 0, %v3711
        %v3713 = vrot.slane %v3708, %v3712
        %v3715 = vadd.f32 %v3676, %v3713
        %v3716 = vadd.f32 %v3677, %v3713
        %v3717 = vadd.f32 %v3678, %v3713
        %v3718 = vadd.f32 %v3679, %v3713
        %v3719 = vadd.f32 %v3680, %v3713
        %v3720 = vadd.f32 %v3681, %v3713
        %v3721 = vadd.f32 %v3682, %v3713
        %v3722 = vadd.f32 %v3683, %v3713
        %v3723 = vadd.f32 %v3684, %v3713
        %v3724 = vadd.f32 %v3685, %v3713
        %v3725 = vadd.f32 %v3686, %v3713
        %v3726 = vadd.f32 %v3687, %v3713
        %v3727 = vadd.f32 %v3688, %v3713
        %v3728 = vadd.f32 %v3689, %v3713
        %v3729 = vadd.f32 %v3690, %v3713
        %v3730 = vadd.f32 %v3691, %v3713
        %v3731 = vadd.f32 %v3692, %v3713
        %v3732 = vadd.f32 %v3693, %v3713
        %v3733 = vadd.f32 %v3694, %v3713
        %v3734 = vadd.f32 %v3695, %v3713
        %v3735 = vadd.f32 %v3696, %v3713
        %v3736 = vadd.f32 %v3697, %v3713
        %v3737 = vadd.f32 %v3698, %v3713
        %v3738 = vadd.f32 %v3699, %v3713
        %v3739 = vadd.f32 %v3700, %v3713
        %v3740 = vadd.f32 %v3701, %v3713
        %v3741 = vadd.f32 %v3702, %v3713
        %v3742 = vadd.f32 %v3703, %v3713
        %v3743 = vadd.f32 %v3704, %v3713
        %v3744 = vadd.f32 %v3705, %v3713
        %v3745 = vadd.f32 %v3706, %v3713
        %v3746 = vadd.f32 %v3707, %v3713
        %v3747 = vmax.f32 %v3715, 0.0
        %v3748 = vmax.f32 %v3716, 0.0
        %v3749 = vmax.f32 %v3717, 0.0
        %v3750 = vmax.f32 %v3718, 0.0
        %v3751 = vmax.f32 %v3719, 0.0
        %v3752 = vmax.f32 %v3720, 0.0
        %v3753 = vmax.f32 %v3721, 0.0
        %v3754 = vmax.f32 %v3722, 0.0
        %v3755 = vmax.f32 %v3723, 0.0
        %v3756 = vmax.f32 %v3724, 0.0
        %v3757 = vmax.f32 %v3725, 0.0
        %v3758 = vmax.f32 %v3726, 0.0
        %v3759 = vmax.f32 %v3727, 0.0
        %v3760 = vmax.f32 %v3728, 0.0
        %v3761 = vmax.f32 %v3729, 0.0
        %v3762 = vmax.f32 %v3730, 0.0
        %v3763 = vmax.f32 %v3731, 0.0
        %v3764 = vmax.f32 %v3732, 0.0
        %v3765 = vmax.f32 %v3733, 0.0
        %v3766 = vmax.f32 %v3734, 0.0
        %v3767 = vmax.f32 %v3735, 0.0
        %v3768 = vmax.f32 %v3736, 0.0
        %v3769 = vmax.f32 %v3737, 0.0
        %v3770 = vmax.f32 %v3738, 0.0
        %v3771 = vmax.f32 %v3739, 0.0
        %v3772 = vmax.f32 %v3740, 0.0
        %v3773 = vmax.f32 %v3741, 0.0
        %v3774 = vmax.f32 %v3742, 0.0
        %v3775 = vmax.f32 %v3743, 0.0
        %v3776 = vmax.f32 %v3744, 0.0
        %v3777 = vmax.f32 %v3745, 0.0
        %v3778 = vmax.f32 %v3746, 0.0
        %v3779 = vld [vmem:[#allocation8] sm:$0xff]
        %v3780 = vld [vmem:[#allocation8 + $0x8] sm:$0xff]
        %v3781 = vld [vmem:[#allocation8 + $0x10] sm:$0xff]
        %v3782 = vld [vmem:[#allocation8 + $0x18] sm:$0xff]
        %v3783 = vld [vmem:[#allocation8 + $0x20] sm:$0xff]
        %v3784 = vld [vmem:[#allocation8 + $0x28] sm:$0xff]
        %v3785 = vld [vmem:[#allocation8 + $0x30] sm:$0xff]
        %v3786 = vld [vmem:[#allocation8 + $0x38] sm:$0xff]
        %v3787 = vld [vmem:[#allocation8 + $0x40] sm:$0xff]
        %v3788 = vld [vmem:[#allocation8 + $0x48] sm:$0xff]
        %v3789 = vld [vmem:[#allocation8 + $0x50] sm:$0xff]
        %v3790 = vld [vmem:[#allocation8 + $0x58] sm:$0xff]
        %v3791 = vld [vmem:[#allocation8 + $0x60] sm:$0xff]
        %v3792 = vld [vmem:[#allocation8 + $0x68] sm:$0xff]
        %v3793 = vld [vmem:[#allocation8 + $0x70] sm:$0xff]
        %v3794 = vld [vmem:[#allocation8 + $0x78] sm:$0xff]
        %v3795 = vld [vmem:[%s6] sm:$0x1]
        %v3797 = vlaneseq
        %v3798 = vshrl.u32 %v3797, 7
        %v3799 = vsub.s32 0, %v3798
        %v3800 = vrot.slane %v3795, %v3799
        %3802 = vmatprep.subr.mxu0 0.0
        %3803 = vmatpush1.msra.mxu0 %v3794
        %3804 = vmatprep.subr.mxu0 0.0
        %3805 = vmatpush1.msra.mxu0 %v3793
        %3806 = vmatprep.subr.mxu0 0.0
        %3807 = vmatpush1.msra.mxu0 %v3792
        %3808 = vmatprep.subr.mxu0 0.0
        %3809 = vmatpush1.msra.mxu0 %v3791
        %3810 = vmatprep.subr.mxu0 0.0
        %3811 = vmatpush1.msra.mxu0 %v3790
        %3812 = vmatprep.subr.mxu0 0.0
        %3813 = vmatpush1.msra.mxu0 %v3789
        %3814 = vmatprep.subr.mxu0 0.0
        %3815 = vmatpush1.msra.mxu0 %v3788
        %3816 = vmatprep.subr.mxu0 0.0
        %3817 = vmatpush1.msra.mxu0 %v3787
        %3818 = vmatprep.subr.mxu0 0.0
        %3819 = vmatpush1.msra.mxu0 %v3786
        %3820 = vmatprep.subr.mxu0 0.0
        %3821 = vmatpush1.msra.mxu0 %v3785
        %3822 = vmatprep.subr.mxu0 0.0
        %3823 = vmatpush1.msra.mxu0 %v3784
        %3824 = vmatprep.subr.mxu0 0.0
        %3825 = vmatpush1.msra.mxu0 %v3783
        %3826 = vmatprep.subr.mxu0 0.0
        %3827 = vmatpush1.msra.mxu0 %v3782
        %3828 = vmatprep.subr.mxu0 0.0
        %3829 = vmatpush1.msra.mxu0 %v3781
        %3830 = vmatprep.subr.mxu0 0.0
        %3831 = vmatpush1.msra.mxu0 %v3780
        %3832 = vmatprep.subr.mxu0 0.0
        %3833 = vmatpush1.msra.mxu0 %v3779
        %3834 = vmatprep.subr.mxu0 0.0
        %3835 = vmatpush2.msra.mxu0 0.0
        %3836 = vmatprep.subr.mxu0 0.0
        %3837 = vmatpush2.msra.mxu0 0.0
        %3838 = vmatprep.subr.mxu0 0.0
        %3839 = vmatpush2.msra.mxu0 0.0
        %3840 = vmatprep.subr.mxu0 0.0
        %3841 = vmatpush2.msra.mxu0 0.0
        %3842 = vmatprep.subr.mxu0 0.0
        %3843 = vmatpush2.msra.mxu0 0.0
        %3844 = vmatprep.subr.mxu0 0.0
        %3845 = vmatpush2.msra.mxu0 0.0
        %3846 = vmatprep.subr.mxu0 0.0
        %3847 = vmatpush2.msra.mxu0 0.0
        %3848 = vmatprep.subr.mxu0 0.0
        %3849 = vmatpush2.msra.mxu0 0.0
        %3850 = vmatprep.subr.mxu0 0.0
        %3851 = vmatpush2.msra.mxu0 0.0
        %3852 = vmatprep.subr.mxu0 0.0
        %3853 = vmatpush2.msra.mxu0 0.0
        %3854 = vmatprep.subr.mxu0 0.0
        %3855 = vmatpush2.msra.mxu0 0.0
        %3856 = vmatprep.subr.mxu0 0.0
        %3857 = vmatpush2.msra.mxu0 0.0
        %3858 = vmatprep.subr.mxu0 0.0
        %3859 = vmatpush2.msra.mxu0 0.0
        %3860 = vmatprep.subr.mxu0 0.0
        %3861 = vmatpush2.msra.mxu0 0.0
        %3862 = vmatprep.subr.mxu0 0.0
        %3863 = vmatpush2.msra.mxu0 0.0
        %3864 = vmatprep.subr.mxu0 0.0
        %3865 = vmatpush2.msra.mxu0 0.0
        %3866 = vmatprep.mubr.f32.mxu0 0.0
        %3867 = vmatmul.mubr.f32.gmra.mxu0 %v3747
        %v3868 = vpop.f32.mrf.mxu0
        %v3869 = vadd.f32 %v3800, %v3868
        %v3870 = vpop.f32.mrf.mxu0
        %3871 = vmatprep.mubr.f32.mxu0 0.0
        %3872 = vmatmul.mubr.f32.gmra.mxu0 %v3748
        %v3873 = vpop.f32.mrf.mxu0
        %v3874 = vadd.f32 %v3800, %v3873
        %v3875 = vpop.f32.mrf.mxu0
        %3876 = vmatprep.mubr.f32.mxu0 0.0
        %3877 = vmatmul.mubr.f32.gmra.mxu0 %v3749
        %v3878 = vpop.f32.mrf.mxu0
        %v3879 = vadd.f32 %v3800, %v3878
        %v3880 = vpop.f32.mrf.mxu0
        %3881 = vmatprep.mubr.f32.mxu0 0.0
        %3882 = vmatmul.mubr.f32.gmra.mxu0 %v3750
        %v3883 = vpop.f32.mrf.mxu0
        %v3884 = vadd.f32 %v3800, %v3883
        %v3885 = vpop.f32.mrf.mxu0
        %3886 = vmatprep.mubr.f32.mxu0 0.0
        %3887 = vmatmul.mubr.f32.gmra.mxu0 %v3751
        %v3888 = vpop.f32.mrf.mxu0
        %v3889 = vadd.f32 %v3800, %v3888
        %v3890 = vpop.f32.mrf.mxu0
        %3891 = vmatprep.mubr.f32.mxu0 0.0
        %3892 = vmatmul.mubr.f32.gmra.mxu0 %v3752
        %v3893 = vpop.f32.mrf.mxu0
        %v3894 = vadd.f32 %v3800, %v3893
        %v3895 = vpop.f32.mrf.mxu0
        %3896 = vmatprep.mubr.f32.mxu0 0.0
        %3897 = vmatmul.mubr.f32.gmra.mxu0 %v3753
        %v3898 = vpop.f32.mrf.mxu0
        %v3899 = vadd.f32 %v3800, %v3898
        %v3900 = vpop.f32.mrf.mxu0
        %3901 = vmatprep.mubr.f32.mxu0 0.0
        %3902 = vmatmul.mubr.f32.gmra.mxu0 %v3754
        %v3903 = vpop.f32.mrf.mxu0
        %v3904 = vadd.f32 %v3800, %v3903
        %v3905 = vpop.f32.mrf.mxu0
        %3906 = vmatprep.mubr.f32.mxu0 0.0
        %3907 = vmatmul.mubr.f32.gmra.mxu0 %v3755
        %v3908 = vpop.f32.mrf.mxu0
        %v3909 = vadd.f32 %v3800, %v3908
        %v3910 = vpop.f32.mrf.mxu0
        %3911 = vmatprep.mubr.f32.mxu0 0.0
        %3912 = vmatmul.mubr.f32.gmra.mxu0 %v3756
        %v3913 = vpop.f32.mrf.mxu0
        %v3914 = vadd.f32 %v3800, %v3913
        %v3915 = vpop.f32.mrf.mxu0
        %3916 = vmatprep.mubr.f32.mxu0 0.0
        %3917 = vmatmul.mubr.f32.gmra.mxu0 %v3757
        %v3918 = vpop.f32.mrf.mxu0
        %v3919 = vadd.f32 %v3800, %v3918
        %v3920 = vpop.f32.mrf.mxu0
        %3921 = vmatprep.mubr.f32.mxu0 0.0
        %3922 = vmatmul.mubr.f32.gmra.mxu0 %v3758
        %v3923 = vpop.f32.mrf.mxu0
        %v3924 = vadd.f32 %v3800, %v3923
        %v3925 = vpop.f32.mrf.mxu0
        %3926 = vmatprep.mubr.f32.mxu0 0.0
        %3927 = vmatmul.mubr.f32.gmra.mxu0 %v3759
        %v3928 = vpop.f32.mrf.mxu0
        %v3929 = vadd.f32 %v3800, %v3928
        %v3930 = vpop.f32.mrf.mxu0
        %3931 = vmatprep.mubr.f32.mxu0 0.0
        %3932 = vmatmul.mubr.f32.gmra.mxu0 %v3760
        %v3933 = vpop.f32.mrf.mxu0
        %v3934 = vadd.f32 %v3800, %v3933
        %v3935 = vpop.f32.mrf.mxu0
        %3936 = vmatprep.mubr.f32.mxu0 0.0
        %3937 = vmatmul.mubr.f32.gmra.mxu0 %v3761
        %v3938 = vpop.f32.mrf.mxu0
        %v3939 = vadd.f32 %v3800, %v3938
        %v3940 = vpop.f32.mrf.mxu0
        %3941 = vmatprep.mubr.f32.mxu0 0.0
        %3942 = vmatmul.mubr.f32.gmra.mxu0 %v3762
        %v3943 = vpop.f32.mrf.mxu0
        %v3944 = vadd.f32 %v3800, %v3943
        %v3945 = vpop.f32.mrf.mxu0
        %3946 = vmatprep.mubr.f32.mxu0 0.0
        %3947 = vmatmul.mubr.f32.gmra.mxu0 %v3763
        %v3948 = vpop.f32.mrf.mxu0
        %v3949 = vadd.f32 %v3800, %v3948
        %v3950 = vpop.f32.mrf.mxu0
        %3951 = vmatprep.mubr.f32.mxu0 0.0
        %3952 = vmatmul.mubr.f32.gmra.mxu0 %v3764
        %v3953 = vpop.f32.mrf.mxu0
        %v3954 = vadd.f32 %v3800, %v3953
        %v3955 = vpop.f32.mrf.mxu0
        %3956 = vmatprep.mubr.f32.mxu0 0.0
        %3957 = vmatmul.mubr.f32.gmra.mxu0 %v3765
        %v3958 = vpop.f32.mrf.mxu0
        %v3959 = vadd.f32 %v3800, %v3958
        %v3960 = vpop.f32.mrf.mxu0
        %3961 = vmatprep.mubr.f32.mxu0 0.0
        %3962 = vmatmul.mubr.f32.gmra.mxu0 %v3766
        %v3963 = vpop.f32.mrf.mxu0
        %v3964 = vadd.f32 %v3800, %v3963
        %v3965 = vpop.f32.mrf.mxu0
        %3966 = vmatprep.mubr.f32.mxu0 0.0
        %3967 = vmatmul.mubr.f32.gmra.mxu0 %v3767
        %v3968 = vpop.f32.mrf.mxu0
        %v3969 = vadd.f32 %v3800, %v3968
        %v3970 = vpop.f32.mrf.mxu0
        %3971 = vmatprep.mubr.f32.mxu0 0.0
        %3972 = vmatmul.mubr.f32.gmra.mxu0 %v3768
        %v3973 = vpop.f32.mrf.mxu0
        %v3974 = vadd.f32 %v3800, %v3973
        %v3975 = vpop.f32.mrf.mxu0
        %3976 = vmatprep.mubr.f32.mxu0 0.0
        %3977 = vmatmul.mubr.f32.gmra.mxu0 %v3769
        %v3978 = vpop.f32.mrf.mxu0
        %v3979 = vadd.f32 %v3800, %v3978
        %v3980 = vpop.f32.mrf.mxu0
        %3981 = vmatprep.mubr.f32.mxu0 0.0
        %3982 = vmatmul.mubr.f32.gmra.mxu0 %v3770
        %v3983 = vpop.f32.mrf.mxu0
        %v3984 = vadd.f32 %v3800, %v3983
        %v3985 = vpop.f32.mrf.mxu0
        %3986 = vmatprep.mubr.f32.mxu0 0.0
        %3987 = vmatmul.mubr.f32.gmra.mxu0 %v3771
        %v3988 = vpop.f32.mrf.mxu0
        %v3989 = vadd.f32 %v3800, %v3988
        %v3990 = vpop.f32.mrf.mxu0
        %3991 = vmatprep.mubr.f32.mxu0 0.0
        %3992 = vmatmul.mubr.f32.gmra.mxu0 %v3772
        %v3993 = vpop.f32.mrf.mxu0
        %v3994 = vadd.f32 %v3800, %v3993
        %v3995 = vpop.f32.mrf.mxu0
        %3996 = vmatprep.mubr.f32.mxu0 0.0
        %3997 = vmatmul.mubr.f32.gmra.mxu0 %v3773
        %v3998 = vpop.f32.mrf.mxu0
        %v3999 = vadd.f32 %v3800, %v3998
        %v4000 = vpop.f32.mrf.mxu0
        %4001 = vmatprep.mubr.f32.mxu0 0.0
        %4002 = vmatmul.mubr.f32.gmra.mxu0 %v3774
        %v4003 = vpop.f32.mrf.mxu0
        %v4004 = vadd.f32 %v3800, %v4003
        %v4005 = vpop.f32.mrf.mxu0
        %4006 = vmatprep.mubr.f32.mxu0 0.0
        %4007 = vmatmul.mubr.f32.gmra.mxu0 %v3775
        %v4008 = vpop.f32.mrf.mxu0
        %v4009 = vadd.f32 %v3800, %v4008
        %v4010 = vpop.f32.mrf.mxu0
        %4011 = vmatprep.mubr.f32.mxu0 0.0
        %4012 = vmatmul.mubr.f32.gmra.mxu0 %v3776
        %v4013 = vpop.f32.mrf.mxu0
        %v4014 = vadd.f32 %v3800, %v4013
        %v4015 = vpop.f32.mrf.mxu0
        %4016 = vmatprep.mubr.f32.mxu0 0.0
        %4017 = vmatmul.mubr.f32.gmra.mxu0 %v3777
        %v4018 = vpop.f32.mrf.mxu0
        %v4019 = vadd.f32 %v3800, %v4018
        %v4020 = vpop.f32.mrf.mxu0
        %4021 = vmatprep.mubr.f32.mxu0 0.0
        %4022 = vmatmul.mubr.f32.gmra.mxu0 %v3778
        %v4023 = vpop.f32.mrf.mxu0
        %v4024 = vadd.f32 %v3800, %v4023
        %v4025 = vpop.f32.mrf.mxu0
        %4026 = vdwg.mxu0
        %v4027 = vadd.f32 %v3869, %v381
        %v4028 = vadd.f32 %v3874, %v382
        %v4029 = vadd.f32 %v3879, %v383
        %v4030 = vadd.f32 %v3884, %v384
        %v4031 = vadd.f32 %v3889, %v385
        %v4032 = vadd.f32 %v3894, %v386
        %v4033 = vadd.f32 %v3899, %v387
        %v4034 = vadd.f32 %v3904, %v388
        %v4035 = vadd.f32 %v3909, %v389
        %v4036 = vadd.f32 %v3914, %v390
        %v4037 = vadd.f32 %v3919, %v391
        %v4038 = vadd.f32 %v3924, %v392
        %v4039 = vadd.f32 %v3929, %v393
        %v4040 = vadd.f32 %v3934, %v394
        %v4041 = vadd.f32 %v3939, %v395
        %v4042 = vadd.f32 %v3944, %v396
        %v4043 = vadd.f32 %v3949, %v397
        %v4044 = vadd.f32 %v3954, %v398
        %v4045 = vadd.f32 %v3959, %v399
        %v4046 = vadd.f32 %v3964, %v400
        %v4047 = vadd.f32 %v3969, %v401
        %v4048 = vadd.f32 %v3974, %v402
        %v4049 = vadd.f32 %v3979, %v403
        %v4050 = vadd.f32 %v3984, %v404
        %v4051 = vadd.f32 %v3989, %v405
        %v4052 = vadd.f32 %v3994, %v406
        %v4053 = vadd.f32 %v3999, %v407
        %v4054 = vadd.f32 %v4004, %v408
        %v4055 = vadd.f32 %v4009, %v409
        %v4056 = vadd.f32 %v4014, %v410
        %v4057 = vadd.f32 %v4019, %v411
        %v4058 = vadd.f32 %v4024, %v412
        %v4059 = vmax.f32 %v4027, 0.0
        %v4060 = vmax.f32 %v4028, 0.0
        %v4061 = vmax.f32 %v4029, 0.0
        %v4062 = vmax.f32 %v4030, 0.0
        %v4063 = vmax.f32 %v4031, 0.0
        %v4064 = vmax.f32 %v4032, 0.0
        %v4065 = vmax.f32 %v4033, 0.0
        %v4066 = vmax.f32 %v4034, 0.0
        %v4067 = vmax.f32 %v4035, 0.0
        %v4068 = vmax.f32 %v4036, 0.0
        %v4069 = vmax.f32 %v4037, 0.0
        %v4070 = vmax.f32 %v4038, 0.0
        %v4071 = vmax.f32 %v4039, 0.0
        %v4072 = vmax.f32 %v4040, 0.0
        %v4073 = vmax.f32 %v4041, 0.0
        %v4074 = vmax.f32 %v4042, 0.0
        %v4075 = vmax.f32 %v4043, 0.0
        %v4076 = vmax.f32 %v4044, 0.0
        %v4077 = vmax.f32 %v4045, 0.0
        %v4078 = vmax.f32 %v4046, 0.0
        %v4079 = vmax.f32 %v4047, 0.0
        %v4080 = vmax.f32 %v4048, 0.0
        %v4081 = vmax.f32 %v4049, 0.0
        %v4082 = vmax.f32 %v4050, 0.0
        %v4083 = vmax.f32 %v4051, 0.0
        %v4084 = vmax.f32 %v4052, 0.0
        %v4085 = vmax.f32 %v4053, 0.0
        %v4086 = vmax.f32 %v4054, 0.0
        %v4087 = vmax.f32 %v4055, 0.0
        %v4088 = vmax.f32 %v4056, 0.0
        %v4089 = vmax.f32 %v4057, 0.0
        %v4090 = vmax.f32 %v4058, 0.0
        %4091 = vst [vmem:[%s369] sm:$0xff] %v4059
        %4092 = vst [vmem:[%s369 + $0x8] sm:$0xff] %v4060
        %4093 = vst [vmem:[%s369 + $0x10] sm:$0xff] %v4061
        %4094 = vst [vmem:[%s369 + $0x18] sm:$0xff] %v4062
        %4095 = vst [vmem:[%s369 + $0x20] sm:$0xff] %v4063
        %4096 = vst [vmem:[%s369 + $0x28] sm:$0xff] %v4064
        %4097 = vst [vmem:[%s369 + $0x30] sm:$0xff] %v4065
        %4098 = vst [vmem:[%s369 + $0x38] sm:$0xff] %v4066
        %4099 = vst [vmem:[%s369 + $0x40] sm:$0xff] %v4067
        %4100 = vst [vmem:[%s369 + $0x48] sm:$0xff] %v4068
        %4101 = vst [vmem:[%s369 + $0x50] sm:$0xff] %v4069
        %4102 = vst [vmem:[%s369 + $0x58] sm:$0xff] %v4070
        %4103 = vst [vmem:[%s369 + $0x60] sm:$0xff] %v4071
        %4104 = vst [vmem:[%s369 + $0x68] sm:$0xff] %v4072
        %4105 = vst [vmem:[%s369 + $0x70] sm:$0xff] %v4073
        %4106 = vst [vmem:[%s369 + $0x78] sm:$0xff] %v4074
        %4107 = vst [vmem:[%s369 + $0x80] sm:$0xff] %v4075
        %4108 = vst [vmem:[%s369 + $0x88] sm:$0xff] %v4076
        %4109 = vst [vmem:[%s369 + $0x90] sm:$0xff] %v4077
        %4110 = vst [vmem:[%s369 + $0x98] sm:$0xff] %v4078
        %4111 = vst [vmem:[%s369 + $0xa0] sm:$0xff] %v4079
        %4112 = vst [vmem:[%s369 + $0xa8] sm:$0xff] %v4080
        %4113 = vst [vmem:[%s369 + $0xb0] sm:$0xff] %v4081
        %4114 = vst [vmem:[%s369 + $0xb8] sm:$0xff] %v4082
        %4115 = vst [vmem:[%s369 + $0xc0] sm:$0xff] %v4083
        %4116 = vst [vmem:[%s369 + $0xc8] sm:$0xff] %v4084
        %4117 = vst [vmem:[%s369 + $0xd0] sm:$0xff] %v4085
        %4118 = vst [vmem:[%s369 + $0xd8] sm:$0xff] %v4086
        %4119 = vst [vmem:[%s369 + $0xe0] sm:$0xff] %v4087
        %4120 = vst [vmem:[%s369 + $0xe8] sm:$0xff] %v4088
        %4121 = vst [vmem:[%s369 + $0xf0] sm:$0xff] %v4089
        %4122 = vst [vmem:[%s369 + $0xf8] sm:$0xff] %v4090
        %s4123 = sand.u32 %s227, 1
        %s4124 = scalar_lea.sflag [#allocation5], %s4123
        %s4125 = sand.u32 %s227, 1
        %s4126 = smul.addr %s4125, 256
        %s4127 = scalar_lea.vmem [#allocation9], %s4126
        // Predicated region
        $region69: #{tpu_custom_call.1} parent=55 // pred_check
          %p4128 = pneg %p237
        $region70: #{tpu_custom_call.1} parent=55 // pred_check_branch
          %4130 = sbr.rel (%p4128) target = $region72
        $region71: #{tpu_custom_call.1} parent=55 // pred_region
          %s4132 = ssub.s32 4096, 4096
          %4133 = vsyncadd %s4124, %s4132
          %s4134 = smul.addr %s25, 32
          %s4135 = smul.addr %s4134, 128
          %s4136 = scalar_lea.hbm %s9, %s4135
          %s4137 = sshll.u32 %s4127, 4
          %s4138 = int_to_ptr.vmem [resolvable:$true] %s4137
          %4143 = dma.vmem_to_hbm [thread:$0]  %s4138, 4096, %s4136, %s4124, 128, 128, 8
        $region72: #{tpu_custom_call.1} parent=55 // pred_fallthru
          _
      $region56: #{tpu_custom_call.1} parent=5 // pred_fallthru
        _
      %p4144 = scmp.le.s32.totalorder 2, %s20
      // Predicated region
      $region73: #{tpu_custom_call.1} parent=5 // pred_check
        %p4145 = pneg %p4144
      $region74: #{tpu_custom_call.1} parent=5 // pred_check_branch
        %4147 = sbr.rel (%p4145) target = $region76
      $region75: #{tpu_custom_call.1} parent=5 // pred_region
        %s4148 = ssub.s32 %s20, 2
        // Predicated region
        $region77: #{tpu_custom_call.1} parent=75 // pred_check
          %p4149 = pneg %p243
        $region78: #{tpu_custom_call.1} parent=75 // pred_check_branch
          %4151 = sbr.rel (%p4149) target = $region80
        $region79: #{tpu_custom_call.1} parent=75 // pred_region
          %s4152 = sand.u32 %s228, 1
          %s4153 = scalar_lea.sflag [#allocation5], %s4152
          %s4154 = sand.u32 %s228, 1
          %s4155 = smul.addr %s4154, 256
          %s4156 = scalar_lea.vmem [#allocation9], %s4155
          %4157 = dma.done %s4153, 4096
        $region80: #{tpu_custom_call.1} parent=75 // pred_fallthru
          _
      $region76: #{tpu_custom_call.1} parent=5 // pred_fallthru
        _
    $region6: #{tpu_custom_call.1} parent=1 // loop_footer
      %s24 = sadd.s32 1, %s20
    $region7: #{tpu_custom_call.1} parent=1 // loop_footer_branch
      %19 = sbr.rel target = $region3
    $region8: #{tpu_custom_call.1} parent=1 // loop_exit
      _
    %4158 = vsyncpa [#allocation4], 1
    %s4159 = scalar_lea.sflag [#allocation4], 1
    %4160 = vsyncpa %s4159, 1
    %4161 = vsyncpa [#allocation7], 1
    %4162 = vsyncpa [#allocation5], 1
    %s4163 = scalar_lea.sflag [#allocation5], 1
    %4164 = vsyncpa %s4163, 1

</llo_original>
